<compile_context>
chip_gen: v7x
topology: tpu7x:2x2x1
jax: 0.10.0
libtpu: 0.0.40
codegen_flags: <defaults>
</compile_context>

<pallas_src>
import functools

import jax
import jax.numpy as jnp
from jax.experimental import pallas as pl
from jax.experimental.pallas import tpu as pltpu

# ----------------------------- config (small, synthetic RoBERTa) -----------------------------
VOCAB = 128
MAX_POS = 32
HIDDEN = 32
N_HEADS = 4
HEAD_DIM = HIDDEN // N_HEADS
INTER = 64
N_LAYERS = 2
LN_EPS = 1e-5
PAD_ID = 1
DROPOUT = 0.1
NEG_INF = -1e9


# ----------------------------- in-kernel helpers (f32 VPU/EUP math) -----------------------------
def _layer_norm(x, g, b):
    mu = jnp.mean(x, axis=-1, keepdims=True)
    var = jnp.mean((x - mu) * (x - mu), axis=-1, keepdims=True)
    return (x - mu) * jax.lax.rsqrt(var + LN_EPS) * g + b


def _gelu(x):
    # TODO(synk): HF RoBERTa uses exact erf-GELU; tanh approximation used here.
    c = 0.7978845608028654  # sqrt(2/pi)
    return 0.5 * x * (1.0 + jnp.tanh(c * (x + 0.044715 * x * x * x)))


# ----------------------------- fused forward kernel -----------------------------
def _fused_forward_kernel(
    emb_ref, seg_row_ref, keyseg_ref,
    eln_g_ref, eln_b_ref,
    q_w_ref, q_b_ref, k_wT_ref, k_bT_ref, v_w_ref, v_b_ref,
    o_w_ref, o_b_ref, aln_g_ref, aln_b_ref,
    i_w_ref, i_b_ref, f_w_ref, f_b_ref, fln_g_ref, fln_b_ref,
    pool_w_ref, pool_b_ref, cls_w_ref, cls_b_ref,
    out_ref,
    *, m,
):
    scale = 1.0 / (HEAD_DIM ** 0.5)

    # Block-diagonal (same sequence) + key-padding additive bias built from O(M) inputs
    # (no dense [M, M] HBM->VMEM DMA). Kept in f32 and added to f32 scores.
    same = seg_row_ref[...] == keyseg_ref[...]          # [M, 1] == [1, M] -> [M, M] bool
    bias = jnp.where(same, 0.0, NEG_INF)                # f32 [M, M]

    # embeddings LayerNorm (f32)
    x = _layer_norm(emb_ref[...], eln_g_ref[...], eln_b_ref[...])   # [M, H]

    for l in range(N_LAYERS):
        x_b = x.astype(jnp.bfloat16)

        # K^T for all heads at once: [H, M], f32 accumulation. Heads are then free
        # sublane-aligned 8-row slices (no per-head lane slices / XLU transposes).
        kT = jax.lax.dot_general(
            k_wT_ref[l], x_b, (((1,), (1,)), ((), ())),
            preferred_element_type=jnp.float32) + k_bT_ref[l]       # [H, M]

        attn = jnp.zeros((m, HIDDEN), jnp.float32)
        for h in range(N_HEADS):
            q_h = (jnp.dot(x_b, q_w_ref[l, h], preferred_element_type=jnp.float32)
                   + q_b_ref[l, h]).astype(jnp.bfloat16)            # [M, D]
            v_h = (jnp.dot(x_b, v_w_ref[l, h], preferred_element_type=jnp.float32)
                   + v_b_ref[l, h]).astype(jnp.bfloat16)            # [M, D]
            kT_h = kT[h * HEAD_DIM:(h + 1) * HEAD_DIM, :].astype(jnp.bfloat16)  # [D, M]

            s = jnp.dot(q_h, kT_h, preferred_element_type=jnp.float32) * scale + bias
            s = s - jnp.max(s, axis=-1, keepdims=True)
            p = jnp.exp(s)                                           # f32 softmax
            p = p * pl.reciprocal(jnp.sum(p, axis=-1, keepdims=True), approx=True)

            ctx = jnp.dot(p.astype(jnp.bfloat16), v_h,
                          preferred_element_type=jnp.float32)        # [M, D]
            # concat-free output projection: accumulate per-head partial matmuls.
            attn = attn + jnp.dot(ctx.astype(jnp.bfloat16), o_w_ref[l, h],
                                  preferred_element_type=jnp.float32)

        x = _layer_norm(attn + o_b_ref[l] + x, aln_g_ref[l], aln_b_ref[l])

        inter = _gelu(jnp.dot(x.astype(jnp.bfloat16), i_w_ref[l],
                              preferred_element_type=jnp.float32) + i_b_ref[l])
        ffn = jnp.dot(inter.astype(jnp.bfloat16), f_w_ref[l],
                      preferred_element_type=jnp.float32) + f_b_ref[l]
        x = _layer_norm(ffn + x, fln_g_ref[l], fln_b_ref[l])

    # Pooler (dense + tanh) over ALL rows (extra rows are free on the MXU), dropout
    # pre-folded into the classifier weight, Linear(H -> 1) as VPU mul + lane reduction.
    pooled = jnp.tanh(jnp.dot(x.astype(jnp.bfloat16), pool_w_ref[...],
                              preferred_element_type=jnp.float32) + pool_b_ref[...])
    out_ref[...] = (jnp.sum(pooled * cls_w_ref[...], axis=-1, keepdims=True)
                    + cls_b_ref[...])                                # [M, 1]


# ----------------------------- parameter init (deterministic, synthetic) -----------------------------
def _normal(key, shape, std=0.02):
    return (jax.random.normal(key, shape, jnp.float32) * std).astype(jnp.float32)


def init_params(key):
    keys = iter(jax.random.split(key, 8 + N_LAYERS * 16))
    p = {
        "word_emb": _normal(next(keys), (VOCAB, HIDDEN)),
        "pos_emb": _normal(next(keys), (MAX_POS, HIDDEN)),
        "type_emb": _normal(next(keys), (1, HIDDEN)),
        "emb_ln_g": jnp.ones((HIDDEN,), jnp.float32),
        "emb_ln_b": jnp.zeros((HIDDEN,), jnp.float32),
        "pool_w": _normal(next(keys), (HIDDEN, HIDDEN)),
        "pool_b": jnp.zeros((HIDDEN,), jnp.float32),
        # self.last = nn.Linear(hidden, 1), weight init normal(std=0.02)
        "last_w": _normal(next(keys), (HIDDEN, 1)),
        "last_b": jnp.zeros((1,), jnp.float32),
        "layers": [],
    }
    for _ in range(N_LAYERS):
        layer = {
            "q_w": _normal(next(keys), (HIDDEN, HIDDEN)), "q_b": jnp.zeros((HIDDEN,), jnp.float32),
            "k_w": _normal(next(keys), (HIDDEN, HIDDEN)), "k_b": jnp.zeros((HIDDEN,), jnp.float32),
            "v_w": _normal(next(keys), (HIDDEN, HIDDEN)), "v_b": jnp.zeros((HIDDEN,), jnp.float32),
            "o_w": _normal(next(keys), (HIDDEN, HIDDEN)), "o_b": jnp.zeros((HIDDEN,), jnp.float32),
            "attn_ln_g": jnp.ones((HIDDEN,), jnp.float32), "attn_ln_b": jnp.zeros((HIDDEN,), jnp.float32),
            "i_w": _normal(next(keys), (HIDDEN, INTER)), "i_b": jnp.zeros((INTER,), jnp.float32),
            "f_w": _normal(next(keys), (INTER, HIDDEN)), "f_b": jnp.zeros((HIDDEN,), jnp.float32),
            "ffn_ln_g": jnp.ones((HIDDEN,), jnp.float32), "ffn_ln_b": jnp.zeros((HIDDEN,), jnp.float32),
        }
        p["layers"].append(layer)
    return p


# ----------------------------- one-time weight packing (outside the jitted forward) -----------------------------
def pack_params(p):
    """Stack / split-per-head / pre-transpose / bf16-cast all weights exactly once."""
    L = p["layers"]

    def stack(name):
        return jnp.stack([lyr[name] for lyr in L], axis=0)

    q_w = stack("q_w").reshape(N_LAYERS, HIDDEN, N_HEADS, HEAD_DIM).transpose(0, 2, 1, 3)
    v_w = stack("v_w").reshape(N_LAYERS, HIDDEN, N_HEADS, HEAD_DIM).transpose(0, 2, 1, 3)
    o_w = stack("o_w").reshape(N_LAYERS, N_HEADS, HEAD_DIM, HIDDEN)
    k_wT = stack("k_w").transpose(0, 2, 1)                       # [NL, H_out, H_in]

    return dict(
        word_emb=p["word_emb"], pos_emb=p["pos_emb"], type_emb=p["type_emb"],
        eln_g=p["emb_ln_g"].reshape(1, HIDDEN), eln_b=p["emb_ln_b"].reshape(1, HIDDEN),
        q_w=q_w.astype(jnp.bfloat16),
        q_b=stack("q_b").reshape(N_LAYERS, N_HEADS, 1, HEAD_DIM),
        k_wT=k_wT.astype(jnp.bfloat16),
        k_bT=stack("k_b").reshape(N_LAYERS, HIDDEN, 1),
        v_w=v_w.astype(jnp.bfloat16),
        v_b=stack("v_b").reshape(N_LAYERS, N_HEADS, 1, HEAD_DIM),
        o_w=o_w.astype(jnp.bfloat16),
        o_b=stack("o_b").reshape(N_LAYERS, 1, HIDDEN),
        aln_g=stack("attn_ln_g").reshape(N_LAYERS, 1, HIDDEN),
        aln_b=stack("attn_ln_b").reshape(N_LAYERS, 1, HIDDEN),
        i_w=stack("i_w").astype(jnp.bfloat16),
        i_b=stack("i_b").reshape(N_LAYERS, 1, INTER),
        f_w=stack("f_w").astype(jnp.bfloat16),
        f_b=stack("f_b").reshape(N_LAYERS, 1, HIDDEN),
        fln_g=stack("ffn_ln_g").reshape(N_LAYERS, 1, HIDDEN),
        fln_b=stack("ffn_ln_b").reshape(N_LAYERS, 1, HIDDEN),
        pool_w=p["pool_w"].astype(jnp.bfloat16),
        pool_b=p["pool_b"].reshape(1, HIDDEN),
        last_w=p["last_w"].reshape(1, HIDDEN),   # stays f32; folded with dropout keep per call
        last_b=p["last_b"].reshape(1, 1),
    )


# ----------------------------- model forward (glue calling the fused Pallas kernel) -----------------------------
def roberta_forward(packed, input_ids, attention_mask, dropout_key):
    B, S = input_ids.shape
    M = B * S

    # RoBERTa position ids: cumsum over non-pad tokens, offset by padding_idx.
    tok_mask = (input_ids != PAD_ID).astype(jnp.int32)
    positions = jnp.cumsum(tok_mask, axis=1) * tok_mask + PAD_ID

    emb = (packed["word_emb"][input_ids]
           + packed["pos_emb"][positions]
           + packed["type_emb"][0][None, None, :]).reshape(M, HIDDEN).astype(jnp.float32)

    # O(M) attention-mask inputs; the [M, M] block-diagonal bias is rebuilt in-kernel.
    seg = jnp.arange(M, dtype=jnp.int32) // S
    seg_row = seg.reshape(M, 1)
    key_ok = attention_mask.reshape(M) > 0.5
    keyseg_col = jnp.where(key_ok, seg, -1).reshape(1, M).astype(jnp.int32)

    # nn.Dropout(0.1) on the pooled output (training-mode, deterministic via key),
    # folded into the classifier weight -> one [M, H] array, no extra in-kernel multiply.
    u = jax.random.uniform(dropout_key, (B, HIDDEN), jnp.float32)
    keep = (u >= DROPOUT).astype(jnp.float32) * (1.0 / (1.0 - DROPOUT))
    cls_w = jnp.repeat(keep, S, axis=0) * packed["last_w"]          # [M, H]

    vmem = pl.BlockSpec(memory_space=pltpu.MemorySpace.VMEM)
    out = pl.pallas_call(
        functools.partial(_fused_forward_kernel, m=M),
        out_shape=jax.ShapeDtypeStruct((M, 1), jnp.float32),
        in_specs=[vmem] * 25,
        out_specs=vmem,
    )(
        emb, seg_row, keyseg_col,
        packed["eln_g"], packed["eln_b"],
        packed["q_w"], packed["q_b"], packed["k_wT"], packed["k_bT"],
        packed["v_w"], packed["v_b"],
        packed["o_w"], packed["o_b"], packed["aln_g"], packed["aln_b"],
        packed["i_w"], packed["i_b"], packed["f_w"], packed["f_b"],
        packed["fln_g"], packed["fln_b"],
        packed["pool_w"], packed["pool_b"], cls_w, packed["last_b"],
    )
    # select CLS rows (one per sequence) in glue -> (B, 1)
    return out.reshape(B, S, 1)[:, 0, :]


# ----------------------------- main -----------------------------
if __name__ == "__main__":
    B, S = 2, 8
    root = jax.random.PRNGKey(0)
    k_param, k_ids, k_drop = jax.random.split(root, 3)

    params = init_params(k_param)
    packed = pack_params(params)     # one-time packing/casting, outside the jitted forward

    input_ids = jax.random.randint(k_ids, (B, S), 0, VOCAB, dtype=jnp.int32)
    # second sequence has 2 padding positions masked out
    attention_mask = (jnp.arange(S)[None, :] < jnp.array([[S], [S - 2]])).astype(jnp.float32)

    fwd = jax.jit(roberta_forward)
    out = jax.block_until_ready(fwd(packed, input_ids, attention_mask, k_drop))

    assert out.shape == (B, 1) and out.dtype == jnp.float32
    assert bool(jnp.all(jnp.isfinite(out)))
    print("KERNEL_OK")
</pallas_src>

<mosaic_0001>
module attributes {stable_mosaic.version = 11 : i64} {
  func.func @_fused_forward_kernel(%arg0: memref<16x32xf32, #tpu.memory_space<vmem>>, %arg1: memref<16x1xi32, #tpu.memory_space<vmem>>, %arg2: memref<1x16xi32, #tpu.memory_space<vmem>>, %arg3: memref<1x32xf32, #tpu.memory_space<vmem>>, %arg4: memref<1x32xf32, #tpu.memory_space<vmem>>, %arg5: memref<2x4x32x8xbf16, #tpu.memory_space<vmem>>, %arg6: memref<2x4x1x8xf32, #tpu.memory_space<vmem>>, %arg7: memref<2x32x32xbf16, #tpu.memory_space<vmem>>, %arg8: memref<2x32x1xf32, #tpu.memory_space<vmem>>, %arg9: memref<2x4x32x8xbf16, #tpu.memory_space<vmem>>, %arg10: memref<2x4x1x8xf32, #tpu.memory_space<vmem>>, %arg11: memref<2x4x8x32xbf16, #tpu.memory_space<vmem>>, %arg12: memref<2x1x32xf32, #tpu.memory_space<vmem>>, %arg13: memref<2x1x32xf32, #tpu.memory_space<vmem>>, %arg14: memref<2x1x32xf32, #tpu.memory_space<vmem>>, %arg15: memref<2x32x64xbf16, #tpu.memory_space<vmem>>, %arg16: memref<2x1x64xf32, #tpu.memory_space<vmem>>, %arg17: memref<2x64x32xbf16, #tpu.memory_space<vmem>>, %arg18: memref<2x1x32xf32, #tpu.memory_space<vmem>>, %arg19: memref<2x1x32xf32, #tpu.memory_space<vmem>>, %arg20: memref<2x1x32xf32, #tpu.memory_space<vmem>>, %arg21: memref<32x32xbf16, #tpu.memory_space<vmem>>, %arg22: memref<1x32xf32, #tpu.memory_space<vmem>>, %arg23: memref<16x32xf32, #tpu.memory_space<vmem>>, %arg24: memref<1x1xf32, #tpu.memory_space<vmem>>, %arg25: memref<16x1xf32, #tpu.memory_space<vmem>>) attributes {dimension_semantics = [], scalar_prefetch = 0 : i64, scratch_operands = 0 : i64, tpu.core_type = #tpu.core_type<tc>} {
    %c0 = arith.constant 0 : index
    %c0_0 = arith.constant 0 : index
    %0 = vector.load %arg1[%c0, %c0_0] : memref<16x1xi32, #tpu.memory_space<vmem>>, vector<16x1xi32>
    %c0_1 = arith.constant 0 : index
    %c0_2 = arith.constant 0 : index
    %1 = vector.load %arg2[%c0_1, %c0_2] : memref<1x16xi32, #tpu.memory_space<vmem>>, vector<1x16xi32>
    %2 = vector.broadcast %0 : vector<16x1xi32> to vector<16x16xi32>
    %3 = vector.broadcast %1 : vector<1x16xi32> to vector<16x16xi32>
    %4 = arith.cmpi eq, %2, %3 : vector<16x16xi32>
    %cst = arith.constant 0.000000e+00 : f32
    %cst_3 = arith.constant -1.000000e+09 : f32
    %5 = vector.broadcast %cst : f32 to vector<16x16xf32>
    %6 = vector.broadcast %cst_3 : f32 to vector<16x16xf32>
    %7 = arith.select %4, %5, %6 : vector<16x16xi1>, vector<16x16xf32>
    %c0_4 = arith.constant 0 : index
    %c0_5 = arith.constant 0 : index
    %8 = vector.load %arg0[%c0_4, %c0_5] : memref<16x32xf32, #tpu.memory_space<vmem>>, vector<16x32xf32>
    %c0_6 = arith.constant 0 : index
    %c0_7 = arith.constant 0 : index
    %9 = vector.load %arg3[%c0_6, %c0_7] : memref<1x32xf32, #tpu.memory_space<vmem>>, vector<1x32xf32>
    %c0_8 = arith.constant 0 : index
    %c0_9 = arith.constant 0 : index
    %10 = vector.load %arg4[%c0_8, %c0_9] : memref<1x32xf32, #tpu.memory_space<vmem>>, vector<1x32xf32>
    %cst_10 = arith.constant dense<0.000000e+00> : vector<16xf32>
    %11 = vector.multi_reduction <add>, %8, %cst_10 [1] : vector<16x32xf32> to vector<16xf32>
    %12 = vector.shape_cast %11 : vector<16xf32> to vector<16x1xf32>
    %cst_11 = arith.constant 3.200000e+01 : f32
    %13 = vector.broadcast %cst_11 : f32 to vector<16x1xf32>
    %14 = arith.divf %12, %13 : vector<16x1xf32>
    %15 = vector.broadcast %14 : vector<16x1xf32> to vector<16x32xf32>
    %16 = arith.subf %8, %15 : vector<16x32xf32>
    %17 = vector.broadcast %14 : vector<16x1xf32> to vector<16x32xf32>
    %18 = arith.subf %8, %17 : vector<16x32xf32>
    %19 = arith.mulf %16, %18 : vector<16x32xf32>
    %cst_12 = arith.constant dense<0.000000e+00> : vector<16xf32>
    %20 = vector.multi_reduction <add>, %19, %cst_12 [1] : vector<16x32xf32> to vector<16xf32>
    %21 = vector.shape_cast %20 : vector<16xf32> to vector<16x1xf32>
    %cst_13 = arith.constant 3.200000e+01 : f32
    %22 = vector.broadcast %cst_13 : f32 to vector<16x1xf32>
    %23 = arith.divf %21, %22 : vector<16x1xf32>
    %24 = vector.broadcast %14 : vector<16x1xf32> to vector<16x32xf32>
    %25 = arith.subf %8, %24 : vector<16x32xf32>
    %cst_14 = arith.constant 9.99999974E-6 : f32
    %26 = vector.broadcast %cst_14 : f32 to vector<16x1xf32>
    %27 = arith.addf %23, %26 : vector<16x1xf32>
    %28 = math.rsqrt %27 : vector<16x1xf32>
    %29 = vector.broadcast %28 : vector<16x1xf32> to vector<16x32xf32>
    %30 = arith.mulf %25, %29 : vector<16x32xf32>
    %31 = vector.broadcast %9 : vector<1x32xf32> to vector<16x32xf32>
    %32 = arith.mulf %30, %31 : vector<16x32xf32>
    %33 = vector.broadcast %10 : vector<1x32xf32> to vector<16x32xf32>
    %34 = arith.addf %32, %33 : vector<16x32xf32>
    %35 = arith.truncf %34 : vector<16x32xf32> to vector<16x32xbf16>
    %c0_15 = arith.constant 0 : index
    %c0_16 = arith.constant 0 : index
    %c0_17 = arith.constant 0 : index
    %36 = vector.load %arg7[%c0_15, %c0_16, %c0_17] : memref<2x32x32xbf16, #tpu.memory_space<vmem>>, vector<1x32x32xbf16>
    %37 = vector.shape_cast %36 : vector<1x32x32xbf16> to vector<32x32xbf16>
    %cst_18 = arith.constant dense<0.000000e+00> : vector<32x16xf32>
    %38 = tpu.matmul %37, %35, %cst_18 {dimension_numbers = #tpu.dot_dimension_numbers<[1], [1], [0], [0], [0, 0, 1, 0], [], []>} : vector<32x32xbf16>, vector<16x32xbf16>, vector<32x16xf32> -> vector<32x16xf32>
    %c0_19 = arith.constant 0 : index
    %c0_20 = arith.constant 0 : index
    %c0_21 = arith.constant 0 : index
    %39 = vector.load %arg8[%c0_19, %c0_20, %c0_21] : memref<2x32x1xf32, #tpu.memory_space<vmem>>, vector<1x32x1xf32>
    %40 = vector.shape_cast %39 : vector<1x32x1xf32> to vector<32x1xf32>
    %41 = vector.broadcast %40 : vector<32x1xf32> to vector<32x16xf32>
    %42 = arith.addf %38, %41 : vector<32x16xf32>
    %cst_22 = arith.constant 0.000000e+00 : f32
    %43 = vector.broadcast %cst_22 : f32 to vector<16x32xf32>
    %c0_23 = arith.constant 0 : index
    %c0_24 = arith.constant 0 : index
    %c0_25 = arith.constant 0 : index
    %c0_26 = arith.constant 0 : index
    %44 = vector.load %arg5[%c0_23, %c0_24, %c0_25, %c0_26] : memref<2x4x32x8xbf16, #tpu.memory_space<vmem>>, vector<1x1x32x8xbf16>
    %45 = vector.shape_cast %44 : vector<1x1x32x8xbf16> to vector<32x8xbf16>
    %cst_27 = arith.constant dense<0.000000e+00> : vector<16x8xf32>
    %46 = tpu.matmul %35, %45, %cst_27 {dimension_numbers = #tpu.dot_dimension_numbers<[1], [0], [0], [1], [0, 0, 1, 1], [], []>} : vector<16x32xbf16>, vector<32x8xbf16>, vector<16x8xf32> -> vector<16x8xf32>
    %c0_28 = arith.constant 0 : index
    %c0_29 = arith.constant 0 : index
    %c0_30 = arith.constant 0 : index
    %c0_31 = arith.constant 0 : index
    %47 = vector.load %arg6[%c0_28, %c0_29, %c0_30, %c0_31] : memref<2x4x1x8xf32, #tpu.memory_space<vmem>>, vector<1x1x1x8xf32>
    %48 = vector.shape_cast %47 : vector<1x1x1x8xf32> to vector<1x8xf32>
    %49 = vector.broadcast %48 : vector<1x8xf32> to vector<16x8xf32>
    %50 = arith.addf %46, %49 : vector<16x8xf32>
    %51 = arith.truncf %50 : vector<16x8xf32> to vector<16x8xbf16>
    %c0_32 = arith.constant 0 : index
    %c0_33 = arith.constant 0 : index
    %c0_34 = arith.constant 0 : index
    %c0_35 = arith.constant 0 : index
    %52 = vector.load %arg9[%c0_32, %c0_33, %c0_34, %c0_35] : memref<2x4x32x8xbf16, #tpu.memory_space<vmem>>, vector<1x1x32x8xbf16>
    %53 = vector.shape_cast %52 : vector<1x1x32x8xbf16> to vector<32x8xbf16>
    %cst_36 = arith.constant dense<0.000000e+00> : vector<16x8xf32>
    %54 = tpu.matmul %35, %53, %cst_36 {dimension_numbers = #tpu.dot_dimension_numbers<[1], [0], [0], [1], [0, 0, 1, 1], [], []>} : vector<16x32xbf16>, vector<32x8xbf16>, vector<16x8xf32> -> vector<16x8xf32>
    %c0_37 = arith.constant 0 : index
    %c0_38 = arith.constant 0 : index
    %c0_39 = arith.constant 0 : index
    %c0_40 = arith.constant 0 : index
    %55 = vector.load %arg10[%c0_37, %c0_38, %c0_39, %c0_40] : memref<2x4x1x8xf32, #tpu.memory_space<vmem>>, vector<1x1x1x8xf32>
    %56 = vector.shape_cast %55 : vector<1x1x1x8xf32> to vector<1x8xf32>
    %57 = vector.broadcast %56 : vector<1x8xf32> to vector<16x8xf32>
    %58 = arith.addf %54, %57 : vector<16x8xf32>
    %59 = arith.truncf %58 : vector<16x8xf32> to vector<16x8xbf16>
    %60 = vector.extract_strided_slice %42 {offsets = [0, 0], sizes = [8, 16], strides = [1, 1]} : vector<32x16xf32> to vector<8x16xf32>
    %61 = arith.truncf %60 : vector<8x16xf32> to vector<8x16xbf16>
    %cst_41 = arith.constant dense<0.000000e+00> : vector<16x16xf32>
    %62 = tpu.matmul %51, %61, %cst_41 {dimension_numbers = #tpu.dot_dimension_numbers<[1], [0], [0], [1], [0, 0, 1, 1], [], []>} : vector<16x8xbf16>, vector<8x16xbf16>, vector<16x16xf32> -> vector<16x16xf32>
    %cst_42 = arith.constant 0.353553385 : f32
    %63 = vector.broadcast %cst_42 : f32 to vector<16x16xf32>
    %64 = arith.mulf %62, %63 : vector<16x16xf32>
    %65 = arith.addf %64, %7 : vector<16x16xf32>
    %cst_43 = arith.constant dense<0xFF800000> : vector<16xf32>
    %66 = vector.multi_reduction <maximumf>, %65, %cst_43 [1] : vector<16x16xf32> to vector<16xf32>
    %67 = vector.shape_cast %66 : vector<16xf32> to vector<16x1xf32>
    %68 = vector.broadcast %67 : vector<16x1xf32> to vector<16x16xf32>
    %69 = arith.subf %65, %68 : vector<16x16xf32>
    %70 = math.exp %69 : vector<16x16xf32>
    %cst_44 = arith.constant dense<0.000000e+00> : vector<16xf32>
    %71 = vector.multi_reduction <add>, %70, %cst_44 [1] : vector<16x16xf32> to vector<16xf32>
    %72 = vector.shape_cast %71 : vector<16xf32> to vector<16x1xf32>
    %73 = tpu.reciprocal %72 {approx = true} : vector<16x1xf32> -> vector<16x1xf32>
    %74 = vector.broadcast %73 : vector<16x1xf32> to vector<16x16xf32>
    %75 = arith.mulf %70, %74 : vector<16x16xf32>
    %76 = arith.truncf %75 : vector<16x16xf32> to vector<16x16xbf16>
    %cst_45 = arith.constant dense<0.000000e+00> : vector<16x8xf32>
    %77 = tpu.matmul %76, %59, %cst_45 {dimension_numbers = #tpu.dot_dimension_numbers<[1], [0], [0], [1], [0, 0, 1, 1], [], []>} : vector<16x16xbf16>, vector<16x8xbf16>, vector<16x8xf32> -> vector<16x8xf32>
    %78 = arith.truncf %77 : vector<16x8xf32> to vector<16x8xbf16>
    %c0_46 = arith.constant 0 : index
    %c0_47 = arith.constant 0 : index
    %c0_48 = arith.constant 0 : index
    %c0_49 = arith.constant 0 : index
    %79 = vector.load %arg11[%c0_46, %c0_47, %c0_48, %c0_49] : memref<2x4x8x32xbf16, #tpu.memory_space<vmem>>, vector<1x1x8x32xbf16>
    %80 = vector.shape_cast %79 : vector<1x1x8x32xbf16> to vector<8x32xbf16>
    %cst_50 = arith.constant dense<0.000000e+00> : vector<16x32xf32>
    %81 = tpu.matmul %78, %80, %cst_50 {dimension_numbers = #tpu.dot_dimension_numbers<[1], [0], [0], [1], [0, 0, 1, 1], [], []>} : vector<16x8xbf16>, vector<8x32xbf16>, vector<16x32xf32> -> vector<16x32xf32>
    %82 = arith.addf %43, %81 : vector<16x32xf32>
    %c0_51 = arith.constant 0 : index
    %c1 = arith.constant 1 : index
    %c0_52 = arith.constant 0 : index
    %c0_53 = arith.constant 0 : index
    %83 = vector.load %arg5[%c0_51, %c1, %c0_52, %c0_53] : memref<2x4x32x8xbf16, #tpu.memory_space<vmem>>, vector<1x1x32x8xbf16>
    %84 = vector.shape_cast %83 : vector<1x1x32x8xbf16> to vector<32x8xbf16>
    %cst_54 = arith.constant dense<0.000000e+00> : vector<16x8xf32>
    %85 = tpu.matmul %35, %84, %cst_54 {dimension_numbers = #tpu.dot_dimension_numbers<[1], [0], [0], [1], [0, 0, 1, 1], [], []>} : vector<16x32xbf16>, vector<32x8xbf16>, vector<16x8xf32> -> vector<16x8xf32>
    %c0_55 = arith.constant 0 : index
    %c1_56 = arith.constant 1 : index
    %c0_57 = arith.constant 0 : index
    %c0_58 = arith.constant 0 : index
    %86 = vector.load %arg6[%c0_55, %c1_56, %c0_57, %c0_58] : memref<2x4x1x8xf32, #tpu.memory_space<vmem>>, vector<1x1x1x8xf32>
    %87 = vector.shape_cast %86 : vector<1x1x1x8xf32> to vector<1x8xf32>
    %88 = vector.broadcast %87 : vector<1x8xf32> to vector<16x8xf32>
    %89 = arith.addf %85, %88 : vector<16x8xf32>
    %90 = arith.truncf %89 : vector<16x8xf32> to vector<16x8xbf16>
    %c0_59 = arith.constant 0 : index
    %c1_60 = arith.constant 1 : index
    %c0_61 = arith.constant 0 : index
    %c0_62 = arith.constant 0 : index
    %91 = vector.load %arg9[%c0_59, %c1_60, %c0_61, %c0_62] : memref<2x4x32x8xbf16, #tpu.memory_space<vmem>>, vector<1x1x32x8xbf16>
    %92 = vector.shape_cast %91 : vector<1x1x32x8xbf16> to vector<32x8xbf16>
    %cst_63 = arith.constant dense<0.000000e+00> : vector<16x8xf32>
    %93 = tpu.matmul %35, %92, %cst_63 {dimension_numbers = #tpu.dot_dimension_numbers<[1], [0], [0], [1], [0, 0, 1, 1], [], []>} : vector<16x32xbf16>, vector<32x8xbf16>, vector<16x8xf32> -> vector<16x8xf32>
    %c0_64 = arith.constant 0 : index
    %c1_65 = arith.constant 1 : index
    %c0_66 = arith.constant 0 : index
    %c0_67 = arith.constant 0 : index
    %94 = vector.load %arg10[%c0_64, %c1_65, %c0_66, %c0_67] : memref<2x4x1x8xf32, #tpu.memory_space<vmem>>, vector<1x1x1x8xf32>
    %95 = vector.shape_cast %94 : vector<1x1x1x8xf32> to vector<1x8xf32>
    %96 = vector.broadcast %95 : vector<1x8xf32> to vector<16x8xf32>
    %97 = arith.addf %93, %96 : vector<16x8xf32>
    %98 = arith.truncf %97 : vector<16x8xf32> to vector<16x8xbf16>
    %99 = vector.extract_strided_slice %42 {offsets = [8, 0], sizes = [8, 16], strides = [1, 1]} : vector<32x16xf32> to vector<8x16xf32>
    %100 = arith.truncf %99 : vector<8x16xf32> to vector<8x16xbf16>
    %cst_68 = arith.constant dense<0.000000e+00> : vector<16x16xf32>
    %101 = tpu.matmul %90, %100, %cst_68 {dimension_numbers = #tpu.dot_dimension_numbers<[1], [0], [0], [1], [0, 0, 1, 1], [], []>} : vector<16x8xbf16>, vector<8x16xbf16>, vector<16x16xf32> -> vector<16x16xf32>
    %cst_69 = arith.constant 0.353553385 : f32
    %102 = vector.broadcast %cst_69 : f32 to vector<16x16xf32>
    %103 = arith.mulf %101, %102 : vector<16x16xf32>
    %104 = arith.addf %103, %7 : vector<16x16xf32>
    %cst_70 = arith.constant dense<0xFF800000> : vector<16xf32>
    %105 = vector.multi_reduction <maximumf>, %104, %cst_70 [1] : vector<16x16xf32> to vector<16xf32>
    %106 = vector.shape_cast %105 : vector<16xf32> to vector<16x1xf32>
    %107 = vector.broadcast %106 : vector<16x1xf32> to vector<16x16xf32>
    %108 = arith.subf %104, %107 : vector<16x16xf32>
    %109 = math.exp %108 : vector<16x16xf32>
    %cst_71 = arith.constant dense<0.000000e+00> : vector<16xf32>
    %110 = vector.multi_reduction <add>, %109, %cst_71 [1] : vector<16x16xf32> to vector<16xf32>
    %111 = vector.shape_cast %110 : vector<16xf32> to vector<16x1xf32>
    %112 = tpu.reciprocal %111 {approx = true} : vector<16x1xf32> -> vector<16x1xf32>
    %113 = vector.broadcast %112 : vector<16x1xf32> to vector<16x16xf32>
    %114 = arith.mulf %109, %113 : vector<16x16xf32>
    %115 = arith.truncf %114 : vector<16x16xf32> to vector<16x16xbf16>
    %cst_72 = arith.constant dense<0.000000e+00> : vector<16x8xf32>
    %116 = tpu.matmul %115, %98, %cst_72 {dimension_numbers = #tpu.dot_dimension_numbers<[1], [0], [0], [1], [0, 0, 1, 1], [], []>} : vector<16x16xbf16>, vector<16x8xbf16>, vector<16x8xf32> -> vector<16x8xf32>
    %117 = arith.truncf %116 : vector<16x8xf32> to vector<16x8xbf16>
    %c0_73 = arith.constant 0 : index
    %c1_74 = arith.constant 1 : index
    %c0_75 = arith.constant 0 : index
    %c0_76 = arith.constant 0 : index
    %118 = vector.load %arg11[%c0_73, %c1_74, %c0_75, %c0_76] : memref<2x4x8x32xbf16, #tpu.memory_space<vmem>>, vector<1x1x8x32xbf16>
    %119 = vector.shape_cast %118 : vector<1x1x8x32xbf16> to vector<8x32xbf16>
    %cst_77 = arith.constant dense<0.000000e+00> : vector<16x32xf32>
    %120 = tpu.matmul %117, %119, %cst_77 {dimension_numbers = #tpu.dot_dimension_numbers<[1], [0], [0], [1], [0, 0, 1, 1], [], []>} : vector<16x8xbf16>, vector<8x32xbf16>, vector<16x32xf32> -> vector<16x32xf32>
    %121 = arith.addf %82, %120 : vector<16x32xf32>
    %c0_78 = arith.constant 0 : index
    %c2 = arith.constant 2 : index
    %c0_79 = arith.constant 0 : index
    %c0_80 = arith.constant 0 : index
    %122 = vector.load %arg5[%c0_78, %c2, %c0_79, %c0_80] : memref<2x4x32x8xbf16, #tpu.memory_space<vmem>>, vector<1x1x32x8xbf16>
    %123 = vector.shape_cast %122 : vector<1x1x32x8xbf16> to vector<32x8xbf16>
    %cst_81 = arith.constant dense<0.000000e+00> : vector<16x8xf32>
    %124 = tpu.matmul %35, %123, %cst_81 {dimension_numbers = #tpu.dot_dimension_numbers<[1], [0], [0], [1], [0, 0, 1, 1], [], []>} : vector<16x32xbf16>, vector<32x8xbf16>, vector<16x8xf32> -> vector<16x8xf32>
    %c0_82 = arith.constant 0 : index
    %c2_83 = arith.constant 2 : index
    %c0_84 = arith.constant 0 : index
    %c0_85 = arith.constant 0 : index
    %125 = vector.load %arg6[%c0_82, %c2_83, %c0_84, %c0_85] : memref<2x4x1x8xf32, #tpu.memory_space<vmem>>, vector<1x1x1x8xf32>
    %126 = vector.shape_cast %125 : vector<1x1x1x8xf32> to vector<1x8xf32>
    %127 = vector.broadcast %126 : vector<1x8xf32> to vector<16x8xf32>
    %128 = arith.addf %124, %127 : vector<16x8xf32>
    %129 = arith.truncf %128 : vector<16x8xf32> to vector<16x8xbf16>
    %c0_86 = arith.constant 0 : index
    %c2_87 = arith.constant 2 : index
    %c0_88 = arith.constant 0 : index
    %c0_89 = arith.constant 0 : index
    %130 = vector.load %arg9[%c0_86, %c2_87, %c0_88, %c0_89] : memref<2x4x32x8xbf16, #tpu.memory_space<vmem>>, vector<1x1x32x8xbf16>
    %131 = vector.shape_cast %130 : vector<1x1x32x8xbf16> to vector<32x8xbf16>
    %cst_90 = arith.constant dense<0.000000e+00> : vector<16x8xf32>
    %132 = tpu.matmul %35, %131, %cst_90 {dimension_numbers = #tpu.dot_dimension_numbers<[1], [0], [0], [1], [0, 0, 1, 1], [], []>} : vector<16x32xbf16>, vector<32x8xbf16>, vector<16x8xf32> -> vector<16x8xf32>
    %c0_91 = arith.constant 0 : index
    %c2_92 = arith.constant 2 : index
    %c0_93 = arith.constant 0 : index
    %c0_94 = arith.constant 0 : index
    %133 = vector.load %arg10[%c0_91, %c2_92, %c0_93, %c0_94] : memref<2x4x1x8xf32, #tpu.memory_space<vmem>>, vector<1x1x1x8xf32>
    %134 = vector.shape_cast %133 : vector<1x1x1x8xf32> to vector<1x8xf32>
    %135 = vector.broadcast %134 : vector<1x8xf32> to vector<16x8xf32>
    %136 = arith.addf %132, %135 : vector<16x8xf32>
    %137 = arith.truncf %136 : vector<16x8xf32> to vector<16x8xbf16>
    %138 = vector.extract_strided_slice %42 {offsets = [16, 0], sizes = [8, 16], strides = [1, 1]} : vector<32x16xf32> to vector<8x16xf32>
    %139 = arith.truncf %138 : vector<8x16xf32> to vector<8x16xbf16>
    %cst_95 = arith.constant dense<0.000000e+00> : vector<16x16xf32>
    %140 = tpu.matmul %129, %139, %cst_95 {dimension_numbers = #tpu.dot_dimension_numbers<[1], [0], [0], [1], [0, 0, 1, 1], [], []>} : vector<16x8xbf16>, vector<8x16xbf16>, vector<16x16xf32> -> vector<16x16xf32>
    %cst_96 = arith.constant 0.353553385 : f32
    %141 = vector.broadcast %cst_96 : f32 to vector<16x16xf32>
    %142 = arith.mulf %140, %141 : vector<16x16xf32>
    %143 = arith.addf %142, %7 : vector<16x16xf32>
    %cst_97 = arith.constant dense<0xFF800000> : vector<16xf32>
    %144 = vector.multi_reduction <maximumf>, %143, %cst_97 [1] : vector<16x16xf32> to vector<16xf32>
    %145 = vector.shape_cast %144 : vector<16xf32> to vector<16x1xf32>
    %146 = vector.broadcast %145 : vector<16x1xf32> to vector<16x16xf32>
    %147 = arith.subf %143, %146 : vector<16x16xf32>
    %148 = math.exp %147 : vector<16x16xf32>
    %cst_98 = arith.constant dense<0.000000e+00> : vector<16xf32>
    %149 = vector.multi_reduction <add>, %148, %cst_98 [1] : vector<16x16xf32> to vector<16xf32>
    %150 = vector.shape_cast %149 : vector<16xf32> to vector<16x1xf32>
    %151 = tpu.reciprocal %150 {approx = true} : vector<16x1xf32> -> vector<16x1xf32>
    %152 = vector.broadcast %151 : vector<16x1xf32> to vector<16x16xf32>
    %153 = arith.mulf %148, %152 : vector<16x16xf32>
    %154 = arith.truncf %153 : vector<16x16xf32> to vector<16x16xbf16>
    %cst_99 = arith.constant dense<0.000000e+00> : vector<16x8xf32>
    %155 = tpu.matmul %154, %137, %cst_99 {dimension_numbers = #tpu.dot_dimension_numbers<[1], [0], [0], [1], [0, 0, 1, 1], [], []>} : vector<16x16xbf16>, vector<16x8xbf16>, vector<16x8xf32> -> vector<16x8xf32>
    %156 = arith.truncf %155 : vector<16x8xf32> to vector<16x8xbf16>
    %c0_100 = arith.constant 0 : index
    %c2_101 = arith.constant 2 : index
    %c0_102 = arith.constant 0 : index
    %c0_103 = arith.constant 0 : index
    %157 = vector.load %arg11[%c0_100, %c2_101, %c0_102, %c0_103] : memref<2x4x8x32xbf16, #tpu.memory_space<vmem>>, vector<1x1x8x32xbf16>
    %158 = vector.shape_cast %157 : vector<1x1x8x32xbf16> to vector<8x32xbf16>
    %cst_104 = arith.constant dense<0.000000e+00> : vector<16x32xf32>
    %159 = tpu.matmul %156, %158, %cst_104 {dimension_numbers = #tpu.dot_dimension_numbers<[1], [0], [0], [1], [0, 0, 1, 1], [], []>} : vector<16x8xbf16>, vector<8x32xbf16>, vector<16x32xf32> -> vector<16x32xf32>
    %160 = arith.addf %121, %159 : vector<16x32xf32>
    %c0_105 = arith.constant 0 : index
    %c3 = arith.constant 3 : index
    %c0_106 = arith.constant 0 : index
    %c0_107 = arith.constant 0 : index
    %161 = vector.load %arg5[%c0_105, %c3, %c0_106, %c0_107] : memref<2x4x32x8xbf16, #tpu.memory_space<vmem>>, vector<1x1x32x8xbf16>
    %162 = vector.shape_cast %161 : vector<1x1x32x8xbf16> to vector<32x8xbf16>
    %cst_108 = arith.constant dense<0.000000e+00> : vector<16x8xf32>
    %163 = tpu.matmul %35, %162, %cst_108 {dimension_numbers = #tpu.dot_dimension_numbers<[1], [0], [0], [1], [0, 0, 1, 1], [], []>} : vector<16x32xbf16>, vector<32x8xbf16>, vector<16x8xf32> -> vector<16x8xf32>
    %c0_109 = arith.constant 0 : index
    %c3_110 = arith.constant 3 : index
    %c0_111 = arith.constant 0 : index
    %c0_112 = arith.constant 0 : index
    %164 = vector.load %arg6[%c0_109, %c3_110, %c0_111, %c0_112] : memref<2x4x1x8xf32, #tpu.memory_space<vmem>>, vector<1x1x1x8xf32>
    %165 = vector.shape_cast %164 : vector<1x1x1x8xf32> to vector<1x8xf32>
    %166 = vector.broadcast %165 : vector<1x8xf32> to vector<16x8xf32>
    %167 = arith.addf %163, %166 : vector<16x8xf32>
    %168 = arith.truncf %167 : vector<16x8xf32> to vector<16x8xbf16>
    %c0_113 = arith.constant 0 : index
    %c3_114 = arith.constant 3 : index
    %c0_115 = arith.constant 0 : index
    %c0_116 = arith.constant 0 : index
    %169 = vector.load %arg9[%c0_113, %c3_114, %c0_115, %c0_116] : memref<2x4x32x8xbf16, #tpu.memory_space<vmem>>, vector<1x1x32x8xbf16>
    %170 = vector.shape_cast %169 : vector<1x1x32x8xbf16> to vector<32x8xbf16>
    %cst_117 = arith.constant dense<0.000000e+00> : vector<16x8xf32>
    %171 = tpu.matmul %35, %170, %cst_117 {dimension_numbers = #tpu.dot_dimension_numbers<[1], [0], [0], [1], [0, 0, 1, 1], [], []>} : vector<16x32xbf16>, vector<32x8xbf16>, vector<16x8xf32> -> vector<16x8xf32>
    %c0_118 = arith.constant 0 : index
    %c3_119 = arith.constant 3 : index
    %c0_120 = arith.constant 0 : index
    %c0_121 = arith.constant 0 : index
    %172 = vector.load %arg10[%c0_118, %c3_119, %c0_120, %c0_121] : memref<2x4x1x8xf32, #tpu.memory_space<vmem>>, vector<1x1x1x8xf32>
    %173 = vector.shape_cast %172 : vector<1x1x1x8xf32> to vector<1x8xf32>
    %174 = vector.broadcast %173 : vector<1x8xf32> to vector<16x8xf32>
    %175 = arith.addf %171, %174 : vector<16x8xf32>
    %176 = arith.truncf %175 : vector<16x8xf32> to vector<16x8xbf16>
    %177 = vector.extract_strided_slice %42 {offsets = [24, 0], sizes = [8, 16], strides = [1, 1]} : vector<32x16xf32> to vector<8x16xf32>
    %178 = arith.truncf %177 : vector<8x16xf32> to vector<8x16xbf16>
    %cst_122 = arith.constant dense<0.000000e+00> : vector<16x16xf32>
    %179 = tpu.matmul %168, %178, %cst_122 {dimension_numbers = #tpu.dot_dimension_numbers<[1], [0], [0], [1], [0, 0, 1, 1], [], []>} : vector<16x8xbf16>, vector<8x16xbf16>, vector<16x16xf32> -> vector<16x16xf32>
    %cst_123 = arith.constant 0.353553385 : f32
    %180 = vector.broadcast %cst_123 : f32 to vector<16x16xf32>
    %181 = arith.mulf %179, %180 : vector<16x16xf32>
    %182 = arith.addf %181, %7 : vector<16x16xf32>
    %cst_124 = arith.constant dense<0xFF800000> : vector<16xf32>
    %183 = vector.multi_reduction <maximumf>, %182, %cst_124 [1] : vector<16x16xf32> to vector<16xf32>
    %184 = vector.shape_cast %183 : vector<16xf32> to vector<16x1xf32>
    %185 = vector.broadcast %184 : vector<16x1xf32> to vector<16x16xf32>
    %186 = arith.subf %182, %185 : vector<16x16xf32>
    %187 = math.exp %186 : vector<16x16xf32>
    %cst_125 = arith.constant dense<0.000000e+00> : vector<16xf32>
    %188 = vector.multi_reduction <add>, %187, %cst_125 [1] : vector<16x16xf32> to vector<16xf32>
    %189 = vector.shape_cast %188 : vector<16xf32> to vector<16x1xf32>
    %190 = tpu.reciprocal %189 {approx = true} : vector<16x1xf32> -> vector<16x1xf32>
    %191 = vector.broadcast %190 : vector<16x1xf32> to vector<16x16xf32>
    %192 = arith.mulf %187, %191 : vector<16x16xf32>
    %193 = arith.truncf %192 : vector<16x16xf32> to vector<16x16xbf16>
    %cst_126 = arith.constant dense<0.000000e+00> : vector<16x8xf32>
    %194 = tpu.matmul %193, %176, %cst_126 {dimension_numbers = #tpu.dot_dimension_numbers<[1], [0], [0], [1], [0, 0, 1, 1], [], []>} : vector<16x16xbf16>, vector<16x8xbf16>, vector<16x8xf32> -> vector<16x8xf32>
    %195 = arith.truncf %194 : vector<16x8xf32> to vector<16x8xbf16>
    %c0_127 = arith.constant 0 : index
    %c3_128 = arith.constant 3 : index
    %c0_129 = arith.constant 0 : index
    %c0_130 = arith.constant 0 : index
    %196 = vector.load %arg11[%c0_127, %c3_128, %c0_129, %c0_130] : memref<2x4x8x32xbf16, #tpu.memory_space<vmem>>, vector<1x1x8x32xbf16>
    %197 = vector.shape_cast %196 : vector<1x1x8x32xbf16> to vector<8x32xbf16>
    %cst_131 = arith.constant dense<0.000000e+00> : vector<16x32xf32>
    %198 = tpu.matmul %195, %197, %cst_131 {dimension_numbers = #tpu.dot_dimension_numbers<[1], [0], [0], [1], [0, 0, 1, 1], [], []>} : vector<16x8xbf16>, vector<8x32xbf16>, vector<16x32xf32> -> vector<16x32xf32>
    %199 = arith.addf %160, %198 : vector<16x32xf32>
    %c0_132 = arith.constant 0 : index
    %c0_133 = arith.constant 0 : index
    %c0_134 = arith.constant 0 : index
    %200 = vector.load %arg12[%c0_132, %c0_133, %c0_134] : memref<2x1x32xf32, #tpu.memory_space<vmem>>, vector<1x1x32xf32>
    %201 = vector.shape_cast %200 : vector<1x1x32xf32> to vector<1x32xf32>
    %202 = vector.broadcast %201 : vector<1x32xf32> to vector<16x32xf32>
    %203 = arith.addf %199, %202 : vector<16x32xf32>
    %204 = arith.addf %203, %34 : vector<16x32xf32>
    %c0_135 = arith.constant 0 : index
    %c0_136 = arith.constant 0 : index
    %c0_137 = arith.constant 0 : index
    %205 = vector.load %arg13[%c0_135, %c0_136, %c0_137] : memref<2x1x32xf32, #tpu.memory_space<vmem>>, vector<1x1x32xf32>
    %206 = vector.shape_cast %205 : vector<1x1x32xf32> to vector<1x32xf32>
    %c0_138 = arith.constant 0 : index
    %c0_139 = arith.constant 0 : index
    %c0_140 = arith.constant 0 : index
    %207 = vector.load %arg14[%c0_138, %c0_139, %c0_140] : memref<2x1x32xf32, #tpu.memory_space<vmem>>, vector<1x1x32xf32>
    %208 = vector.shape_cast %207 : vector<1x1x32xf32> to vector<1x32xf32>
    %cst_141 = arith.constant dense<0.000000e+00> : vector<16xf32>
    %209 = vector.multi_reduction <add>, %204, %cst_141 [1] : vector<16x32xf32> to vector<16xf32>
    %210 = vector.shape_cast %209 : vector<16xf32> to vector<16x1xf32>
    %cst_142 = arith.constant 3.200000e+01 : f32
    %211 = vector.broadcast %cst_142 : f32 to vector<16x1xf32>
    %212 = arith.divf %210, %211 : vector<16x1xf32>
    %213 = vector.broadcast %212 : vector<16x1xf32> to vector<16x32xf32>
    %214 = arith.subf %204, %213 : vector<16x32xf32>
    %215 = vector.broadcast %212 : vector<16x1xf32> to vector<16x32xf32>
    %216 = arith.subf %204, %215 : vector<16x32xf32>
    %217 = arith.mulf %214, %216 : vector<16x32xf32>
    %cst_143 = arith.constant dense<0.000000e+00> : vector<16xf32>
    %218 = vector.multi_reduction <add>, %217, %cst_143 [1] : vector<16x32xf32> to vector<16xf32>
    %219 = vector.shape_cast %218 : vector<16xf32> to vector<16x1xf32>
    %cst_144 = arith.constant 3.200000e+01 : f32
    %220 = vector.broadcast %cst_144 : f32 to vector<16x1xf32>
    %221 = arith.divf %219, %220 : vector<16x1xf32>
    %222 = vector.broadcast %212 : vector<16x1xf32> to vector<16x32xf32>
    %223 = arith.subf %204, %222 : vector<16x32xf32>
    %cst_145 = arith.constant 9.99999974E-6 : f32
    %224 = vector.broadcast %cst_145 : f32 to vector<16x1xf32>
    %225 = arith.addf %221, %224 : vector<16x1xf32>
    %226 = math.rsqrt %225 : vector<16x1xf32>
    %227 = vector.broadcast %226 : vector<16x1xf32> to vector<16x32xf32>
    %228 = arith.mulf %223, %227 : vector<16x32xf32>
    %229 = vector.broadcast %206 : vector<1x32xf32> to vector<16x32xf32>
    %230 = arith.mulf %228, %229 : vector<16x32xf32>
    %231 = vector.broadcast %208 : vector<1x32xf32> to vector<16x32xf32>
    %232 = arith.addf %230, %231 : vector<16x32xf32>
    %233 = arith.truncf %232 : vector<16x32xf32> to vector<16x32xbf16>
    %c0_146 = arith.constant 0 : index
    %c0_147 = arith.constant 0 : index
    %c0_148 = arith.constant 0 : index
    %234 = vector.load %arg15[%c0_146, %c0_147, %c0_148] : memref<2x32x64xbf16, #tpu.memory_space<vmem>>, vector<1x32x64xbf16>
    %235 = vector.shape_cast %234 : vector<1x32x64xbf16> to vector<32x64xbf16>
    %cst_149 = arith.constant dense<0.000000e+00> : vector<16x64xf32>
    %236 = tpu.matmul %233, %235, %cst_149 {dimension_numbers = #tpu.dot_dimension_numbers<[1], [0], [0], [1], [0, 0, 1, 1], [], []>} : vector<16x32xbf16>, vector<32x64xbf16>, vector<16x64xf32> -> vector<16x64xf32>
    %c0_150 = arith.constant 0 : index
    %c0_151 = arith.constant 0 : index
    %c0_152 = arith.constant 0 : index
    %237 = vector.load %arg16[%c0_150, %c0_151, %c0_152] : memref<2x1x64xf32, #tpu.memory_space<vmem>>, vector<1x1x64xf32>
    %238 = vector.shape_cast %237 : vector<1x1x64xf32> to vector<1x64xf32>
    %239 = vector.broadcast %238 : vector<1x64xf32> to vector<16x64xf32>
    %240 = arith.addf %236, %239 : vector<16x64xf32>
    %cst_153 = arith.constant 5.000000e-01 : f32
    %241 = vector.broadcast %cst_153 : f32 to vector<16x64xf32>
    %242 = arith.mulf %241, %240 : vector<16x64xf32>
    %cst_154 = arith.constant 4.471500e-02 : f32
    %243 = vector.broadcast %cst_154 : f32 to vector<16x64xf32>
    %244 = arith.mulf %243, %240 : vector<16x64xf32>
    %245 = arith.mulf %244, %240 : vector<16x64xf32>
    %246 = arith.mulf %245, %240 : vector<16x64xf32>
    %247 = arith.addf %240, %246 : vector<16x64xf32>
    %cst_155 = arith.constant 0.797884583 : f32
    %248 = vector.broadcast %cst_155 : f32 to vector<16x64xf32>
    %249 = arith.mulf %248, %247 : vector<16x64xf32>
    %250 = math.tanh %249 : vector<16x64xf32>
    %cst_156 = arith.constant 1.000000e+00 : f32
    %251 = vector.broadcast %cst_156 : f32 to vector<16x64xf32>
    %252 = arith.addf %251, %250 : vector<16x64xf32>
    %253 = arith.mulf %242, %252 : vector<16x64xf32>
    %254 = arith.truncf %253 : vector<16x64xf32> to vector<16x64xbf16>
    %c0_157 = arith.constant 0 : index
    %c0_158 = arith.constant 0 : index
    %c0_159 = arith.constant 0 : index
    %255 = vector.load %arg17[%c0_157, %c0_158, %c0_159] : memref<2x64x32xbf16, #tpu.memory_space<vmem>>, vector<1x64x32xbf16>
    %256 = vector.shape_cast %255 : vector<1x64x32xbf16> to vector<64x32xbf16>
    %cst_160 = arith.constant dense<0.000000e+00> : vector<16x32xf32>
    %257 = tpu.matmul %254, %256, %cst_160 {dimension_numbers = #tpu.dot_dimension_numbers<[1], [0], [0], [1], [0, 0, 1, 1], [], []>} : vector<16x64xbf16>, vector<64x32xbf16>, vector<16x32xf32> -> vector<16x32xf32>
    %c0_161 = arith.constant 0 : index
    %c0_162 = arith.constant 0 : index
    %c0_163 = arith.constant 0 : index
    %258 = vector.load %arg18[%c0_161, %c0_162, %c0_163] : memref<2x1x32xf32, #tpu.memory_space<vmem>>, vector<1x1x32xf32>
    %259 = vector.shape_cast %258 : vector<1x1x32xf32> to vector<1x32xf32>
    %260 = vector.broadcast %259 : vector<1x32xf32> to vector<16x32xf32>
    %261 = arith.addf %257, %260 : vector<16x32xf32>
    %262 = arith.addf %261, %232 : vector<16x32xf32>
    %c0_164 = arith.constant 0 : index
    %c0_165 = arith.constant 0 : index
    %c0_166 = arith.constant 0 : index
    %263 = vector.load %arg19[%c0_164, %c0_165, %c0_166] : memref<2x1x32xf32, #tpu.memory_space<vmem>>, vector<1x1x32xf32>
    %264 = vector.shape_cast %263 : vector<1x1x32xf32> to vector<1x32xf32>
    %c0_167 = arith.constant 0 : index
    %c0_168 = arith.constant 0 : index
    %c0_169 = arith.constant 0 : index
    %265 = vector.load %arg20[%c0_167, %c0_168, %c0_169] : memref<2x1x32xf32, #tpu.memory_space<vmem>>, vector<1x1x32xf32>
    %266 = vector.shape_cast %265 : vector<1x1x32xf32> to vector<1x32xf32>
    %cst_170 = arith.constant dense<0.000000e+00> : vector<16xf32>
    %267 = vector.multi_reduction <add>, %262, %cst_170 [1] : vector<16x32xf32> to vector<16xf32>
    %268 = vector.shape_cast %267 : vector<16xf32> to vector<16x1xf32>
    %cst_171 = arith.constant 3.200000e+01 : f32
    %269 = vector.broadcast %cst_171 : f32 to vector<16x1xf32>
    %270 = arith.divf %268, %269 : vector<16x1xf32>
    %271 = vector.broadcast %270 : vector<16x1xf32> to vector<16x32xf32>
    %272 = arith.subf %262, %271 : vector<16x32xf32>
    %273 = vector.broadcast %270 : vector<16x1xf32> to vector<16x32xf32>
    %274 = arith.subf %262, %273 : vector<16x32xf32>
    %275 = arith.mulf %272, %274 : vector<16x32xf32>
    %cst_172 = arith.constant dense<0.000000e+00> : vector<16xf32>
    %276 = vector.multi_reduction <add>, %275, %cst_172 [1] : vector<16x32xf32> to vector<16xf32>
    %277 = vector.shape_cast %276 : vector<16xf32> to vector<16x1xf32>
    %cst_173 = arith.constant 3.200000e+01 : f32
    %278 = vector.broadcast %cst_173 : f32 to vector<16x1xf32>
    %279 = arith.divf %277, %278 : vector<16x1xf32>
    %280 = vector.broadcast %270 : vector<16x1xf32> to vector<16x32xf32>
    %281 = arith.subf %262, %280 : vector<16x32xf32>
    %cst_174 = arith.constant 9.99999974E-6 : f32
    %282 = vector.broadcast %cst_174 : f32 to vector<16x1xf32>
    %283 = arith.addf %279, %282 : vector<16x1xf32>
    %284 = math.rsqrt %283 : vector<16x1xf32>
    %285 = vector.broadcast %284 : vector<16x1xf32> to vector<16x32xf32>
    %286 = arith.mulf %281, %285 : vector<16x32xf32>
    %287 = vector.broadcast %264 : vector<1x32xf32> to vector<16x32xf32>
    %288 = arith.mulf %286, %287 : vector<16x32xf32>
    %289 = vector.broadcast %266 : vector<1x32xf32> to vector<16x32xf32>
    %290 = arith.addf %288, %289 : vector<16x32xf32>
    %291 = arith.truncf %290 : vector<16x32xf32> to vector<16x32xbf16>
    %c1_175 = arith.constant 1 : index
    %c0_176 = arith.constant 0 : index
    %c0_177 = arith.constant 0 : index
    %292 = vector.load %arg7[%c1_175, %c0_176, %c0_177] : memref<2x32x32xbf16, #tpu.memory_space<vmem>>, vector<1x32x32xbf16>
    %293 = vector.shape_cast %292 : vector<1x32x32xbf16> to vector<32x32xbf16>
    %cst_178 = arith.constant dense<0.000000e+00> : vector<32x16xf32>
    %294 = tpu.matmul %293, %291, %cst_178 {dimension_numbers = #tpu.dot_dimension_numbers<[1], [1], [0], [0], [0, 0, 1, 0], [], []>} : vector<32x32xbf16>, vector<16x32xbf16>, vector<32x16xf32> -> vector<32x16xf32>
    %c1_179 = arith.constant 1 : index
    %c0_180 = arith.constant 0 : index
    %c0_181 = arith.constant 0 : index
    %295 = vector.load %arg8[%c1_179, %c0_180, %c0_181] : memref<2x32x1xf32, #tpu.memory_space<vmem>>, vector<1x32x1xf32>
    %296 = vector.shape_cast %295 : vector<1x32x1xf32> to vector<32x1xf32>
    %297 = vector.broadcast %296 : vector<32x1xf32> to vector<32x16xf32>
    %298 = arith.addf %294, %297 : vector<32x16xf32>
    %cst_182 = arith.constant 0.000000e+00 : f32
    %299 = vector.broadcast %cst_182 : f32 to vector<16x32xf32>
    %c1_183 = arith.constant 1 : index
    %c0_184 = arith.constant 0 : index
    %c0_185 = arith.constant 0 : index
    %c0_186 = arith.constant 0 : index
    %300 = vector.load %arg5[%c1_183, %c0_184, %c0_185, %c0_186] : memref<2x4x32x8xbf16, #tpu.memory_space<vmem>>, vector<1x1x32x8xbf16>
    %301 = vector.shape_cast %300 : vector<1x1x32x8xbf16> to vector<32x8xbf16>
    %cst_187 = arith.constant dense<0.000000e+00> : vector<16x8xf32>
    %302 = tpu.matmul %291, %301, %cst_187 {dimension_numbers = #tpu.dot_dimension_numbers<[1], [0], [0], [1], [0, 0, 1, 1], [], []>} : vector<16x32xbf16>, vector<32x8xbf16>, vector<16x8xf32> -> vector<16x8xf32>
    %c1_188 = arith.constant 1 : index
    %c0_189 = arith.constant 0 : index
    %c0_190 = arith.constant 0 : index
    %c0_191 = arith.constant 0 : index
    %303 = vector.load %arg6[%c1_188, %c0_189, %c0_190, %c0_191] : memref<2x4x1x8xf32, #tpu.memory_space<vmem>>, vector<1x1x1x8xf32>
    %304 = vector.shape_cast %303 : vector<1x1x1x8xf32> to vector<1x8xf32>
    %305 = vector.broadcast %304 : vector<1x8xf32> to vector<16x8xf32>
    %306 = arith.addf %302, %305 : vector<16x8xf32>
    %307 = arith.truncf %306 : vector<16x8xf32> to vector<16x8xbf16>
    %c1_192 = arith.constant 1 : index
    %c0_193 = arith.constant 0 : index
    %c0_194 = arith.constant 0 : index
    %c0_195 = arith.constant 0 : index
    %308 = vector.load %arg9[%c1_192, %c0_193, %c0_194, %c0_195] : memref<2x4x32x8xbf16, #tpu.memory_space<vmem>>, vector<1x1x32x8xbf16>
    %309 = vector.shape_cast %308 : vector<1x1x32x8xbf16> to vector<32x8xbf16>
    %cst_196 = arith.constant dense<0.000000e+00> : vector<16x8xf32>
    %310 = tpu.matmul %291, %309, %cst_196 {dimension_numbers = #tpu.dot_dimension_numbers<[1], [0], [0], [1], [0, 0, 1, 1], [], []>} : vector<16x32xbf16>, vector<32x8xbf16>, vector<16x8xf32> -> vector<16x8xf32>
    %c1_197 = arith.constant 1 : index
    %c0_198 = arith.constant 0 : index
    %c0_199 = arith.constant 0 : index
    %c0_200 = arith.constant 0 : index
    %311 = vector.load %arg10[%c1_197, %c0_198, %c0_199, %c0_200] : memref<2x4x1x8xf32, #tpu.memory_space<vmem>>, vector<1x1x1x8xf32>
    %312 = vector.shape_cast %311 : vector<1x1x1x8xf32> to vector<1x8xf32>
    %313 = vector.broadcast %312 : vector<1x8xf32> to vector<16x8xf32>
    %314 = arith.addf %310, %313 : vector<16x8xf32>
    %315 = arith.truncf %314 : vector<16x8xf32> to vector<16x8xbf16>
    %316 = vector.extract_strided_slice %298 {offsets = [0, 0], sizes = [8, 16], strides = [1, 1]} : vector<32x16xf32> to vector<8x16xf32>
    %317 = arith.truncf %316 : vector<8x16xf32> to vector<8x16xbf16>
    %cst_201 = arith.constant dense<0.000000e+00> : vector<16x16xf32>
    %318 = tpu.matmul %307, %317, %cst_201 {dimension_numbers = #tpu.dot_dimension_numbers<[1], [0], [0], [1], [0, 0, 1, 1], [], []>} : vector<16x8xbf16>, vector<8x16xbf16>, vector<16x16xf32> -> vector<16x16xf32>
    %cst_202 = arith.constant 0.353553385 : f32
    %319 = vector.broadcast %cst_202 : f32 to vector<16x16xf32>
    %320 = arith.mulf %318, %319 : vector<16x16xf32>
    %321 = arith.addf %320, %7 : vector<16x16xf32>
    %cst_203 = arith.constant dense<0xFF800000> : vector<16xf32>
    %322 = vector.multi_reduction <maximumf>, %321, %cst_203 [1] : vector<16x16xf32> to vector<16xf32>
    %323 = vector.shape_cast %322 : vector<16xf32> to vector<16x1xf32>
    %324 = vector.broadcast %323 : vector<16x1xf32> to vector<16x16xf32>
    %325 = arith.subf %321, %324 : vector<16x16xf32>
    %326 = math.exp %325 : vector<16x16xf32>
    %cst_204 = arith.constant dense<0.000000e+00> : vector<16xf32>
    %327 = vector.multi_reduction <add>, %326, %cst_204 [1] : vector<16x16xf32> to vector<16xf32>
    %328 = vector.shape_cast %327 : vector<16xf32> to vector<16x1xf32>
    %329 = tpu.reciprocal %328 {approx = true} : vector<16x1xf32> -> vector<16x1xf32>
    %330 = vector.broadcast %329 : vector<16x1xf32> to vector<16x16xf32>
    %331 = arith.mulf %326, %330 : vector<16x16xf32>
    %332 = arith.truncf %331 : vector<16x16xf32> to vector<16x16xbf16>
    %cst_205 = arith.constant dense<0.000000e+00> : vector<16x8xf32>
    %333 = tpu.matmul %332, %315, %cst_205 {dimension_numbers = #tpu.dot_dimension_numbers<[1], [0], [0], [1], [0, 0, 1, 1], [], []>} : vector<16x16xbf16>, vector<16x8xbf16>, vector<16x8xf32> -> vector<16x8xf32>
    %334 = arith.truncf %333 : vector<16x8xf32> to vector<16x8xbf16>
    %c1_206 = arith.constant 1 : index
    %c0_207 = arith.constant 0 : index
    %c0_208 = arith.constant 0 : index
    %c0_209 = arith.constant 0 : index
    %335 = vector.load %arg11[%c1_206, %c0_207, %c0_208, %c0_209] : memref<2x4x8x32xbf16, #tpu.memory_space<vmem>>, vector<1x1x8x32xbf16>
    %336 = vector.shape_cast %335 : vector<1x1x8x32xbf16> to vector<8x32xbf16>
    %cst_210 = arith.constant dense<0.000000e+00> : vector<16x32xf32>
    %337 = tpu.matmul %334, %336, %cst_210 {dimension_numbers = #tpu.dot_dimension_numbers<[1], [0], [0], [1], [0, 0, 1, 1], [], []>} : vector<16x8xbf16>, vector<8x32xbf16>, vector<16x32xf32> -> vector<16x32xf32>
    %338 = arith.addf %299, %337 : vector<16x32xf32>
    %c1_211 = arith.constant 1 : index
    %c1_212 = arith.constant 1 : index
    %c0_213 = arith.constant 0 : index
    %c0_214 = arith.constant 0 : index
    %339 = vector.load %arg5[%c1_211, %c1_212, %c0_213, %c0_214] : memref<2x4x32x8xbf16, #tpu.memory_space<vmem>>, vector<1x1x32x8xbf16>
    %340 = vector.shape_cast %339 : vector<1x1x32x8xbf16> to vector<32x8xbf16>
    %cst_215 = arith.constant dense<0.000000e+00> : vector<16x8xf32>
    %341 = tpu.matmul %291, %340, %cst_215 {dimension_numbers = #tpu.dot_dimension_numbers<[1], [0], [0], [1], [0, 0, 1, 1], [], []>} : vector<16x32xbf16>, vector<32x8xbf16>, vector<16x8xf32> -> vector<16x8xf32>
    %c1_216 = arith.constant 1 : index
    %c1_217 = arith.constant 1 : index
    %c0_218 = arith.constant 0 : index
    %c0_219 = arith.constant 0 : index
    %342 = vector.load %arg6[%c1_216, %c1_217, %c0_218, %c0_219] : memref<2x4x1x8xf32, #tpu.memory_space<vmem>>, vector<1x1x1x8xf32>
    %343 = vector.shape_cast %342 : vector<1x1x1x8xf32> to vector<1x8xf32>
    %344 = vector.broadcast %343 : vector<1x8xf32> to vector<16x8xf32>
    %345 = arith.addf %341, %344 : vector<16x8xf32>
    %346 = arith.truncf %345 : vector<16x8xf32> to vector<16x8xbf16>
    %c1_220 = arith.constant 1 : index
    %c1_221 = arith.constant 1 : index
    %c0_222 = arith.constant 0 : index
    %c0_223 = arith.constant 0 : index
    %347 = vector.load %arg9[%c1_220, %c1_221, %c0_222, %c0_223] : memref<2x4x32x8xbf16, #tpu.memory_space<vmem>>, vector<1x1x32x8xbf16>
    %348 = vector.shape_cast %347 : vector<1x1x32x8xbf16> to vector<32x8xbf16>
    %cst_224 = arith.constant dense<0.000000e+00> : vector<16x8xf32>
    %349 = tpu.matmul %291, %348, %cst_224 {dimension_numbers = #tpu.dot_dimension_numbers<[1], [0], [0], [1], [0, 0, 1, 1], [], []>} : vector<16x32xbf16>, vector<32x8xbf16>, vector<16x8xf32> -> vector<16x8xf32>
    %c1_225 = arith.constant 1 : index
    %c1_226 = arith.constant 1 : index
    %c0_227 = arith.constant 0 : index
    %c0_228 = arith.constant 0 : index
    %350 = vector.load %arg10[%c1_225, %c1_226, %c0_227, %c0_228] : memref<2x4x1x8xf32, #tpu.memory_space<vmem>>, vector<1x1x1x8xf32>
    %351 = vector.shape_cast %350 : vector<1x1x1x8xf32> to vector<1x8xf32>
    %352 = vector.broadcast %351 : vector<1x8xf32> to vector<16x8xf32>
    %353 = arith.addf %349, %352 : vector<16x8xf32>
    %354 = arith.truncf %353 : vector<16x8xf32> to vector<16x8xbf16>
    %355 = vector.extract_strided_slice %298 {offsets = [8, 0], sizes = [8, 16], strides = [1, 1]} : vector<32x16xf32> to vector<8x16xf32>
    %356 = arith.truncf %355 : vector<8x16xf32> to vector<8x16xbf16>
    %cst_229 = arith.constant dense<0.000000e+00> : vector<16x16xf32>
    %357 = tpu.matmul %346, %356, %cst_229 {dimension_numbers = #tpu.dot_dimension_numbers<[1], [0], [0], [1], [0, 0, 1, 1], [], []>} : vector<16x8xbf16>, vector<8x16xbf16>, vector<16x16xf32> -> vector<16x16xf32>
    %cst_230 = arith.constant 0.353553385 : f32
    %358 = vector.broadcast %cst_230 : f32 to vector<16x16xf32>
    %359 = arith.mulf %357, %358 : vector<16x16xf32>
    %360 = arith.addf %359, %7 : vector<16x16xf32>
    %cst_231 = arith.constant dense<0xFF800000> : vector<16xf32>
    %361 = vector.multi_reduction <maximumf>, %360, %cst_231 [1] : vector<16x16xf32> to vector<16xf32>
    %362 = vector.shape_cast %361 : vector<16xf32> to vector<16x1xf32>
    %363 = vector.broadcast %362 : vector<16x1xf32> to vector<16x16xf32>
    %364 = arith.subf %360, %363 : vector<16x16xf32>
    %365 = math.exp %364 : vector<16x16xf32>
    %cst_232 = arith.constant dense<0.000000e+00> : vector<16xf32>
    %366 = vector.multi_reduction <add>, %365, %cst_232 [1] : vector<16x16xf32> to vector<16xf32>
    %367 = vector.shape_cast %366 : vector<16xf32> to vector<16x1xf32>
    %368 = tpu.reciprocal %367 {approx = true} : vector<16x1xf32> -> vector<16x1xf32>
    %369 = vector.broadcast %368 : vector<16x1xf32> to vector<16x16xf32>
    %370 = arith.mulf %365, %369 : vector<16x16xf32>
    %371 = arith.truncf %370 : vector<16x16xf32> to vector<16x16xbf16>
    %cst_233 = arith.constant dense<0.000000e+00> : vector<16x8xf32>
    %372 = tpu.matmul %371, %354, %cst_233 {dimension_numbers = #tpu.dot_dimension_numbers<[1], [0], [0], [1], [0, 0, 1, 1], [], []>} : vector<16x16xbf16>, vector<16x8xbf16>, vector<16x8xf32> -> vector<16x8xf32>
    %373 = arith.truncf %372 : vector<16x8xf32> to vector<16x8xbf16>
    %c1_234 = arith.constant 1 : index
    %c1_235 = arith.constant 1 : index
    %c0_236 = arith.constant 0 : index
    %c0_237 = arith.constant 0 : index
    %374 = vector.load %arg11[%c1_234, %c1_235, %c0_236, %c0_237] : memref<2x4x8x32xbf16, #tpu.memory_space<vmem>>, vector<1x1x8x32xbf16>
    %375 = vector.shape_cast %374 : vector<1x1x8x32xbf16> to vector<8x32xbf16>
    %cst_238 = arith.constant dense<0.000000e+00> : vector<16x32xf32>
    %376 = tpu.matmul %373, %375, %cst_238 {dimension_numbers = #tpu.dot_dimension_numbers<[1], [0], [0], [1], [0, 0, 1, 1], [], []>} : vector<16x8xbf16>, vector<8x32xbf16>, vector<16x32xf32> -> vector<16x32xf32>
    %377 = arith.addf %338, %376 : vector<16x32xf32>
    %c1_239 = arith.constant 1 : index
    %c2_240 = arith.constant 2 : index
    %c0_241 = arith.constant 0 : index
    %c0_242 = arith.constant 0 : index
    %378 = vector.load %arg5[%c1_239, %c2_240, %c0_241, %c0_242] : memref<2x4x32x8xbf16, #tpu.memory_space<vmem>>, vector<1x1x32x8xbf16>
    %379 = vector.shape_cast %378 : vector<1x1x32x8xbf16> to vector<32x8xbf16>
    %cst_243 = arith.constant dense<0.000000e+00> : vector<16x8xf32>
    %380 = tpu.matmul %291, %379, %cst_243 {dimension_numbers = #tpu.dot_dimension_numbers<[1], [0], [0], [1], [0, 0, 1, 1], [], []>} : vector<16x32xbf16>, vector<32x8xbf16>, vector<16x8xf32> -> vector<16x8xf32>
    %c1_244 = arith.constant 1 : index
    %c2_245 = arith.constant 2 : index
    %c0_246 = arith.constant 0 : index
    %c0_247 = arith.constant 0 : index
    %381 = vector.load %arg6[%c1_244, %c2_245, %c0_246, %c0_247] : memref<2x4x1x8xf32, #tpu.memory_space<vmem>>, vector<1x1x1x8xf32>
    %382 = vector.shape_cast %381 : vector<1x1x1x8xf32> to vector<1x8xf32>
    %383 = vector.broadcast %382 : vector<1x8xf32> to vector<16x8xf32>
    %384 = arith.addf %380, %383 : vector<16x8xf32>
    %385 = arith.truncf %384 : vector<16x8xf32> to vector<16x8xbf16>
    %c1_248 = arith.constant 1 : index
    %c2_249 = arith.constant 2 : index
    %c0_250 = arith.constant 0 : index
    %c0_251 = arith.constant 0 : index
    %386 = vector.load %arg9[%c1_248, %c2_249, %c0_250, %c0_251] : memref<2x4x32x8xbf16, #tpu.memory_space<vmem>>, vector<1x1x32x8xbf16>
    %387 = vector.shape_cast %386 : vector<1x1x32x8xbf16> to vector<32x8xbf16>
    %cst_252 = arith.constant dense<0.000000e+00> : vector<16x8xf32>
    %388 = tpu.matmul %291, %387, %cst_252 {dimension_numbers = #tpu.dot_dimension_numbers<[1], [0], [0], [1], [0, 0, 1, 1], [], []>} : vector<16x32xbf16>, vector<32x8xbf16>, vector<16x8xf32> -> vector<16x8xf32>
    %c1_253 = arith.constant 1 : index
    %c2_254 = arith.constant 2 : index
    %c0_255 = arith.constant 0 : index
    %c0_256 = arith.constant 0 : index
    %389 = vector.load %arg10[%c1_253, %c2_254, %c0_255, %c0_256] : memref<2x4x1x8xf32, #tpu.memory_space<vmem>>, vector<1x1x1x8xf32>
    %390 = vector.shape_cast %389 : vector<1x1x1x8xf32> to vector<1x8xf32>
    %391 = vector.broadcast %390 : vector<1x8xf32> to vector<16x8xf32>
    %392 = arith.addf %388, %391 : vector<16x8xf32>
    %393 = arith.truncf %392 : vector<16x8xf32> to vector<16x8xbf16>
    %394 = vector.extract_strided_slice %298 {offsets = [16, 0], sizes = [8, 16], strides = [1, 1]} : vector<32x16xf32> to vector<8x16xf32>
    %395 = arith.truncf %394 : vector<8x16xf32> to vector<8x16xbf16>
    %cst_257 = arith.constant dense<0.000000e+00> : vector<16x16xf32>
    %396 = tpu.matmul %385, %395, %cst_257 {dimension_numbers = #tpu.dot_dimension_numbers<[1], [0], [0], [1], [0, 0, 1, 1], [], []>} : vector<16x8xbf16>, vector<8x16xbf16>, vector<16x16xf32> -> vector<16x16xf32>
    %cst_258 = arith.constant 0.353553385 : f32
    %397 = vector.broadcast %cst_258 : f32 to vector<16x16xf32>
    %398 = arith.mulf %396, %397 : vector<16x16xf32>
    %399 = arith.addf %398, %7 : vector<16x16xf32>
    %cst_259 = arith.constant dense<0xFF800000> : vector<16xf32>
    %400 = vector.multi_reduction <maximumf>, %399, %cst_259 [1] : vector<16x16xf32> to vector<16xf32>
    %401 = vector.shape_cast %400 : vector<16xf32> to vector<16x1xf32>
    %402 = vector.broadcast %401 : vector<16x1xf32> to vector<16x16xf32>
    %403 = arith.subf %399, %402 : vector<16x16xf32>
    %404 = math.exp %403 : vector<16x16xf32>
    %cst_260 = arith.constant dense<0.000000e+00> : vector<16xf32>
    %405 = vector.multi_reduction <add>, %404, %cst_260 [1] : vector<16x16xf32> to vector<16xf32>
    %406 = vector.shape_cast %405 : vector<16xf32> to vector<16x1xf32>
    %407 = tpu.reciprocal %406 {approx = true} : vector<16x1xf32> -> vector<16x1xf32>
    %408 = vector.broadcast %407 : vector<16x1xf32> to vector<16x16xf32>
    %409 = arith.mulf %404, %408 : vector<16x16xf32>
    %410 = arith.truncf %409 : vector<16x16xf32> to vector<16x16xbf16>
    %cst_261 = arith.constant dense<0.000000e+00> : vector<16x8xf32>
    %411 = tpu.matmul %410, %393, %cst_261 {dimension_numbers = #tpu.dot_dimension_numbers<[1], [0], [0], [1], [0, 0, 1, 1], [], []>} : vector<16x16xbf16>, vector<16x8xbf16>, vector<16x8xf32> -> vector<16x8xf32>
    %412 = arith.truncf %411 : vector<16x8xf32> to vector<16x8xbf16>
    %c1_262 = arith.constant 1 : index
    %c2_263 = arith.constant 2 : index
    %c0_264 = arith.constant 0 : index
    %c0_265 = arith.constant 0 : index
    %413 = vector.load %arg11[%c1_262, %c2_263, %c0_264, %c0_265] : memref<2x4x8x32xbf16, #tpu.memory_space<vmem>>, vector<1x1x8x32xbf16>
    %414 = vector.shape_cast %413 : vector<1x1x8x32xbf16> to vector<8x32xbf16>
    %cst_266 = arith.constant dense<0.000000e+00> : vector<16x32xf32>
    %415 = tpu.matmul %412, %414, %cst_266 {dimension_numbers = #tpu.dot_dimension_numbers<[1], [0], [0], [1], [0, 0, 1, 1], [], []>} : vector<16x8xbf16>, vector<8x32xbf16>, vector<16x32xf32> -> vector<16x32xf32>
    %416 = arith.addf %377, %415 : vector<16x32xf32>
    %c1_267 = arith.constant 1 : index
    %c3_268 = arith.constant 3 : index
    %c0_269 = arith.constant 0 : index
    %c0_270 = arith.constant 0 : index
    %417 = vector.load %arg5[%c1_267, %c3_268, %c0_269, %c0_270] : memref<2x4x32x8xbf16, #tpu.memory_space<vmem>>, vector<1x1x32x8xbf16>
    %418 = vector.shape_cast %417 : vector<1x1x32x8xbf16> to vector<32x8xbf16>
    %cst_271 = arith.constant dense<0.000000e+00> : vector<16x8xf32>
    %419 = tpu.matmul %291, %418, %cst_271 {dimension_numbers = #tpu.dot_dimension_numbers<[1], [0], [0], [1], [0, 0, 1, 1], [], []>} : vector<16x32xbf16>, vector<32x8xbf16>, vector<16x8xf32> -> vector<16x8xf32>
    %c1_272 = arith.constant 1 : index
    %c3_273 = arith.constant 3 : index
    %c0_274 = arith.constant 0 : index
    %c0_275 = arith.constant 0 : index
    %420 = vector.load %arg6[%c1_272, %c3_273, %c0_274, %c0_275] : memref<2x4x1x8xf32, #tpu.memory_space<vmem>>, vector<1x1x1x8xf32>
    %421 = vector.shape_cast %420 : vector<1x1x1x8xf32> to vector<1x8xf32>
    %422 = vector.broadcast %421 : vector<1x8xf32> to vector<16x8xf32>
    %423 = arith.addf %419, %422 : vector<16x8xf32>
    %424 = arith.truncf %423 : vector<16x8xf32> to vector<16x8xbf16>
    %c1_276 = arith.constant 1 : index
    %c3_277 = arith.constant 3 : index
    %c0_278 = arith.constant 0 : index
    %c0_279 = arith.constant 0 : index
    %425 = vector.load %arg9[%c1_276, %c3_277, %c0_278, %c0_279] : memref<2x4x32x8xbf16, #tpu.memory_space<vmem>>, vector<1x1x32x8xbf16>
    %426 = vector.shape_cast %425 : vector<1x1x32x8xbf16> to vector<32x8xbf16>
    %cst_280 = arith.constant dense<0.000000e+00> : vector<16x8xf32>
    %427 = tpu.matmul %291, %426, %cst_280 {dimension_numbers = #tpu.dot_dimension_numbers<[1], [0], [0], [1], [0, 0, 1, 1], [], []>} : vector<16x32xbf16>, vector<32x8xbf16>, vector<16x8xf32> -> vector<16x8xf32>
    %c1_281 = arith.constant 1 : index
    %c3_282 = arith.constant 3 : index
    %c0_283 = arith.constant 0 : index
    %c0_284 = arith.constant 0 : index
    %428 = vector.load %arg10[%c1_281, %c3_282, %c0_283, %c0_284] : memref<2x4x1x8xf32, #tpu.memory_space<vmem>>, vector<1x1x1x8xf32>
    %429 = vector.shape_cast %428 : vector<1x1x1x8xf32> to vector<1x8xf32>
    %430 = vector.broadcast %429 : vector<1x8xf32> to vector<16x8xf32>
    %431 = arith.addf %427, %430 : vector<16x8xf32>
    %432 = arith.truncf %431 : vector<16x8xf32> to vector<16x8xbf16>
    %433 = vector.extract_strided_slice %298 {offsets = [24, 0], sizes = [8, 16], strides = [1, 1]} : vector<32x16xf32> to vector<8x16xf32>
    %434 = arith.truncf %433 : vector<8x16xf32> to vector<8x16xbf16>
    %cst_285 = arith.constant dense<0.000000e+00> : vector<16x16xf32>
    %435 = tpu.matmul %424, %434, %cst_285 {dimension_numbers = #tpu.dot_dimension_numbers<[1], [0], [0], [1], [0, 0, 1, 1], [], []>} : vector<16x8xbf16>, vector<8x16xbf16>, vector<16x16xf32> -> vector<16x16xf32>
    %cst_286 = arith.constant 0.353553385 : f32
    %436 = vector.broadcast %cst_286 : f32 to vector<16x16xf32>
    %437 = arith.mulf %435, %436 : vector<16x16xf32>
    %438 = arith.addf %437, %7 : vector<16x16xf32>
    %cst_287 = arith.constant dense<0xFF800000> : vector<16xf32>
    %439 = vector.multi_reduction <maximumf>, %438, %cst_287 [1] : vector<16x16xf32> to vector<16xf32>
    %440 = vector.shape_cast %439 : vector<16xf32> to vector<16x1xf32>
    %441 = vector.broadcast %440 : vector<16x1xf32> to vector<16x16xf32>
    %442 = arith.subf %438, %441 : vector<16x16xf32>
    %443 = math.exp %442 : vector<16x16xf32>
    %cst_288 = arith.constant dense<0.000000e+00> : vector<16xf32>
    %444 = vector.multi_reduction <add>, %443, %cst_288 [1] : vector<16x16xf32> to vector<16xf32>
    %445 = vector.shape_cast %444 : vector<16xf32> to vector<16x1xf32>
    %446 = tpu.reciprocal %445 {approx = true} : vector<16x1xf32> -> vector<16x1xf32>
    %447 = vector.broadcast %446 : vector<16x1xf32> to vector<16x16xf32>
    %448 = arith.mulf %443, %447 : vector<16x16xf32>
    %449 = arith.truncf %448 : vector<16x16xf32> to vector<16x16xbf16>
    %cst_289 = arith.constant dense<0.000000e+00> : vector<16x8xf32>
    %450 = tpu.matmul %449, %432, %cst_289 {dimension_numbers = #tpu.dot_dimension_numbers<[1], [0], [0], [1], [0, 0, 1, 1], [], []>} : vector<16x16xbf16>, vector<16x8xbf16>, vector<16x8xf32> -> vector<16x8xf32>
    %451 = arith.truncf %450 : vector<16x8xf32> to vector<16x8xbf16>
    %c1_290 = arith.constant 1 : index
    %c3_291 = arith.constant 3 : index
    %c0_292 = arith.constant 0 : index
    %c0_293 = arith.constant 0 : index
    %452 = vector.load %arg11[%c1_290, %c3_291, %c0_292, %c0_293] : memref<2x4x8x32xbf16, #tpu.memory_space<vmem>>, vector<1x1x8x32xbf16>
    %453 = vector.shape_cast %452 : vector<1x1x8x32xbf16> to vector<8x32xbf16>
    %cst_294 = arith.constant dense<0.000000e+00> : vector<16x32xf32>
    %454 = tpu.matmul %451, %453, %cst_294 {dimension_numbers = #tpu.dot_dimension_numbers<[1], [0], [0], [1], [0, 0, 1, 1], [], []>} : vector<16x8xbf16>, vector<8x32xbf16>, vector<16x32xf32> -> vector<16x32xf32>
    %455 = arith.addf %416, %454 : vector<16x32xf32>
    %c1_295 = arith.constant 1 : index
    %c0_296 = arith.constant 0 : index
    %c0_297 = arith.constant 0 : index
    %456 = vector.load %arg12[%c1_295, %c0_296, %c0_297] : memref<2x1x32xf32, #tpu.memory_space<vmem>>, vector<1x1x32xf32>
    %457 = vector.shape_cast %456 : vector<1x1x32xf32> to vector<1x32xf32>
    %458 = vector.broadcast %457 : vector<1x32xf32> to vector<16x32xf32>
    %459 = arith.addf %455, %458 : vector<16x32xf32>
    %460 = arith.addf %459, %290 : vector<16x32xf32>
    %c1_298 = arith.constant 1 : index
    %c0_299 = arith.constant 0 : index
    %c0_300 = arith.constant 0 : index
    %461 = vector.load %arg13[%c1_298, %c0_299, %c0_300] : memref<2x1x32xf32, #tpu.memory_space<vmem>>, vector<1x1x32xf32>
    %462 = vector.shape_cast %461 : vector<1x1x32xf32> to vector<1x32xf32>
    %c1_301 = arith.constant 1 : index
    %c0_302 = arith.constant 0 : index
    %c0_303 = arith.constant 0 : index
    %463 = vector.load %arg14[%c1_301, %c0_302, %c0_303] : memref<2x1x32xf32, #tpu.memory_space<vmem>>, vector<1x1x32xf32>
    %464 = vector.shape_cast %463 : vector<1x1x32xf32> to vector<1x32xf32>
    %cst_304 = arith.constant dense<0.000000e+00> : vector<16xf32>
    %465 = vector.multi_reduction <add>, %460, %cst_304 [1] : vector<16x32xf32> to vector<16xf32>
    %466 = vector.shape_cast %465 : vector<16xf32> to vector<16x1xf32>
    %cst_305 = arith.constant 3.200000e+01 : f32
    %467 = vector.broadcast %cst_305 : f32 to vector<16x1xf32>
    %468 = arith.divf %466, %467 : vector<16x1xf32>
    %469 = vector.broadcast %468 : vector<16x1xf32> to vector<16x32xf32>
    %470 = arith.subf %460, %469 : vector<16x32xf32>
    %471 = vector.broadcast %468 : vector<16x1xf32> to vector<16x32xf32>
    %472 = arith.subf %460, %471 : vector<16x32xf32>
    %473 = arith.mulf %470, %472 : vector<16x32xf32>
    %cst_306 = arith.constant dense<0.000000e+00> : vector<16xf32>
    %474 = vector.multi_reduction <add>, %473, %cst_306 [1] : vector<16x32xf32> to vector<16xf32>
    %475 = vector.shape_cast %474 : vector<16xf32> to vector<16x1xf32>
    %cst_307 = arith.constant 3.200000e+01 : f32
    %476 = vector.broadcast %cst_307 : f32 to vector<16x1xf32>
    %477 = arith.divf %475, %476 : vector<16x1xf32>
    %478 = vector.broadcast %468 : vector<16x1xf32> to vector<16x32xf32>
    %479 = arith.subf %460, %478 : vector<16x32xf32>
    %cst_308 = arith.constant 9.99999974E-6 : f32
    %480 = vector.broadcast %cst_308 : f32 to vector<16x1xf32>
    %481 = arith.addf %477, %480 : vector<16x1xf32>
    %482 = math.rsqrt %481 : vector<16x1xf32>
    %483 = vector.broadcast %482 : vector<16x1xf32> to vector<16x32xf32>
    %484 = arith.mulf %479, %483 : vector<16x32xf32>
    %485 = vector.broadcast %462 : vector<1x32xf32> to vector<16x32xf32>
    %486 = arith.mulf %484, %485 : vector<16x32xf32>
    %487 = vector.broadcast %464 : vector<1x32xf32> to vector<16x32xf32>
    %488 = arith.addf %486, %487 : vector<16x32xf32>
    %489 = arith.truncf %488 : vector<16x32xf32> to vector<16x32xbf16>
    %c1_309 = arith.constant 1 : index
    %c0_310 = arith.constant 0 : index
    %c0_311 = arith.constant 0 : index
    %490 = vector.load %arg15[%c1_309, %c0_310, %c0_311] : memref<2x32x64xbf16, #tpu.memory_space<vmem>>, vector<1x32x64xbf16>
    %491 = vector.shape_cast %490 : vector<1x32x64xbf16> to vector<32x64xbf16>
    %cst_312 = arith.constant dense<0.000000e+00> : vector<16x64xf32>
    %492 = tpu.matmul %489, %491, %cst_312 {dimension_numbers = #tpu.dot_dimension_numbers<[1], [0], [0], [1], [0, 0, 1, 1], [], []>} : vector<16x32xbf16>, vector<32x64xbf16>, vector<16x64xf32> -> vector<16x64xf32>
    %c1_313 = arith.constant 1 : index
    %c0_314 = arith.constant 0 : index
    %c0_315 = arith.constant 0 : index
    %493 = vector.load %arg16[%c1_313, %c0_314, %c0_315] : memref<2x1x64xf32, #tpu.memory_space<vmem>>, vector<1x1x64xf32>
    %494 = vector.shape_cast %493 : vector<1x1x64xf32> to vector<1x64xf32>
    %495 = vector.broadcast %494 : vector<1x64xf32> to vector<16x64xf32>
    %496 = arith.addf %492, %495 : vector<16x64xf32>
    %cst_316 = arith.constant 5.000000e-01 : f32
    %497 = vector.broadcast %cst_316 : f32 to vector<16x64xf32>
    %498 = arith.mulf %497, %496 : vector<16x64xf32>
    %cst_317 = arith.constant 4.471500e-02 : f32
    %499 = vector.broadcast %cst_317 : f32 to vector<16x64xf32>
    %500 = arith.mulf %499, %496 : vector<16x64xf32>
    %501 = arith.mulf %500, %496 : vector<16x64xf32>
    %502 = arith.mulf %501, %496 : vector<16x64xf32>
    %503 = arith.addf %496, %502 : vector<16x64xf32>
    %cst_318 = arith.constant 0.797884583 : f32
    %504 = vector.broadcast %cst_318 : f32 to vector<16x64xf32>
    %505 = arith.mulf %504, %503 : vector<16x64xf32>
    %506 = math.tanh %505 : vector<16x64xf32>
    %cst_319 = arith.constant 1.000000e+00 : f32
    %507 = vector.broadcast %cst_319 : f32 to vector<16x64xf32>
    %508 = arith.addf %507, %506 : vector<16x64xf32>
    %509 = arith.mulf %498, %508 : vector<16x64xf32>
    %510 = arith.truncf %509 : vector<16x64xf32> to vector<16x64xbf16>
    %c1_320 = arith.constant 1 : index
    %c0_321 = arith.constant 0 : index
    %c0_322 = arith.constant 0 : index
    %511 = vector.load %arg17[%c1_320, %c0_321, %c0_322] : memref<2x64x32xbf16, #tpu.memory_space<vmem>>, vector<1x64x32xbf16>
    %512 = vector.shape_cast %511 : vector<1x64x32xbf16> to vector<64x32xbf16>
    %cst_323 = arith.constant dense<0.000000e+00> : vector<16x32xf32>
    %513 = tpu.matmul %510, %512, %cst_323 {dimension_numbers = #tpu.dot_dimension_numbers<[1], [0], [0], [1], [0, 0, 1, 1], [], []>} : vector<16x64xbf16>, vector<64x32xbf16>, vector<16x32xf32> -> vector<16x32xf32>
    %c1_324 = arith.constant 1 : index
    %c0_325 = arith.constant 0 : index
    %c0_326 = arith.constant 0 : index
    %514 = vector.load %arg18[%c1_324, %c0_325, %c0_326] : memref<2x1x32xf32, #tpu.memory_space<vmem>>, vector<1x1x32xf32>
    %515 = vector.shape_cast %514 : vector<1x1x32xf32> to vector<1x32xf32>
    %516 = vector.broadcast %515 : vector<1x32xf32> to vector<16x32xf32>
    %517 = arith.addf %513, %516 : vector<16x32xf32>
    %518 = arith.addf %517, %488 : vector<16x32xf32>
    %c1_327 = arith.constant 1 : index
    %c0_328 = arith.constant 0 : index
    %c0_329 = arith.constant 0 : index
    %519 = vector.load %arg19[%c1_327, %c0_328, %c0_329] : memref<2x1x32xf32, #tpu.memory_space<vmem>>, vector<1x1x32xf32>
    %520 = vector.shape_cast %519 : vector<1x1x32xf32> to vector<1x32xf32>
    %c1_330 = arith.constant 1 : index
    %c0_331 = arith.constant 0 : index
    %c0_332 = arith.constant 0 : index
    %521 = vector.load %arg20[%c1_330, %c0_331, %c0_332] : memref<2x1x32xf32, #tpu.memory_space<vmem>>, vector<1x1x32xf32>
    %522 = vector.shape_cast %521 : vector<1x1x32xf32> to vector<1x32xf32>
    %cst_333 = arith.constant dense<0.000000e+00> : vector<16xf32>
    %523 = vector.multi_reduction <add>, %518, %cst_333 [1] : vector<16x32xf32> to vector<16xf32>
    %524 = vector.shape_cast %523 : vector<16xf32> to vector<16x1xf32>
    %cst_334 = arith.constant 3.200000e+01 : f32
    %525 = vector.broadcast %cst_334 : f32 to vector<16x1xf32>
    %526 = arith.divf %524, %525 : vector<16x1xf32>
    %527 = vector.broadcast %526 : vector<16x1xf32> to vector<16x32xf32>
    %528 = arith.subf %518, %527 : vector<16x32xf32>
    %529 = vector.broadcast %526 : vector<16x1xf32> to vector<16x32xf32>
    %530 = arith.subf %518, %529 : vector<16x32xf32>
    %531 = arith.mulf %528, %530 : vector<16x32xf32>
    %cst_335 = arith.constant dense<0.000000e+00> : vector<16xf32>
    %532 = vector.multi_reduction <add>, %531, %cst_335 [1] : vector<16x32xf32> to vector<16xf32>
    %533 = vector.shape_cast %532 : vector<16xf32> to vector<16x1xf32>
    %cst_336 = arith.constant 3.200000e+01 : f32
    %534 = vector.broadcast %cst_336 : f32 to vector<16x1xf32>
    %535 = arith.divf %533, %534 : vector<16x1xf32>
    %536 = vector.broadcast %526 : vector<16x1xf32> to vector<16x32xf32>
    %537 = arith.subf %518, %536 : vector<16x32xf32>
    %cst_337 = arith.constant 9.99999974E-6 : f32
    %538 = vector.broadcast %cst_337 : f32 to vector<16x1xf32>
    %539 = arith.addf %535, %538 : vector<16x1xf32>
    %540 = math.rsqrt %539 : vector<16x1xf32>
    %541 = vector.broadcast %540 : vector<16x1xf32> to vector<16x32xf32>
    %542 = arith.mulf %537, %541 : vector<16x32xf32>
    %543 = vector.broadcast %520 : vector<1x32xf32> to vector<16x32xf32>
    %544 = arith.mulf %542, %543 : vector<16x32xf32>
    %545 = vector.broadcast %522 : vector<1x32xf32> to vector<16x32xf32>
    %546 = arith.addf %544, %545 : vector<16x32xf32>
    %547 = arith.truncf %546 : vector<16x32xf32> to vector<16x32xbf16>
    %c0_338 = arith.constant 0 : index
    %c0_339 = arith.constant 0 : index
    %548 = vector.load %arg21[%c0_338, %c0_339] : memref<32x32xbf16, #tpu.memory_space<vmem>>, vector<32x32xbf16>
    %cst_340 = arith.constant dense<0.000000e+00> : vector<16x32xf32>
    %549 = tpu.matmul %547, %548, %cst_340 {dimension_numbers = #tpu.dot_dimension_numbers<[1], [0], [0], [1], [0, 0, 1, 1], [], []>} : vector<16x32xbf16>, vector<32x32xbf16>, vector<16x32xf32> -> vector<16x32xf32>
    %c0_341 = arith.constant 0 : index
    %c0_342 = arith.constant 0 : index
    %550 = vector.load %arg22[%c0_341, %c0_342] : memref<1x32xf32, #tpu.memory_space<vmem>>, vector<1x32xf32>
    %551 = vector.broadcast %550 : vector<1x32xf32> to vector<16x32xf32>
    %552 = arith.addf %549, %551 : vector<16x32xf32>
    %553 = math.tanh %552 : vector<16x32xf32>
    %c0_343 = arith.constant 0 : index
    %c0_344 = arith.constant 0 : index
    %554 = vector.load %arg23[%c0_343, %c0_344] : memref<16x32xf32, #tpu.memory_space<vmem>>, vector<16x32xf32>
    %555 = arith.mulf %553, %554 : vector<16x32xf32>
    %cst_345 = arith.constant dense<0.000000e+00> : vector<16xf32>
    %556 = vector.multi_reduction <add>, %555, %cst_345 [1] : vector<16x32xf32> to vector<16xf32>
    %557 = vector.shape_cast %556 : vector<16xf32> to vector<16x1xf32>
    %c0_346 = arith.constant 0 : index
    %c0_347 = arith.constant 0 : index
    %558 = vector.load %arg24[%c0_346, %c0_347] : memref<1x1xf32, #tpu.memory_space<vmem>>, vector<1x1xf32>
    %559 = vector.broadcast %558 : vector<1x1xf32> to vector<16x1xf32>
    %560 = arith.addf %557, %559 : vector<16x1xf32>
    %c0_348 = arith.constant 0 : index
    %c0_349 = arith.constant 0 : index
    %561 = vector.load %arg25[%c0_348, %c0_349] : memref<16x1xf32, #tpu.memory_space<vmem>>, vector<16x1xf32>
    tpu.vector_store %arg25[%c0_348, %c0_349], %560 {strides = array<i32>} : memref<16x1xf32, #tpu.memory_space<vmem>>, vector<16x1xf32>,
    return
  }
}

</mosaic_0001>

<llo_original>
// kernel: roberta_forward.1
$region0: #{roberta_forward.1}
  #allocation0 [shape = 'u32[]', space=smem, size = 0x4, offset = 0x4, fixed_abs, tag = 'smem constant byte address 0x4 - core index']
  #allocation1 [shape = 'u32[144,128]{1,0:T(1,128)}', space=vmem, size = 0x12000, scoped, tag = 'internal scratch']
  #allocation2 [shape = 'f32[1,1]{1,0:T(1,128)S(1)}', space=vmem, size = 0x200, scoped, tag = 'scoped memory for roberta_forward.1']
  %s0 = inlined_call_operand.vmem [shape: f32[16,32], index: 0, kind: input, shape index: {}]
  %s1 = inlined_call_operand.vmem [shape: s32[16,1], index: 1, kind: input, shape index: {}]
  %s2 = inlined_call_operand.vmem [shape: s32[1,16], index: 2, kind: input, shape index: {}]
  %s3 = inlined_call_operand.vmem [shape: f32[1,32], index: 3, kind: input, shape index: {}]
  %s4 = inlined_call_operand.vmem [shape: f32[1,32], index: 4, kind: input, shape index: {}]
  %s5 = inlined_call_operand.vmem [shape: bf16[2,4,32,8], index: 5, kind: input, shape index: {}]
  %s6 = inlined_call_operand.vmem [shape: f32[2,4,1,8], index: 6, kind: input, shape index: {}]
  %s7 = inlined_call_operand.vmem [shape: bf16[2,32,32], index: 7, kind: input, shape index: {}]
  %s8 = inlined_call_operand.vmem [shape: f32[2,32,1], index: 8, kind: input, shape index: {}]
  %s9 = inlined_call_operand.vmem [shape: bf16[2,4,32,8], index: 9, kind: input, shape index: {}]
  %s10 = inlined_call_operand.vmem [shape: f32[2,4,1,8], index: 10, kind: input, shape index: {}]
  %s11 = inlined_call_operand.vmem [shape: bf16[2,4,8,32], index: 11, kind: input, shape index: {}]
  %s12 = inlined_call_operand.vmem [shape: f32[2,1,32], index: 12, kind: input, shape index: {}]
  %s13 = inlined_call_operand.vmem [shape: f32[2,1,32], index: 13, kind: input, shape index: {}]
  %s14 = inlined_call_operand.vmem [shape: f32[2,1,32], index: 14, kind: input, shape index: {}]
  %s15 = inlined_call_operand.vmem [shape: bf16[2,32,64], index: 15, kind: input, shape index: {}]
  %s16 = inlined_call_operand.vmem [shape: f32[2,1,64], index: 16, kind: input, shape index: {}]
  %s17 = inlined_call_operand.vmem [shape: bf16[2,64,32], index: 17, kind: input, shape index: {}]
  %s18 = inlined_call_operand.vmem [shape: f32[2,1,32], index: 18, kind: input, shape index: {}]
  %s19 = inlined_call_operand.vmem [shape: f32[2,1,32], index: 19, kind: input, shape index: {}]
  %s20 = inlined_call_operand.vmem [shape: f32[2,1,32], index: 20, kind: input, shape index: {}]
  %s21 = inlined_call_operand.vmem [shape: bf16[32,32], index: 21, kind: input, shape index: {}]
  %s22 = inlined_call_operand.vmem [shape: f32[1,32], index: 22, kind: input, shape index: {}]
  %s23 = inlined_call_operand.vmem [shape: f32[16,32], index: 23, kind: input, shape index: {}]
  %s24 = inlined_call_operand.<no memory space> [shape: f32[1,1], index: 24, kind: input, shape index: {}]
  %s25 = inlined_call_operand.vmem [shape: f32[16,1], index: 25, kind: output, shape index: {}]
  %s26 = sld [smem:[#allocation0]]
  $region110: #{roberta_forward.1} parent=0
    _
  %s28 = ssub.s32 1, %s26
  %s29 = scalar_select 0, %s28, %s26
  %v30 = vstv %s24
  %31 = vst [vmem:[#allocation2] sm:$0x1] %v30
  // Predicated region
  $region2: #{roberta_forward.1} parent=0 // pred_check
    _
  $region3: #{roberta_forward.1} parent=0 // pred_check_branch
    %33 = sbr.rel (0) target = $region5
  $region4: #{roberta_forward.1} parent=0 // pred_region
    _
  $region5: #{roberta_forward.1} parent=0 // pred_fallthru
    _
  // Predicated region
  $region6: #{roberta_forward.1} parent=0 // pred_check
    _
  $region7: #{roberta_forward.1} parent=0 // pred_check_branch
    %35 = sbr.rel (0) target = $region9
  $region8: #{roberta_forward.1} parent=0 // pred_region
    _
  $region9: #{roberta_forward.1} parent=0 // pred_fallthru
    _
  // Predicated region
  $region10: #{roberta_forward.1} parent=0 // pred_check
    _
  $region11: #{roberta_forward.1} parent=0 // pred_check_branch
    %37 = sbr.rel (0) target = $region13
  $region12: #{roberta_forward.1} parent=0 // pred_region
    _
  $region13: #{roberta_forward.1} parent=0 // pred_fallthru
    _
  // Predicated region
  $region14: #{roberta_forward.1} parent=0 // pred_check
    _
  $region15: #{roberta_forward.1} parent=0 // pred_check_branch
    %39 = sbr.rel (0) target = $region17
  $region16: #{roberta_forward.1} parent=0 // pred_region
    _
  $region17: #{roberta_forward.1} parent=0 // pred_fallthru
    _
  // Predicated region
  $region18: #{roberta_forward.1} parent=0 // pred_check
    _
  $region19: #{roberta_forward.1} parent=0 // pred_check_branch
    %41 = sbr.rel (0) target = $region21
  $region20: #{roberta_forward.1} parent=0 // pred_region
    _
  $region21: #{roberta_forward.1} parent=0 // pred_fallthru
    _
  // Predicated region
  $region22: #{roberta_forward.1} parent=0 // pred_check
    _
  $region23: #{roberta_forward.1} parent=0 // pred_check_branch
    %43 = sbr.rel (0) target = $region25
  $region24: #{roberta_forward.1} parent=0 // pred_region
    _
  $region25: #{roberta_forward.1} parent=0 // pred_fallthru
    _
  // Predicated region
  $region26: #{roberta_forward.1} parent=0 // pred_check
    _
  $region27: #{roberta_forward.1} parent=0 // pred_check_branch
    %45 = sbr.rel (0) target = $region29
  $region28: #{roberta_forward.1} parent=0 // pred_region
    _
  $region29: #{roberta_forward.1} parent=0 // pred_fallthru
    _
  // Predicated region
  $region30: #{roberta_forward.1} parent=0 // pred_check
    _
  $region31: #{roberta_forward.1} parent=0 // pred_check_branch
    %47 = sbr.rel (0) target = $region33
  $region32: #{roberta_forward.1} parent=0 // pred_region
    _
  $region33: #{roberta_forward.1} parent=0 // pred_fallthru
    _
  // Predicated region
  $region34: #{roberta_forward.1} parent=0 // pred_check
    _
  $region35: #{roberta_forward.1} parent=0 // pred_check_branch
    %49 = sbr.rel (0) target = $region37
  $region36: #{roberta_forward.1} parent=0 // pred_region
    _
  $region37: #{roberta_forward.1} parent=0 // pred_fallthru
    _
  // Predicated region
  $region38: #{roberta_forward.1} parent=0 // pred_check
    _
  $region39: #{roberta_forward.1} parent=0 // pred_check_branch
    %51 = sbr.rel (0) target = $region41
  $region40: #{roberta_forward.1} parent=0 // pred_region
    _
  $region41: #{roberta_forward.1} parent=0 // pred_fallthru
    _
  // Predicated region
  $region42: #{roberta_forward.1} parent=0 // pred_check
    _
  $region43: #{roberta_forward.1} parent=0 // pred_check_branch
    %53 = sbr.rel (0) target = $region45
  $region44: #{roberta_forward.1} parent=0 // pred_region
    _
  $region45: #{roberta_forward.1} parent=0 // pred_fallthru
    _
  // Predicated region
  $region46: #{roberta_forward.1} parent=0 // pred_check
    _
  $region47: #{roberta_forward.1} parent=0 // pred_check_branch
    %55 = sbr.rel (0) target = $region49
  $region48: #{roberta_forward.1} parent=0 // pred_region
    _
  $region49: #{roberta_forward.1} parent=0 // pred_fallthru
    _
  // Predicated region
  $region50: #{roberta_forward.1} parent=0 // pred_check
    _
  $region51: #{roberta_forward.1} parent=0 // pred_check_branch
    %57 = sbr.rel (0) target = $region53
  $region52: #{roberta_forward.1} parent=0 // pred_region
    _
  $region53: #{roberta_forward.1} parent=0 // pred_fallthru
    _
  // Predicated region
  $region54: #{roberta_forward.1} parent=0 // pred_check
    _
  $region55: #{roberta_forward.1} parent=0 // pred_check_branch
    %59 = sbr.rel (0) target = $region57
  $region56: #{roberta_forward.1} parent=0 // pred_region
    _
  $region57: #{roberta_forward.1} parent=0 // pred_fallthru
    _
  // Predicated region
  $region58: #{roberta_forward.1} parent=0 // pred_check
    _
  $region59: #{roberta_forward.1} parent=0 // pred_check_branch
    %61 = sbr.rel (0) target = $region61
  $region60: #{roberta_forward.1} parent=0 // pred_region
    _
  $region61: #{roberta_forward.1} parent=0 // pred_fallthru
    _
  // Predicated region
  $region62: #{roberta_forward.1} parent=0 // pred_check
    _
  $region63: #{roberta_forward.1} parent=0 // pred_check_branch
    %63 = sbr.rel (0) target = $region65
  $region64: #{roberta_forward.1} parent=0 // pred_region
    _
  $region65: #{roberta_forward.1} parent=0 // pred_fallthru
    _
  // Predicated region
  $region66: #{roberta_forward.1} parent=0 // pred_check
    _
  $region67: #{roberta_forward.1} parent=0 // pred_check_branch
    %65 = sbr.rel (0) target = $region69
  $region68: #{roberta_forward.1} parent=0 // pred_region
    _
  $region69: #{roberta_forward.1} parent=0 // pred_fallthru
    _
  // Predicated region
  $region70: #{roberta_forward.1} parent=0 // pred_check
    _
  $region71: #{roberta_forward.1} parent=0 // pred_check_branch
    %67 = sbr.rel (0) target = $region73
  $region72: #{roberta_forward.1} parent=0 // pred_region
    _
  $region73: #{roberta_forward.1} parent=0 // pred_fallthru
    _
  // Predicated region
  $region74: #{roberta_forward.1} parent=0 // pred_check
    _
  $region75: #{roberta_forward.1} parent=0 // pred_check_branch
    %69 = sbr.rel (0) target = $region77
  $region76: #{roberta_forward.1} parent=0 // pred_region
    _
  $region77: #{roberta_forward.1} parent=0 // pred_fallthru
    _
  // Predicated region
  $region78: #{roberta_forward.1} parent=0 // pred_check
    _
  $region79: #{roberta_forward.1} parent=0 // pred_check_branch
    %71 = sbr.rel (0) target = $region81
  $region80: #{roberta_forward.1} parent=0 // pred_region
    _
  $region81: #{roberta_forward.1} parent=0 // pred_fallthru
    _
  // Predicated region
  $region82: #{roberta_forward.1} parent=0 // pred_check
    _
  $region83: #{roberta_forward.1} parent=0 // pred_check_branch
    %73 = sbr.rel (0) target = $region85
  $region84: #{roberta_forward.1} parent=0 // pred_region
    _
  $region85: #{roberta_forward.1} parent=0 // pred_fallthru
    _
  // Predicated region
  $region86: #{roberta_forward.1} parent=0 // pred_check
    _
  $region87: #{roberta_forward.1} parent=0 // pred_check_branch
    %75 = sbr.rel (0) target = $region89
  $region88: #{roberta_forward.1} parent=0 // pred_region
    _
  $region89: #{roberta_forward.1} parent=0 // pred_fallthru
    _
  // Predicated region
  $region90: #{roberta_forward.1} parent=0 // pred_check
    _
  $region91: #{roberta_forward.1} parent=0 // pred_check_branch
    %77 = sbr.rel (0) target = $region93
  $region92: #{roberta_forward.1} parent=0 // pred_region
    _
  $region93: #{roberta_forward.1} parent=0 // pred_fallthru
    _
  // Predicated region
  $region94: #{roberta_forward.1} parent=0 // pred_check
    _
  $region95: #{roberta_forward.1} parent=0 // pred_check_branch
    %79 = sbr.rel (0) target = $region97
  $region96: #{roberta_forward.1} parent=0 // pred_region
    _
  $region97: #{roberta_forward.1} parent=0 // pred_fallthru
    _
  // Predicated region
  $region98: #{roberta_forward.1} parent=0 // pred_check
    _
  $region99: #{roberta_forward.1} parent=0 // pred_check_branch
    %81 = sbr.rel (0) target = $region101
  $region100: #{roberta_forward.1} parent=0 // pred_region
    _
  $region101: #{roberta_forward.1} parent=0 // pred_fallthru
    _
  %v83 = vld [vmem:[%s1] sm:$0xff]
  %v84 = vld [vmem:[%s1 + $0x8] sm:$0xff]
  %v85 = vld [vmem:[%s2] sm:$0x1]
  %86 = vset.pattern.permute.xlu0 0
  %87 = vperm.xlu0 %86, %v83
  %v88 = vpop.permute.xlu0 %87
  %89 = vset.pattern.permute.xlu0 0
  %90 = vperm.xlu0 %89, %v84
  %v91 = vpop.permute.xlu0 %90
  %v92 = vlaneseq
  %v93 = vshrl.u32 %v92, 7
  %v94 = vsub.s32 0, %v93
  %v95 = vrot.slane %v85, %v94
  %vm96 = vcmp.eq.s32.totalorder %v88, %v95
  %vm97 = vcmp.eq.s32.totalorder %v91, %v95
  %v98 = vsel %vm96, 0.0, -1e+09
  %v99 = vsel %vm97, 0.0, -1e+09
  %v100 = vld [vmem:[%s0] sm:$0xff]
  %v101 = vld [vmem:[%s0 + $0x8] sm:$0xff]
  %v102 = vld [vmem:[%s3] sm:$0x1]
  %v103 = vld [vmem:[%s4] sm:$0x1]
  %vm104 = vcmask 261120
  %v105 = vsel %vm104, %v100, 0.0
  %106 = vadd.xlane.f32.xlu0 %v105
  %v107 = vpop.xlane.xlu0 %106
  %v108 = vsel %vm104, %v101, 0.0
  %109 = vadd.xlane.f32.xlu0 %v108
  %v110 = vpop.xlane.xlu0 %109
  %v111 = vrcp.pop 32.0
  %v112 = vmul.f32 %v107, %v111
  %v113 = vmul.f32 %v110, %v111
  %v114 = vsub.f32 %v100, %v112
  %v115 = vsub.f32 %v101, %v113
  %v116 = vmul.f32 %v114, %v114
  %v117 = vmul.f32 %v115, %v115
  %v118 = vsel %vm104, %v116, 0.0
  %119 = vadd.xlane.f32.xlu0 %v118
  %v120 = vpop.xlane.xlu0 %119
  %v121 = vsel %vm104, %v117, 0.0
  %122 = vadd.xlane.f32.xlu0 %v121
  %v123 = vpop.xlane.xlu0 %122
  %v124 = vmul.f32 %v120, %v111
  %v125 = vmul.f32 %v123, %v111
  %v126 = vadd.f32 %v124, 1e-05
  %v127 = vadd.f32 %v125, 1e-05
  %v128 = vrsqrt.pop %v126
  %v129 = vrsqrt.pop %v127
  %v130 = vmul.f32 %v114, %v128
  %v131 = vmul.f32 %v115, %v129
  %v133 = vlaneseq
  %v134 = vshrl.u32 %v133, 7
  %v135 = vsub.s32 0, %v134
  %v136 = vrot.slane %v102, %v135
  %v138 = vmul.f32 %v130, %v136
  %v139 = vmul.f32 %v131, %v136
  %v141 = vlaneseq
  %v142 = vshrl.u32 %v141, 7
  %v143 = vsub.s32 0, %v142
  %v144 = vrot.slane %v103, %v143
  %v146 = vadd.f32 %v138, %v144
  %v147 = vadd.f32 %v139, %v144
  %v148 = vpack.c.bf16 %v147, %v146
  %v149 = vld [vmem:[%s7] sm:$0xf]
  %v150 = vld [vmem:[%s7 + $0x4] sm:$0xf]
  %v151 = vld [vmem:[%s7 + $0x8] sm:$0xf]
  %v152 = vld [vmem:[%s7 + $0xc] sm:$0xf]
  %v153 = vld [vmem:[%s8] sm:$0xff]
  %v154 = vld [vmem:[%s8 + $0x8] sm:$0xff]
  %v155 = vld [vmem:[%s8 + $0x10] sm:$0xff]
  %v156 = vld [vmem:[%s8 + $0x18] sm:$0xff]
  %158 = vset.pattern.permute.xlu0 0
  %159 = vperm.xlu0 %158, %v153
  %v160 = vpop.permute.xlu0 %159
  %163 = vset.pattern.permute.xlu0 0
  %164 = vperm.xlu0 %163, %v154
  %v165 = vpop.permute.xlu0 %164
  %168 = vset.pattern.permute.xlu0 0
  %169 = vperm.xlu0 %168, %v155
  %v170 = vpop.permute.xlu0 %169
  %173 = vset.pattern.permute.xlu0 0
  %174 = vperm.xlu0 %173, %v156
  %v175 = vpop.permute.xlu0 %174
  %v181 = vunpack.c.l.b16 %v149
  %v182 = vunpack.c.l.b16 %v150
  %v183 = vunpack.c.l.b16 %v151
  %v184 = vunpack.c.l.b16 %v152
  %v185 = vpack.c.b16 %v182, %v181
  %v186 = vpack.c.b16 %v184, %v183
  %v188 = vsel %vm104, %v185, 0
  %v191 = vsel %vm104, %v186, 0
  %v194 = vsel %vm104, %v148, 0
  %196 = vmatprep.subr.bf16.mxu0 0
  %197 = vmatpush1.bf16.xpose.msra.mxu0 %v194
  %198 = vmatprep.subr.bf16.mxu0 0
  %199 = vmatpush1.bf16.xpose.msra.mxu0 0
  %200 = vmatprep.subr.bf16.mxu0 0
  %201 = vmatpush1.bf16.xpose.msra.mxu0 0
  %202 = vmatprep.subr.bf16.mxu0 0
  %203 = vmatpush1.bf16.xpose.msra.mxu0 0
  %204 = vmatprep.subr.bf16.mxu0 0
  %205 = vmatpush1.bf16.xpose.msra.mxu0 0
  %206 = vmatprep.subr.bf16.mxu0 0
  %207 = vmatpush1.bf16.xpose.msra.mxu0 0
  %208 = vmatprep.subr.bf16.mxu0 0
  %209 = vmatpush1.bf16.xpose.msra.mxu0 0
  %210 = vmatprep.subr.bf16.mxu0 0
  %211 = vmatpush1.bf16.xpose.msra.mxu0 0
  %212 = vmatprep.subr.bf16.mxu0 0
  %213 = vmatpush1.bf16.xpose.msra.mxu0 0
  %214 = vmatprep.subr.bf16.mxu0 0
  %215 = vmatpush1.bf16.xpose.msra.mxu0 0
  %216 = vmatprep.subr.bf16.mxu0 0
  %217 = vmatpush1.bf16.xpose.msra.mxu0 0
  %218 = vmatprep.subr.bf16.mxu0 0
  %219 = vmatpush1.bf16.xpose.msra.mxu0 0
  %220 = vmatprep.subr.bf16.mxu0 0
  %221 = vmatpush1.bf16.xpose.msra.mxu0 0
  %222 = vmatprep.subr.bf16.mxu0 0
  %223 = vmatpush1.bf16.xpose.msra.mxu0 0
  %224 = vmatprep.subr.bf16.mxu0 0
  %225 = vmatpush1.bf16.xpose.msra.mxu0 0
  %226 = vmatprep.subr.bf16.mxu0 0
  %227 = vmatpush1.bf16.xpose.msra.mxu0 0
  %228 = vmatprep.mubr.bf16.mxu0 0
  %229 = vmatmul.mubr.bf16.gmra.mrb[0].mxu0 %v188
  %v230 = vpop.f32.mrb[0].mxu0
  %v231 = vadd.f32 %v160, %v230
  %v232 = vpop.f32.mrb[0].mxu0
  %v233 = vpop.f32.mrb[0].mxu0
  %v234 = vadd.f32 %v165, %v233
  %v235 = vpop.f32.mrb[0].mxu0
  %236 = vmatprep.mubr.bf16.mxu0 0
  %237 = vmatmul.mubr.bf16.gmra.mrb[0].mxu0 %v191
  %v238 = vpop.f32.mrb[0].mxu0
  %v239 = vadd.f32 %v170, %v238
  %v240 = vpop.f32.mrb[0].mxu0
  %v241 = vpop.f32.mrb[0].mxu0
  %v242 = vadd.f32 %v175, %v241
  %v243 = vpop.f32.mrb[0].mxu0
  %244 = vdwg.mxu0
  %v245 = vld [vmem:[%s5] sm:$0xf]
  %v246 = vld [vmem:[%s5 + $0x4] sm:$0xf]
  %v247 = vld [vmem:[%s5 + $0x8] sm:$0xf]
  %v248 = vld [vmem:[%s5 + $0xc] sm:$0xf]
  %v249 = vld [vmem:[%s6] sm:$0x1]
  %v251 = vlaneseq
  %v252 = vshrl.u32 %v251, 7
  %v253 = vsub.s32 0, %v252
  %v254 = vrot.slane %v249, %v253
  %v260 = vunpack.c.l.b16 %v245
  %v261 = vunpack.c.l.b16 %v246
  %v262 = vunpack.c.l.b16 %v247
  %v263 = vunpack.c.l.b16 %v248
  %v264 = vpack.c.b16 %v261, %v260
  %v265 = vpack.c.b16 %v263, %v262
  %268 = vmatprep.subr.bf16.mxu0 0
  %269 = vmatpush1.bf16.msra.mxu0 %v264
  %270 = vmatprep.subr.bf16.mxu0 0
  %271 = vmatpush1.bf16.msra.mxu0 %v265
  %272 = vmatprep.subr.bf16.mxu0 0
  %273 = vmatpush1.bf16.msra.mxu0 0
  %274 = vmatprep.subr.bf16.mxu0 0
  %275 = vmatpush1.bf16.msra.mxu0 0
  %276 = vmatprep.subr.bf16.mxu0 0
  %277 = vmatpush1.bf16.msra.mxu0 0
  %278 = vmatprep.subr.bf16.mxu0 0
  %279 = vmatpush1.bf16.msra.mxu0 0
  %280 = vmatprep.subr.bf16.mxu0 0
  %281 = vmatpush1.bf16.msra.mxu0 0
  %282 = vmatprep.subr.bf16.mxu0 0
  %283 = vmatpush1.bf16.msra.mxu0 0
  %284 = vmatprep.subr.bf16.mxu0 0
  %285 = vmatpush1.bf16.msra.mxu0 0
  %286 = vmatprep.subr.bf16.mxu0 0
  %287 = vmatpush1.bf16.msra.mxu0 0
  %288 = vmatprep.subr.bf16.mxu0 0
  %289 = vmatpush1.bf16.msra.mxu0 0
  %290 = vmatprep.subr.bf16.mxu0 0
  %291 = vmatpush1.bf16.msra.mxu0 0
  %292 = vmatprep.subr.bf16.mxu0 0
  %293 = vmatpush1.bf16.msra.mxu0 0
  %294 = vmatprep.subr.bf16.mxu0 0
  %295 = vmatpush1.bf16.msra.mxu0 0
  %296 = vmatprep.subr.bf16.mxu0 0
  %297 = vmatpush1.bf16.msra.mxu0 0
  %298 = vmatprep.subr.bf16.mxu0 0
  %299 = vmatpush1.bf16.msra.mxu0 0
  %300 = vmatprep.mubr.bf16.mxu0 0
  %301 = vmatmul.mubr.bf16.gmra.mrb[0].mxu0 %v194
  %v302 = vpop.f32.mrb[0].mxu0
  %v303 = vadd.f32 %v254, %v302
  %v304 = vpop.f32.mrb[0].mxu0
  %v305 = vpop.f32.mrb[0].mxu0
  %v306 = vadd.f32 %v254, %v305
  %v307 = vpop.f32.mrb[0].mxu0
  %308 = vdwg.mxu0
  %v309 = vpack.c.bf16 %v306, %v303
  %v310 = vld [vmem:[%s9] sm:$0xf]
  %v311 = vld [vmem:[%s9 + $0x4] sm:$0xf]
  %v312 = vld [vmem:[%s9 + $0x8] sm:$0xf]
  %v313 = vld [vmem:[%s9 + $0xc] sm:$0xf]
  %v314 = vld [vmem:[%s10] sm:$0x1]
  %v316 = vlaneseq
  %v317 = vshrl.u32 %v316, 7
  %v318 = vsub.s32 0, %v317
  %v319 = vrot.slane %v314, %v318
  %v325 = vunpack.c.l.b16 %v310
  %v326 = vunpack.c.l.b16 %v311
  %v327 = vunpack.c.l.b16 %v312
  %v328 = vunpack.c.l.b16 %v313
  %v329 = vpack.c.b16 %v326, %v325
  %v330 = vpack.c.b16 %v328, %v327
  %333 = vmatprep.subr.bf16.mxu0 0
  %334 = vmatpush1.bf16.msra.mxu0 %v329
  %335 = vmatprep.subr.bf16.mxu0 0
  %336 = vmatpush1.bf16.msra.mxu0 %v330
  %337 = vmatprep.subr.bf16.mxu0 0
  %338 = vmatpush1.bf16.msra.mxu0 0
  %339 = vmatprep.subr.bf16.mxu0 0
  %340 = vmatpush1.bf16.msra.mxu0 0
  %341 = vmatprep.subr.bf16.mxu0 0
  %342 = vmatpush1.bf16.msra.mxu0 0
  %343 = vmatprep.subr.bf16.mxu0 0
  %344 = vmatpush1.bf16.msra.mxu0 0
  %345 = vmatprep.subr.bf16.mxu0 0
  %346 = vmatpush1.bf16.msra.mxu0 0
  %347 = vmatprep.subr.bf16.mxu0 0
  %348 = vmatpush1.bf16.msra.mxu0 0
  %349 = vmatprep.subr.bf16.mxu0 0
  %350 = vmatpush1.bf16.msra.mxu0 0
  %351 = vmatprep.subr.bf16.mxu0 0
  %352 = vmatpush1.bf16.msra.mxu0 0
  %353 = vmatprep.subr.bf16.mxu0 0
  %354 = vmatpush1.bf16.msra.mxu0 0
  %355 = vmatprep.subr.bf16.mxu0 0
  %356 = vmatpush1.bf16.msra.mxu0 0
  %357 = vmatprep.subr.bf16.mxu0 0
  %358 = vmatpush1.bf16.msra.mxu0 0
  %359 = vmatprep.subr.bf16.mxu0 0
  %360 = vmatpush1.bf16.msra.mxu0 0
  %361 = vmatprep.subr.bf16.mxu0 0
  %362 = vmatpush1.bf16.msra.mxu0 0
  %363 = vmatprep.subr.bf16.mxu0 0
  %364 = vmatpush1.bf16.msra.mxu0 0
  %365 = vmatprep.mubr.bf16.mxu0 0
  %366 = vmatmul.mubr.bf16.gmra.mrb[0].mxu0 %v194
  %v367 = vpop.f32.mrb[0].mxu0
  %v368 = vadd.f32 %v319, %v367
  %v369 = vpop.f32.mrb[0].mxu0
  %v370 = vpop.f32.mrb[0].mxu0
  %v371 = vadd.f32 %v319, %v370
  %v372 = vpop.f32.mrb[0].mxu0
  %373 = vdwg.mxu0
  %v374 = vpack.c.bf16 %v371, %v368
  %v375 = vpack.c.bf16 %v231, %v231
  %vm376 = vcmask 64512
  %v378 = vsel %vm376, %v309, 0
  %vm380 = vcmask 1043456
  %v382 = vsel %vm380, %v375, 0
  %384 = vmatprep.subr.bf16.mxu0 0
  %385 = vmatpush1.bf16.msra.mxu0 %v382
  %386 = vmatprep.subr.bf16.mxu0 0
  %387 = vmatpush1.bf16.msra.mxu0 0
  %388 = vmatprep.subr.bf16.mxu0 0
  %389 = vmatpush1.bf16.msra.mxu0 0
  %390 = vmatprep.subr.bf16.mxu0 0
  %391 = vmatpush1.bf16.msra.mxu0 0
  %392 = vmatprep.subr.bf16.mxu0 0
  %393 = vmatpush1.bf16.msra.mxu0 0
  %394 = vmatprep.subr.bf16.mxu0 0
  %395 = vmatpush1.bf16.msra.mxu0 0
  %396 = vmatprep.subr.bf16.mxu0 0
  %397 = vmatpush1.bf16.msra.mxu0 0
  %398 = vmatprep.subr.bf16.mxu0 0
  %399 = vmatpush1.bf16.msra.mxu0 0
  %400 = vmatprep.subr.bf16.mxu0 0
  %401 = vmatpush1.bf16.msra.mxu0 0
  %402 = vmatprep.subr.bf16.mxu0 0
  %403 = vmatpush1.bf16.msra.mxu0 0
  %404 = vmatprep.subr.bf16.mxu0 0
  %405 = vmatpush1.bf16.msra.mxu0 0
  %406 = vmatprep.subr.bf16.mxu0 0
  %407 = vmatpush1.bf16.msra.mxu0 0
  %408 = vmatprep.subr.bf16.mxu0 0
  %409 = vmatpush1.bf16.msra.mxu0 0
  %410 = vmatprep.subr.bf16.mxu0 0
  %411 = vmatpush1.bf16.msra.mxu0 0
  %412 = vmatprep.subr.bf16.mxu0 0
  %413 = vmatpush1.bf16.msra.mxu0 0
  %414 = vmatprep.subr.bf16.mxu0 0
  %415 = vmatpush1.bf16.msra.mxu0 0
  %416 = vmatprep.mubr.bf16.mxu0 0
  %417 = vmatmul.mubr.bf16.gmra.mrb[0].mxu0 %v378
  %v418 = vpop.f32.mrb[0].mxu0
  %v419 = vadd.f32 0.0, %v418
  %v420 = vpop.f32.mrb[0].mxu0
  %v421 = vpop.f32.mrb[0].mxu0
  %v422 = vadd.f32 0.0, %v421
  %v423 = vpop.f32.mrb[0].mxu0
  %424 = vdwg.mxu0
  %v425 = vmul.f32 %v419, 0.35355338
  %v426 = vmul.f32 %v422, 0.35355338
  %v427 = vadd.f32 %v425, %v98
  %v428 = vadd.f32 %v426, %v99
  %vm429 = vcmask 130048
  %v430 = vsel %vm429, %v427, -inf
  %431 = vmax.xlane.f32.xlu0 %v430
  %v432 = vpop.xlane.xlu0 %431
  %v433 = vsel %vm429, %v428, -inf
  %434 = vmax.xlane.f32.xlu0 %v433
  %v435 = vpop.xlane.xlu0 %434
  %v436 = vsub.f32 %v427, %v432
  %v437 = vsub.f32 %v428, %v435
  %v438 = vmul.f32 %v436, 1.442695
  %v439 = vpow.pop %v438
  %v440 = vmul.f32 %v437, 1.442695
  %v441 = vpow.pop %v440
  %v442 = vsel %vm429, %v439, 0.0
  %443 = vadd.xlane.f32.xlu0 %v442
  %v444 = vpop.xlane.xlu0 %443
  %v445 = vsel %vm429, %v441, 0.0
  %446 = vadd.xlane.f32.xlu0 %v445
  %v447 = vpop.xlane.xlu0 %446
  %v448 = vrcp.pop %v444
  %v449 = vrcp.pop %v447
  %v450 = vmul.f32 %v439, %v448
  %v451 = vmul.f32 %v441, %v449
  %v452 = vpack.c.bf16 %v451, %v450
  %v454 = vsel %vm429, %v452, 0
  %456 = vmatprep.subr.bf16.mxu0 0
  %457 = vmatpush1.bf16.msra.mxu0 %v374
  %458 = vmatprep.subr.bf16.mxu0 0
  %459 = vmatpush1.bf16.msra.mxu0 0
  %460 = vmatprep.subr.bf16.mxu0 0
  %461 = vmatpush1.bf16.msra.mxu0 0
  %462 = vmatprep.subr.bf16.mxu0 0
  %463 = vmatpush1.bf16.msra.mxu0 0
  %464 = vmatprep.subr.bf16.mxu0 0
  %465 = vmatpush1.bf16.msra.mxu0 0
  %466 = vmatprep.subr.bf16.mxu0 0
  %467 = vmatpush1.bf16.msra.mxu0 0
  %468 = vmatprep.subr.bf16.mxu0 0
  %469 = vmatpush1.bf16.msra.mxu0 0
  %470 = vmatprep.subr.bf16.mxu0 0
  %471 = vmatpush1.bf16.msra.mxu0 0
  %472 = vmatprep.subr.bf16.mxu0 0
  %473 = vmatpush1.bf16.msra.mxu0 0
  %474 = vmatprep.subr.bf16.mxu0 0
  %475 = vmatpush1.bf16.msra.mxu0 0
  %476 = vmatprep.subr.bf16.mxu0 0
  %477 = vmatpush1.bf16.msra.mxu0 0
  %478 = vmatprep.subr.bf16.mxu0 0
  %479 = vmatpush1.bf16.msra.mxu0 0
  %480 = vmatprep.subr.bf16.mxu0 0
  %481 = vmatpush1.bf16.msra.mxu0 0
  %482 = vmatprep.subr.bf16.mxu0 0
  %483 = vmatpush1.bf16.msra.mxu0 0
  %484 = vmatprep.subr.bf16.mxu0 0
  %485 = vmatpush1.bf16.msra.mxu0 0
  %486 = vmatprep.subr.bf16.mxu0 0
  %487 = vmatpush1.bf16.msra.mxu0 0
  %488 = vmatprep.mubr.bf16.mxu0 0
  %489 = vmatmul.mubr.bf16.gmra.mrb[0].mxu0 %v454
  %v490 = vpop.f32.mrb[0].mxu0
  %v491 = vadd.f32 0.0, %v490
  %v492 = vpop.f32.mrb[0].mxu0
  %v493 = vpop.f32.mrb[0].mxu0
  %v494 = vadd.f32 0.0, %v493
  %v495 = vpop.f32.mrb[0].mxu0
  %496 = vdwg.mxu0
  %v497 = vpack.c.bf16 %v494, %v491
  %v498 = vld [vmem:[%s11] sm:$0xf]
  %s499 = scalar_lea.vmem %s5, 16
  %v500 = vld [vmem:[%s499] sm:$0xf]
  %v501 = vld [vmem:[%s499 + $0x4] sm:$0xf]
  %v502 = vld [vmem:[%s499 + $0x8] sm:$0xf]
  %v503 = vld [vmem:[%s499 + $0xc] sm:$0xf]
  %s504 = scalar_lea.vmem %s6, 1
  %v505 = vld [vmem:[%s504] sm:$0x1]
  %v507 = vlaneseq
  %v508 = vshrl.u32 %v507, 7
  %v509 = vsub.s32 0, %v508
  %v510 = vrot.slane %v505, %v509
  %v516 = vunpack.c.l.b16 %v500
  %v517 = vunpack.c.l.b16 %v501
  %v518 = vunpack.c.l.b16 %v502
  %v519 = vunpack.c.l.b16 %v503
  %v520 = vpack.c.b16 %v517, %v516
  %v521 = vpack.c.b16 %v519, %v518
  %524 = vmatprep.subr.bf16.mxu0 0
  %525 = vmatpush1.bf16.msra.mxu0 %v520
  %526 = vmatprep.subr.bf16.mxu0 0
  %527 = vmatpush1.bf16.msra.mxu0 %v521
  %528 = vmatprep.subr.bf16.mxu0 0
  %529 = vmatpush1.bf16.msra.mxu0 0
  %530 = vmatprep.subr.bf16.mxu0 0
  %531 = vmatpush1.bf16.msra.mxu0 0
  %532 = vmatprep.subr.bf16.mxu0 0
  %533 = vmatpush1.bf16.msra.mxu0 0
  %534 = vmatprep.subr.bf16.mxu0 0
  %535 = vmatpush1.bf16.msra.mxu0 0
  %536 = vmatprep.subr.bf16.mxu0 0
  %537 = vmatpush1.bf16.msra.mxu0 0
  %538 = vmatprep.subr.bf16.mxu0 0
  %539 = vmatpush1.bf16.msra.mxu0 0
  %540 = vmatprep.subr.bf16.mxu0 0
  %541 = vmatpush1.bf16.msra.mxu0 0
  %542 = vmatprep.subr.bf16.mxu0 0
  %543 = vmatpush1.bf16.msra.mxu0 0
  %544 = vmatprep.subr.bf16.mxu0 0
  %545 = vmatpush1.bf16.msra.mxu0 0
  %546 = vmatprep.subr.bf16.mxu0 0
  %547 = vmatpush1.bf16.msra.mxu0 0
  %548 = vmatprep.subr.bf16.mxu0 0
  %549 = vmatpush1.bf16.msra.mxu0 0
  %550 = vmatprep.subr.bf16.mxu0 0
  %551 = vmatpush1.bf16.msra.mxu0 0
  %552 = vmatprep.subr.bf16.mxu0 0
  %553 = vmatpush1.bf16.msra.mxu0 0
  %554 = vmatprep.subr.bf16.mxu0 0
  %555 = vmatpush1.bf16.msra.mxu0 0
  %556 = vmatprep.mubr.bf16.mxu0 0
  %557 = vmatmul.mubr.bf16.gmra.mrb[0].mxu0 %v194
  %v558 = vpop.f32.mrb[0].mxu0
  %v559 = vadd.f32 %v510, %v558
  %v560 = vpop.f32.mrb[0].mxu0
  %v561 = vpop.f32.mrb[0].mxu0
  %v562 = vadd.f32 %v510, %v561
  %v563 = vpop.f32.mrb[0].mxu0
  %564 = vdwg.mxu0
  %v565 = vpack.c.bf16 %v562, %v559
  %s566 = scalar_lea.vmem %s9, 16
  %v567 = vld [vmem:[%s566] sm:$0xf]
  %v568 = vld [vmem:[%s566 + $0x4] sm:$0xf]
  %v569 = vld [vmem:[%s566 + $0x8] sm:$0xf]
  %v570 = vld [vmem:[%s566 + $0xc] sm:$0xf]
  %s571 = scalar_lea.vmem %s10, 1
  %v572 = vld [vmem:[%s571] sm:$0x1]
  %v574 = vlaneseq
  %v575 = vshrl.u32 %v574, 7
  %v576 = vsub.s32 0, %v575
  %v577 = vrot.slane %v572, %v576
  %v583 = vunpack.c.l.b16 %v567
  %v584 = vunpack.c.l.b16 %v568
  %v585 = vunpack.c.l.b16 %v569
  %v586 = vunpack.c.l.b16 %v570
  %v587 = vpack.c.b16 %v584, %v583
  %v588 = vpack.c.b16 %v586, %v585
  %591 = vmatprep.subr.bf16.mxu0 0
  %592 = vmatpush1.bf16.msra.mxu0 %v587
  %593 = vmatprep.subr.bf16.mxu0 0
  %594 = vmatpush1.bf16.msra.mxu0 %v588
  %595 = vmatprep.subr.bf16.mxu0 0
  %596 = vmatpush1.bf16.msra.mxu0 0
  %597 = vmatprep.subr.bf16.mxu0 0
  %598 = vmatpush1.bf16.msra.mxu0 0
  %599 = vmatprep.subr.bf16.mxu0 0
  %600 = vmatpush1.bf16.msra.mxu0 0
  %601 = vmatprep.subr.bf16.mxu0 0
  %602 = vmatpush1.bf16.msra.mxu0 0
  %603 = vmatprep.subr.bf16.mxu0 0
  %604 = vmatpush1.bf16.msra.mxu0 0
  %605 = vmatprep.subr.bf16.mxu0 0
  %606 = vmatpush1.bf16.msra.mxu0 0
  %607 = vmatprep.subr.bf16.mxu0 0
  %608 = vmatpush1.bf16.msra.mxu0 0
  %609 = vmatprep.subr.bf16.mxu0 0
  %610 = vmatpush1.bf16.msra.mxu0 0
  %611 = vmatprep.subr.bf16.mxu0 0
  %612 = vmatpush1.bf16.msra.mxu0 0
  %613 = vmatprep.subr.bf16.mxu0 0
  %614 = vmatpush1.bf16.msra.mxu0 0
  %615 = vmatprep.subr.bf16.mxu0 0
  %616 = vmatpush1.bf16.msra.mxu0 0
  %617 = vmatprep.subr.bf16.mxu0 0
  %618 = vmatpush1.bf16.msra.mxu0 0
  %619 = vmatprep.subr.bf16.mxu0 0
  %620 = vmatpush1.bf16.msra.mxu0 0
  %621 = vmatprep.subr.bf16.mxu0 0
  %622 = vmatpush1.bf16.msra.mxu0 0
  %623 = vmatprep.mubr.bf16.mxu0 0
  %624 = vmatmul.mubr.bf16.gmra.mrb[0].mxu0 %v194
  %v625 = vpop.f32.mrb[0].mxu0
  %v626 = vadd.f32 %v577, %v625
  %v627 = vpop.f32.mrb[0].mxu0
  %v628 = vpop.f32.mrb[0].mxu0
  %v629 = vadd.f32 %v577, %v628
  %v630 = vpop.f32.mrb[0].mxu0
  %631 = vdwg.mxu0
  %v632 = vpack.c.bf16 %v629, %v626
  %v633 = vpack.c.bf16 %v234, %v234
  %v635 = vsel %vm376, %v565, 0
  %v638 = vsel %vm380, %v633, 0
  %640 = vmatprep.subr.bf16.mxu0 0
  %641 = vmatpush1.bf16.msra.mxu0 %v638
  %642 = vmatprep.subr.bf16.mxu0 0
  %643 = vmatpush1.bf16.msra.mxu0 0
  %644 = vmatprep.subr.bf16.mxu0 0
  %645 = vmatpush1.bf16.msra.mxu0 0
  %646 = vmatprep.subr.bf16.mxu0 0
  %647 = vmatpush1.bf16.msra.mxu0 0
  %648 = vmatprep.subr.bf16.mxu0 0
  %649 = vmatpush1.bf16.msra.mxu0 0
  %650 = vmatprep.subr.bf16.mxu0 0
  %651 = vmatpush1.bf16.msra.mxu0 0
  %652 = vmatprep.subr.bf16.mxu0 0
  %653 = vmatpush1.bf16.msra.mxu0 0
  %654 = vmatprep.subr.bf16.mxu0 0
  %655 = vmatpush1.bf16.msra.mxu0 0
  %656 = vmatprep.subr.bf16.mxu0 0
  %657 = vmatpush1.bf16.msra.mxu0 0
  %658 = vmatprep.subr.bf16.mxu0 0
  %659 = vmatpush1.bf16.msra.mxu0 0
  %660 = vmatprep.subr.bf16.mxu0 0
  %661 = vmatpush1.bf16.msra.mxu0 0
  %662 = vmatprep.subr.bf16.mxu0 0
  %663 = vmatpush1.bf16.msra.mxu0 0
  %664 = vmatprep.subr.bf16.mxu0 0
  %665 = vmatpush1.bf16.msra.mxu0 0
  %666 = vmatprep.subr.bf16.mxu0 0
  %667 = vmatpush1.bf16.msra.mxu0 0
  %668 = vmatprep.subr.bf16.mxu0 0
  %669 = vmatpush1.bf16.msra.mxu0 0
  %670 = vmatprep.subr.bf16.mxu0 0
  %671 = vmatpush1.bf16.msra.mxu0 0
  %672 = vmatprep.mubr.bf16.mxu0 0
  %673 = vmatmul.mubr.bf16.gmra.mrb[0].mxu0 %v635
  %v674 = vpop.f32.mrb[0].mxu0
  %v675 = vadd.f32 0.0, %v674
  %v676 = vpop.f32.mrb[0].mxu0
  %v677 = vpop.f32.mrb[0].mxu0
  %v678 = vadd.f32 0.0, %v677
  %v679 = vpop.f32.mrb[0].mxu0
  %680 = vdwg.mxu0
  %v681 = vmul.f32 %v675, 0.35355338
  %v682 = vmul.f32 %v678, 0.35355338
  %v683 = vadd.f32 %v681, %v98
  %v684 = vadd.f32 %v682, %v99
  %v685 = vsel %vm429, %v683, -inf
  %686 = vmax.xlane.f32.xlu0 %v685
  %v687 = vpop.xlane.xlu0 %686
  %v688 = vsel %vm429, %v684, -inf
  %689 = vmax.xlane.f32.xlu0 %v688
  %v690 = vpop.xlane.xlu0 %689
  %v691 = vsub.f32 %v683, %v687
  %v692 = vsub.f32 %v684, %v690
  %v693 = vmul.f32 %v691, 1.442695
  %v694 = vpow.pop %v693
  %v695 = vmul.f32 %v692, 1.442695
  %v696 = vpow.pop %v695
  %v697 = vsel %vm429, %v694, 0.0
  %698 = vadd.xlane.f32.xlu0 %v697
  %v699 = vpop.xlane.xlu0 %698
  %v700 = vsel %vm429, %v696, 0.0
  %701 = vadd.xlane.f32.xlu0 %v700
  %v702 = vpop.xlane.xlu0 %701
  %v703 = vrcp.pop %v699
  %v704 = vrcp.pop %v702
  %v705 = vmul.f32 %v694, %v703
  %v706 = vmul.f32 %v696, %v704
  %v707 = vpack.c.bf16 %v706, %v705
  %v709 = vsel %vm429, %v707, 0
  %711 = vmatprep.subr.bf16.mxu0 0
  %712 = vmatpush1.bf16.msra.mxu0 %v632
  %713 = vmatprep.subr.bf16.mxu0 0
  %714 = vmatpush1.bf16.msra.mxu0 0
  %715 = vmatprep.subr.bf16.mxu0 0
  %716 = vmatpush1.bf16.msra.mxu0 0
  %717 = vmatprep.subr.bf16.mxu0 0
  %718 = vmatpush1.bf16.msra.mxu0 0
  %719 = vmatprep.subr.bf16.mxu0 0
  %720 = vmatpush1.bf16.msra.mxu0 0
  %721 = vmatprep.subr.bf16.mxu0 0
  %722 = vmatpush1.bf16.msra.mxu0 0
  %723 = vmatprep.subr.bf16.mxu0 0
  %724 = vmatpush1.bf16.msra.mxu0 0
  %725 = vmatprep.subr.bf16.mxu0 0
  %726 = vmatpush1.bf16.msra.mxu0 0
  %727 = vmatprep.subr.bf16.mxu0 0
  %728 = vmatpush1.bf16.msra.mxu0 0
  %729 = vmatprep.subr.bf16.mxu0 0
  %730 = vmatpush1.bf16.msra.mxu0 0
  %731 = vmatprep.subr.bf16.mxu0 0
  %732 = vmatpush1.bf16.msra.mxu0 0
  %733 = vmatprep.subr.bf16.mxu0 0
  %734 = vmatpush1.bf16.msra.mxu0 0
  %735 = vmatprep.subr.bf16.mxu0 0
  %736 = vmatpush1.bf16.msra.mxu0 0
  %737 = vmatprep.subr.bf16.mxu0 0
  %738 = vmatpush1.bf16.msra.mxu0 0
  %739 = vmatprep.subr.bf16.mxu0 0
  %740 = vmatpush1.bf16.msra.mxu0 0
  %741 = vmatprep.subr.bf16.mxu0 0
  %742 = vmatpush1.bf16.msra.mxu0 0
  %743 = vmatprep.mubr.bf16.mxu0 0
  %744 = vmatmul.mubr.bf16.gmra.mrb[0].mxu0 %v709
  %v745 = vpop.f32.mrb[0].mxu0
  %v746 = vadd.f32 0.0, %v745
  %v747 = vpop.f32.mrb[0].mxu0
  %v748 = vpop.f32.mrb[0].mxu0
  %v749 = vadd.f32 0.0, %v748
  %v750 = vpop.f32.mrb[0].mxu0
  %751 = vdwg.mxu0
  %v752 = vpack.c.bf16 %v749, %v746
  %s753 = scalar_lea.vmem %s11, 4
  %v754 = vld [vmem:[%s753] sm:$0xf]
  %v756 = vsel %vm376, %v752, 0
  %v759 = vsel %vm380, %v754, 0
  %761 = vmatprep.subr.bf16.mxu0 0
  %762 = vmatpush1.bf16.msra.mxu0 %v759
  %763 = vmatprep.subr.bf16.mxu0 0
  %764 = vmatpush1.bf16.msra.mxu0 0
  %765 = vmatprep.subr.bf16.mxu0 0
  %766 = vmatpush1.bf16.msra.mxu0 0
  %767 = vmatprep.subr.bf16.mxu0 0
  %768 = vmatpush1.bf16.msra.mxu0 0
  %769 = vmatprep.subr.bf16.mxu0 0
  %770 = vmatpush1.bf16.msra.mxu0 0
  %771 = vmatprep.subr.bf16.mxu0 0
  %772 = vmatpush1.bf16.msra.mxu0 0
  %773 = vmatprep.subr.bf16.mxu0 0
  %774 = vmatpush1.bf16.msra.mxu0 0
  %775 = vmatprep.subr.bf16.mxu0 0
  %776 = vmatpush1.bf16.msra.mxu0 0
  %777 = vmatprep.subr.bf16.mxu0 0
  %778 = vmatpush1.bf16.msra.mxu0 0
  %779 = vmatprep.subr.bf16.mxu0 0
  %780 = vmatpush1.bf16.msra.mxu0 0
  %781 = vmatprep.subr.bf16.mxu0 0
  %782 = vmatpush1.bf16.msra.mxu0 0
  %783 = vmatprep.subr.bf16.mxu0 0
  %784 = vmatpush1.bf16.msra.mxu0 0
  %785 = vmatprep.subr.bf16.mxu0 0
  %786 = vmatpush1.bf16.msra.mxu0 0
  %787 = vmatprep.subr.bf16.mxu0 0
  %788 = vmatpush1.bf16.msra.mxu0 0
  %789 = vmatprep.subr.bf16.mxu0 0
  %790 = vmatpush1.bf16.msra.mxu0 0
  %791 = vmatprep.subr.bf16.mxu0 0
  %792 = vmatpush1.bf16.msra.mxu0 0
  %793 = vmatprep.mubr.bf16.mxu0 0
  %794 = vmatmul.mubr.bf16.gmra.mrb[0].mxu0 %v756
  %v795 = vpop.f32.mrb[0].mxu0
  %v796 = vadd.f32 0.0, %v795
  %v797 = vpop.f32.mrb[0].mxu0
  %v798 = vpop.f32.mrb[0].mxu0
  %v799 = vadd.f32 0.0, %v798
  %v800 = vpop.f32.mrb[0].mxu0
  %801 = vdwg.mxu0
  %v803 = vsel %vm376, %v497, 0
  %v806 = vsel %vm380, %v498, 0
  %808 = vmatprep.subr.bf16.mxu0 0
  %809 = vmatpush1.bf16.msra.mxu0 %v806
  %810 = vmatprep.subr.bf16.mxu0 0
  %811 = vmatpush1.bf16.msra.mxu0 0
  %812 = vmatprep.subr.bf16.mxu0 0
  %813 = vmatpush1.bf16.msra.mxu0 0
  %814 = vmatprep.subr.bf16.mxu0 0
  %815 = vmatpush1.bf16.msra.mxu0 0
  %816 = vmatprep.subr.bf16.mxu0 0
  %817 = vmatpush1.bf16.msra.mxu0 0
  %818 = vmatprep.subr.bf16.mxu0 0
  %819 = vmatpush1.bf16.msra.mxu0 0
  %820 = vmatprep.subr.bf16.mxu0 0
  %821 = vmatpush1.bf16.msra.mxu0 0
  %822 = vmatprep.subr.bf16.mxu0 0
  %823 = vmatpush1.bf16.msra.mxu0 0
  %824 = vmatprep.subr.bf16.mxu0 0
  %825 = vmatpush1.bf16.msra.mxu0 0
  %826 = vmatprep.subr.bf16.mxu0 0
  %827 = vmatpush1.bf16.msra.mxu0 0
  %828 = vmatprep.subr.bf16.mxu0 0
  %829 = vmatpush1.bf16.msra.mxu0 0
  %830 = vmatprep.subr.bf16.mxu0 0
  %831 = vmatpush1.bf16.msra.mxu0 0
  %832 = vmatprep.subr.bf16.mxu0 0
  %833 = vmatpush1.bf16.msra.mxu0 0
  %834 = vmatprep.subr.bf16.mxu0 0
  %835 = vmatpush1.bf16.msra.mxu0 0
  %836 = vmatprep.subr.bf16.mxu0 0
  %837 = vmatpush1.bf16.msra.mxu0 0
  %838 = vmatprep.subr.bf16.mxu0 0
  %839 = vmatpush1.bf16.msra.mxu0 0
  %840 = vmatprep.mubr.bf16.mxu0 0
  %841 = vmatmul.mubr.bf16.gmra.mrb[0].mxu0 %v803
  %v842 = vpop.f32.mrb[0].mxu0
  %v843 = vadd.f32 %v796, %v842
  %v844 = vpop.f32.mrb[0].mxu0
  %v845 = vpop.f32.mrb[0].mxu0
  %v846 = vadd.f32 %v799, %v845
  %v847 = vpop.f32.mrb[0].mxu0
  %848 = vdwg.mxu0
  %s849 = scalar_lea.vmem %s5, 32
  %v850 = vld [vmem:[%s849] sm:$0xf]
  %v851 = vld [vmem:[%s849 + $0x4] sm:$0xf]
  %v852 = vld [vmem:[%s849 + $0x8] sm:$0xf]
  %v853 = vld [vmem:[%s849 + $0xc] sm:$0xf]
  %s854 = scalar_lea.vmem %s6, 2
  %v855 = vld [vmem:[%s854] sm:$0x1]
  %v857 = vlaneseq
  %v858 = vshrl.u32 %v857, 7
  %v859 = vsub.s32 0, %v858
  %v860 = vrot.slane %v855, %v859
  %v866 = vunpack.c.l.b16 %v850
  %v867 = vunpack.c.l.b16 %v851
  %v868 = vunpack.c.l.b16 %v852
  %v869 = vunpack.c.l.b16 %v853
  %v870 = vpack.c.b16 %v867, %v866
  %v871 = vpack.c.b16 %v869, %v868
  %874 = vmatprep.subr.bf16.mxu0 0
  %875 = vmatpush1.bf16.msra.mxu0 %v870
  %876 = vmatprep.subr.bf16.mxu0 0
  %877 = vmatpush1.bf16.msra.mxu0 %v871
  %878 = vmatprep.subr.bf16.mxu0 0
  %879 = vmatpush1.bf16.msra.mxu0 0
  %880 = vmatprep.subr.bf16.mxu0 0
  %881 = vmatpush1.bf16.msra.mxu0 0
  %882 = vmatprep.subr.bf16.mxu0 0
  %883 = vmatpush1.bf16.msra.mxu0 0
  %884 = vmatprep.subr.bf16.mxu0 0
  %885 = vmatpush1.bf16.msra.mxu0 0
  %886 = vmatprep.subr.bf16.mxu0 0
  %887 = vmatpush1.bf16.msra.mxu0 0
  %888 = vmatprep.subr.bf16.mxu0 0
  %889 = vmatpush1.bf16.msra.mxu0 0
  %890 = vmatprep.subr.bf16.mxu0 0
  %891 = vmatpush1.bf16.msra.mxu0 0
  %892 = vmatprep.subr.bf16.mxu0 0
  %893 = vmatpush1.bf16.msra.mxu0 0
  %894 = vmatprep.subr.bf16.mxu0 0
  %895 = vmatpush1.bf16.msra.mxu0 0
  %896 = vmatprep.subr.bf16.mxu0 0
  %897 = vmatpush1.bf16.msra.mxu0 0
  %898 = vmatprep.subr.bf16.mxu0 0
  %899 = vmatpush1.bf16.msra.mxu0 0
  %900 = vmatprep.subr.bf16.mxu0 0
  %901 = vmatpush1.bf16.msra.mxu0 0
  %902 = vmatprep.subr.bf16.mxu0 0
  %903 = vmatpush1.bf16.msra.mxu0 0
  %904 = vmatprep.subr.bf16.mxu0 0
  %905 = vmatpush1.bf16.msra.mxu0 0
  %906 = vmatprep.mubr.bf16.mxu0 0
  %907 = vmatmul.mubr.bf16.gmra.mrb[0].mxu0 %v194
  %v908 = vpop.f32.mrb[0].mxu0
  %v909 = vadd.f32 %v860, %v908
  %v910 = vpop.f32.mrb[0].mxu0
  %v911 = vpop.f32.mrb[0].mxu0
  %v912 = vadd.f32 %v860, %v911
  %v913 = vpop.f32.mrb[0].mxu0
  %914 = vdwg.mxu0
  %v915 = vpack.c.bf16 %v912, %v909
  %s916 = scalar_lea.vmem %s9, 32
  %v917 = vld [vmem:[%s916] sm:$0xf]
  %v918 = vld [vmem:[%s916 + $0x4] sm:$0xf]
  %v919 = vld [vmem:[%s916 + $0x8] sm:$0xf]
  %v920 = vld [vmem:[%s916 + $0xc] sm:$0xf]
  %s921 = scalar_lea.vmem %s10, 2
  %v922 = vld [vmem:[%s921] sm:$0x1]
  %v924 = vlaneseq
  %v925 = vshrl.u32 %v924, 7
  %v926 = vsub.s32 0, %v925
  %v927 = vrot.slane %v922, %v926
  %v933 = vunpack.c.l.b16 %v917
  %v934 = vunpack.c.l.b16 %v918
  %v935 = vunpack.c.l.b16 %v919
  %v936 = vunpack.c.l.b16 %v920
  %v937 = vpack.c.b16 %v934, %v933
  %v938 = vpack.c.b16 %v936, %v935
  %941 = vmatprep.subr.bf16.mxu0 0
  %942 = vmatpush1.bf16.msra.mxu0 %v937
  %943 = vmatprep.subr.bf16.mxu0 0
  %944 = vmatpush1.bf16.msra.mxu0 %v938
  %945 = vmatprep.subr.bf16.mxu0 0
  %946 = vmatpush1.bf16.msra.mxu0 0
  %947 = vmatprep.subr.bf16.mxu0 0
  %948 = vmatpush1.bf16.msra.mxu0 0
  %949 = vmatprep.subr.bf16.mxu0 0
  %950 = vmatpush1.bf16.msra.mxu0 0
  %951 = vmatprep.subr.bf16.mxu0 0
  %952 = vmatpush1.bf16.msra.mxu0 0
  %953 = vmatprep.subr.bf16.mxu0 0
  %954 = vmatpush1.bf16.msra.mxu0 0
  %955 = vmatprep.subr.bf16.mxu0 0
  %956 = vmatpush1.bf16.msra.mxu0 0
  %957 = vmatprep.subr.bf16.mxu0 0
  %958 = vmatpush1.bf16.msra.mxu0 0
  %959 = vmatprep.subr.bf16.mxu0 0
  %960 = vmatpush1.bf16.msra.mxu0 0
  %961 = vmatprep.subr.bf16.mxu0 0
  %962 = vmatpush1.bf16.msra.mxu0 0
  %963 = vmatprep.subr.bf16.mxu0 0
  %964 = vmatpush1.bf16.msra.mxu0 0
  %965 = vmatprep.subr.bf16.mxu0 0
  %966 = vmatpush1.bf16.msra.mxu0 0
  %967 = vmatprep.subr.bf16.mxu0 0
  %968 = vmatpush1.bf16.msra.mxu0 0
  %969 = vmatprep.subr.bf16.mxu0 0
  %970 = vmatpush1.bf16.msra.mxu0 0
  %971 = vmatprep.subr.bf16.mxu0 0
  %972 = vmatpush1.bf16.msra.mxu0 0
  %973 = vmatprep.mubr.bf16.mxu0 0
  %974 = vmatmul.mubr.bf16.gmra.mrb[0].mxu0 %v194
  %v975 = vpop.f32.mrb[0].mxu0
  %v976 = vadd.f32 %v927, %v975
  %v977 = vpop.f32.mrb[0].mxu0
  %v978 = vpop.f32.mrb[0].mxu0
  %v979 = vadd.f32 %v927, %v978
  %v980 = vpop.f32.mrb[0].mxu0
  %981 = vdwg.mxu0
  %v982 = vpack.c.bf16 %v979, %v976
  %v983 = vpack.c.bf16 %v239, %v239
  %v985 = vsel %vm376, %v915, 0
  %v988 = vsel %vm380, %v983, 0
  %990 = vmatprep.subr.bf16.mxu0 0
  %991 = vmatpush1.bf16.msra.mxu0 %v988
  %992 = vmatprep.subr.bf16.mxu0 0
  %993 = vmatpush1.bf16.msra.mxu0 0
  %994 = vmatprep.subr.bf16.mxu0 0
  %995 = vmatpush1.bf16.msra.mxu0 0
  %996 = vmatprep.subr.bf16.mxu0 0
  %997 = vmatpush1.bf16.msra.mxu0 0
  %998 = vmatprep.subr.bf16.mxu0 0
  %999 = vmatpush1.bf16.msra.mxu0 0
  %1000 = vmatprep.subr.bf16.mxu0 0
  %1001 = vmatpush1.bf16.msra.mxu0 0
  %1002 = vmatprep.subr.bf16.mxu0 0
  %1003 = vmatpush1.bf16.msra.mxu0 0
  %1004 = vmatprep.subr.bf16.mxu0 0
  %1005 = vmatpush1.bf16.msra.mxu0 0
  %1006 = vmatprep.subr.bf16.mxu0 0
  %1007 = vmatpush1.bf16.msra.mxu0 0
  %1008 = vmatprep.subr.bf16.mxu0 0
  %1009 = vmatpush1.bf16.msra.mxu0 0
  %1010 = vmatprep.subr.bf16.mxu0 0
  %1011 = vmatpush1.bf16.msra.mxu0 0
  %1012 = vmatprep.subr.bf16.mxu0 0
  %1013 = vmatpush1.bf16.msra.mxu0 0
  %1014 = vmatprep.subr.bf16.mxu0 0
  %1015 = vmatpush1.bf16.msra.mxu0 0
  %1016 = vmatprep.subr.bf16.mxu0 0
  %1017 = vmatpush1.bf16.msra.mxu0 0
  %1018 = vmatprep.subr.bf16.mxu0 0
  %1019 = vmatpush1.bf16.msra.mxu0 0
  %1020 = vmatprep.subr.bf16.mxu0 0
  %1021 = vmatpush1.bf16.msra.mxu0 0
  %1022 = vmatprep.mubr.bf16.mxu0 0
  %1023 = vmatmul.mubr.bf16.gmra.mrb[0].mxu0 %v985
  %v1024 = vpop.f32.mrb[0].mxu0
  %v1025 = vadd.f32 0.0, %v1024
  %v1026 = vpop.f32.mrb[0].mxu0
  %v1027 = vpop.f32.mrb[0].mxu0
  %v1028 = vadd.f32 0.0, %v1027
  %v1029 = vpop.f32.mrb[0].mxu0
  %1030 = vdwg.mxu0
  %v1031 = vmul.f32 %v1025, 0.35355338
  %v1032 = vmul.f32 %v1028, 0.35355338
  %v1033 = vadd.f32 %v1031, %v98
  %v1034 = vadd.f32 %v1032, %v99
  %v1035 = vsel %vm429, %v1033, -inf
  %1036 = vmax.xlane.f32.xlu0 %v1035
  %v1037 = vpop.xlane.xlu0 %1036
  %v1038 = vsel %vm429, %v1034, -inf
  %1039 = vmax.xlane.f32.xlu0 %v1038
  %v1040 = vpop.xlane.xlu0 %1039
  %v1041 = vsub.f32 %v1033, %v1037
  %v1042 = vsub.f32 %v1034, %v1040
  %v1043 = vmul.f32 %v1041, 1.442695
  %v1044 = vpow.pop %v1043
  %v1045 = vmul.f32 %v1042, 1.442695
  %v1046 = vpow.pop %v1045
  %v1047 = vsel %vm429, %v1044, 0.0
  %1048 = vadd.xlane.f32.xlu0 %v1047
  %v1049 = vpop.xlane.xlu0 %1048
  %v1050 = vsel %vm429, %v1046, 0.0
  %1051 = vadd.xlane.f32.xlu0 %v1050
  %v1052 = vpop.xlane.xlu0 %1051
  %v1053 = vrcp.pop %v1049
  %v1054 = vrcp.pop %v1052
  %v1055 = vmul.f32 %v1044, %v1053
  %v1056 = vmul.f32 %v1046, %v1054
  %v1057 = vpack.c.bf16 %v1056, %v1055
  %v1059 = vsel %vm429, %v1057, 0
  %1061 = vmatprep.subr.bf16.mxu0 0
  %1062 = vmatpush1.bf16.msra.mxu0 %v982
  %1063 = vmatprep.subr.bf16.mxu0 0
  %1064 = vmatpush1.bf16.msra.mxu0 0
  %1065 = vmatprep.subr.bf16.mxu0 0
  %1066 = vmatpush1.bf16.msra.mxu0 0
  %1067 = vmatprep.subr.bf16.mxu0 0
  %1068 = vmatpush1.bf16.msra.mxu0 0
  %1069 = vmatprep.subr.bf16.mxu0 0
  %1070 = vmatpush1.bf16.msra.mxu0 0
  %1071 = vmatprep.subr.bf16.mxu0 0
  %1072 = vmatpush1.bf16.msra.mxu0 0
  %1073 = vmatprep.subr.bf16.mxu0 0
  %1074 = vmatpush1.bf16.msra.mxu0 0
  %1075 = vmatprep.subr.bf16.mxu0 0
  %1076 = vmatpush1.bf16.msra.mxu0 0
  %1077 = vmatprep.subr.bf16.mxu0 0
  %1078 = vmatpush1.bf16.msra.mxu0 0
  %1079 = vmatprep.subr.bf16.mxu0 0
  %1080 = vmatpush1.bf16.msra.mxu0 0
  %1081 = vmatprep.subr.bf16.mxu0 0
  %1082 = vmatpush1.bf16.msra.mxu0 0
  %1083 = vmatprep.subr.bf16.mxu0 0
  %1084 = vmatpush1.bf16.msra.mxu0 0
  %1085 = vmatprep.subr.bf16.mxu0 0
  %1086 = vmatpush1.bf16.msra.mxu0 0
  %1087 = vmatprep.subr.bf16.mxu0 0
  %1088 = vmatpush1.bf16.msra.mxu0 0
  %1089 = vmatprep.subr.bf16.mxu0 0
  %1090 = vmatpush1.bf16.msra.mxu0 0
  %1091 = vmatprep.subr.bf16.mxu0 0
  %1092 = vmatpush1.bf16.msra.mxu0 0
  %1093 = vmatprep.mubr.bf16.mxu0 0
  %1094 = vmatmul.mubr.bf16.gmra.mrb[0].mxu0 %v1059
  %v1095 = vpop.f32.mrb[0].mxu0
  %v1096 = vadd.f32 0.0, %v1095
  %v1097 = vpop.f32.mrb[0].mxu0
  %v1098 = vpop.f32.mrb[0].mxu0
  %v1099 = vadd.f32 0.0, %v1098
  %v1100 = vpop.f32.mrb[0].mxu0
  %1101 = vdwg.mxu0
  %v1102 = vpack.c.bf16 %v1099, %v1096
  %s1103 = scalar_lea.vmem %s11, 8
  %v1104 = vld [vmem:[%s1103] sm:$0xf]
  %v1106 = vsel %vm376, %v1102, 0
  %v1109 = vsel %vm380, %v1104, 0
  %1111 = vmatprep.subr.bf16.mxu0 0
  %1112 = vmatpush1.bf16.msra.mxu0 %v1109
  %1113 = vmatprep.subr.bf16.mxu0 0
  %1114 = vmatpush1.bf16.msra.mxu0 0
  %1115 = vmatprep.subr.bf16.mxu0 0
  %1116 = vmatpush1.bf16.msra.mxu0 0
  %1117 = vmatprep.subr.bf16.mxu0 0
  %1118 = vmatpush1.bf16.msra.mxu0 0
  %1119 = vmatprep.subr.bf16.mxu0 0
  %1120 = vmatpush1.bf16.msra.mxu0 0
  %1121 = vmatprep.subr.bf16.mxu0 0
  %1122 = vmatpush1.bf16.msra.mxu0 0
  %1123 = vmatprep.subr.bf16.mxu0 0
  %1124 = vmatpush1.bf16.msra.mxu0 0
  %1125 = vmatprep.subr.bf16.mxu0 0
  %1126 = vmatpush1.bf16.msra.mxu0 0
  %1127 = vmatprep.subr.bf16.mxu0 0
  %1128 = vmatpush1.bf16.msra.mxu0 0
  %1129 = vmatprep.subr.bf16.mxu0 0
  %1130 = vmatpush1.bf16.msra.mxu0 0
  %1131 = vmatprep.subr.bf16.mxu0 0
  %1132 = vmatpush1.bf16.msra.mxu0 0
  %1133 = vmatprep.subr.bf16.mxu0 0
  %1134 = vmatpush1.bf16.msra.mxu0 0
  %1135 = vmatprep.subr.bf16.mxu0 0
  %1136 = vmatpush1.bf16.msra.mxu0 0
  %1137 = vmatprep.subr.bf16.mxu0 0
  %1138 = vmatpush1.bf16.msra.mxu0 0
  %1139 = vmatprep.subr.bf16.mxu0 0
  %1140 = vmatpush1.bf16.msra.mxu0 0
  %1141 = vmatprep.subr.bf16.mxu0 0
  %1142 = vmatpush1.bf16.msra.mxu0 0
  %1143 = vmatprep.mubr.bf16.mxu0 0
  %1144 = vmatmul.mubr.bf16.gmra.mrb[0].mxu0 %v1106
  %v1145 = vpop.f32.mrb[0].mxu0
  %v1146 = vadd.f32 0.0, %v1145
  %v1147 = vpop.f32.mrb[0].mxu0
  %v1148 = vpop.f32.mrb[0].mxu0
  %v1149 = vadd.f32 0.0, %v1148
  %v1150 = vpop.f32.mrb[0].mxu0
  %1151 = vdwg.mxu0
  %v1152 = vadd.f32 %v843, %v1146
  %v1153 = vadd.f32 %v846, %v1149
  %s1154 = scalar_lea.vmem %s5, 48
  %v1155 = vld [vmem:[%s1154] sm:$0xf]
  %v1156 = vld [vmem:[%s1154 + $0x4] sm:$0xf]
  %v1157 = vld [vmem:[%s1154 + $0x8] sm:$0xf]
  %v1158 = vld [vmem:[%s1154 + $0xc] sm:$0xf]
  %s1159 = scalar_lea.vmem %s6, 3
  %v1160 = vld [vmem:[%s1159] sm:$0x1]
  %v1162 = vlaneseq
  %v1163 = vshrl.u32 %v1162, 7
  %v1164 = vsub.s32 0, %v1163
  %v1165 = vrot.slane %v1160, %v1164
  %v1171 = vunpack.c.l.b16 %v1155
  %v1172 = vunpack.c.l.b16 %v1156
  %v1173 = vunpack.c.l.b16 %v1157
  %v1174 = vunpack.c.l.b16 %v1158
  %v1175 = vpack.c.b16 %v1172, %v1171
  %v1176 = vpack.c.b16 %v1174, %v1173
  %1179 = vmatprep.subr.bf16.mxu0 0
  %1180 = vmatpush1.bf16.msra.mxu0 %v1175
  %1181 = vmatprep.subr.bf16.mxu0 0
  %1182 = vmatpush1.bf16.msra.mxu0 %v1176
  %1183 = vmatprep.subr.bf16.mxu0 0
  %1184 = vmatpush1.bf16.msra.mxu0 0
  %1185 = vmatprep.subr.bf16.mxu0 0
  %1186 = vmatpush1.bf16.msra.mxu0 0
  %1187 = vmatprep.subr.bf16.mxu0 0
  %1188 = vmatpush1.bf16.msra.mxu0 0
  %1189 = vmatprep.subr.bf16.mxu0 0
  %1190 = vmatpush1.bf16.msra.mxu0 0
  %1191 = vmatprep.subr.bf16.mxu0 0
  %1192 = vmatpush1.bf16.msra.mxu0 0
  %1193 = vmatprep.subr.bf16.mxu0 0
  %1194 = vmatpush1.bf16.msra.mxu0 0
  %1195 = vmatprep.subr.bf16.mxu0 0
  %1196 = vmatpush1.bf16.msra.mxu0 0
  %1197 = vmatprep.subr.bf16.mxu0 0
  %1198 = vmatpush1.bf16.msra.mxu0 0
  %1199 = vmatprep.subr.bf16.mxu0 0
  %1200 = vmatpush1.bf16.msra.mxu0 0
  %1201 = vmatprep.subr.bf16.mxu0 0
  %1202 = vmatpush1.bf16.msra.mxu0 0
  %1203 = vmatprep.subr.bf16.mxu0 0
  %1204 = vmatpush1.bf16.msra.mxu0 0
  %1205 = vmatprep.subr.bf16.mxu0 0
  %1206 = vmatpush1.bf16.msra.mxu0 0
  %1207 = vmatprep.subr.bf16.mxu0 0
  %1208 = vmatpush1.bf16.msra.mxu0 0
  %1209 = vmatprep.subr.bf16.mxu0 0
  %1210 = vmatpush1.bf16.msra.mxu0 0
  %1211 = vmatprep.mubr.bf16.mxu0 0
  %1212 = vmatmul.mubr.bf16.gmra.mrb[0].mxu0 %v194
  %v1213 = vpop.f32.mrb[0].mxu0
  %v1214 = vadd.f32 %v1165, %v1213
  %v1215 = vpop.f32.mrb[0].mxu0
  %v1216 = vpop.f32.mrb[0].mxu0
  %v1217 = vadd.f32 %v1165, %v1216
  %v1218 = vpop.f32.mrb[0].mxu0
  %1219 = vdwg.mxu0
  %v1220 = vpack.c.bf16 %v1217, %v1214
  %s1221 = scalar_lea.vmem %s9, 48
  %v1222 = vld [vmem:[%s1221] sm:$0xf]
  %v1223 = vld [vmem:[%s1221 + $0x4] sm:$0xf]
  %v1224 = vld [vmem:[%s1221 + $0x8] sm:$0xf]
  %v1225 = vld [vmem:[%s1221 + $0xc] sm:$0xf]
  %s1226 = scalar_lea.vmem %s10, 3
  %v1227 = vld [vmem:[%s1226] sm:$0x1]
  %v1229 = vlaneseq
  %v1230 = vshrl.u32 %v1229, 7
  %v1231 = vsub.s32 0, %v1230
  %v1232 = vrot.slane %v1227, %v1231
  %v1238 = vunpack.c.l.b16 %v1222
  %v1239 = vunpack.c.l.b16 %v1223
  %v1240 = vunpack.c.l.b16 %v1224
  %v1241 = vunpack.c.l.b16 %v1225
  %v1242 = vpack.c.b16 %v1239, %v1238
  %v1243 = vpack.c.b16 %v1241, %v1240
  %1246 = vmatprep.subr.bf16.mxu0 0
  %1247 = vmatpush1.bf16.msra.mxu0 %v1242
  %1248 = vmatprep.subr.bf16.mxu0 0
  %1249 = vmatpush1.bf16.msra.mxu0 %v1243
  %1250 = vmatprep.subr.bf16.mxu0 0
  %1251 = vmatpush1.bf16.msra.mxu0 0
  %1252 = vmatprep.subr.bf16.mxu0 0
  %1253 = vmatpush1.bf16.msra.mxu0 0
  %1254 = vmatprep.subr.bf16.mxu0 0
  %1255 = vmatpush1.bf16.msra.mxu0 0
  %1256 = vmatprep.subr.bf16.mxu0 0
  %1257 = vmatpush1.bf16.msra.mxu0 0
  %1258 = vmatprep.subr.bf16.mxu0 0
  %1259 = vmatpush1.bf16.msra.mxu0 0
  %1260 = vmatprep.subr.bf16.mxu0 0
  %1261 = vmatpush1.bf16.msra.mxu0 0
  %1262 = vmatprep.subr.bf16.mxu0 0
  %1263 = vmatpush1.bf16.msra.mxu0 0
  %1264 = vmatprep.subr.bf16.mxu0 0
  %1265 = vmatpush1.bf16.msra.mxu0 0
  %1266 = vmatprep.subr.bf16.mxu0 0
  %1267 = vmatpush1.bf16.msra.mxu0 0
  %1268 = vmatprep.subr.bf16.mxu0 0
  %1269 = vmatpush1.bf16.msra.mxu0 0
  %1270 = vmatprep.subr.bf16.mxu0 0
  %1271 = vmatpush1.bf16.msra.mxu0 0
  %1272 = vmatprep.subr.bf16.mxu0 0
  %1273 = vmatpush1.bf16.msra.mxu0 0
  %1274 = vmatprep.subr.bf16.mxu0 0
  %1275 = vmatpush1.bf16.msra.mxu0 0
  %1276 = vmatprep.subr.bf16.mxu0 0
  %1277 = vmatpush1.bf16.msra.mxu0 0
  %1278 = vmatprep.mubr.bf16.mxu0 0
  %1279 = vmatmul.mubr.bf16.gmra.mrb[0].mxu0 %v194
  %v1280 = vpop.f32.mrb[0].mxu0
  %v1281 = vadd.f32 %v1232, %v1280
  %v1282 = vpop.f32.mrb[0].mxu0
  %v1283 = vpop.f32.mrb[0].mxu0
  %v1284 = vadd.f32 %v1232, %v1283
  %v1285 = vpop.f32.mrb[0].mxu0
  %1286 = vdwg.mxu0
  %v1287 = vpack.c.bf16 %v1284, %v1281
  %v1288 = vpack.c.bf16 %v242, %v242
  %v1290 = vsel %vm376, %v1220, 0
  %v1293 = vsel %vm380, %v1288, 0
  %1295 = vmatprep.subr.bf16.mxu0 0
  %1296 = vmatpush1.bf16.msra.mxu0 %v1293
  %1297 = vmatprep.subr.bf16.mxu0 0
  %1298 = vmatpush1.bf16.msra.mxu0 0
  %1299 = vmatprep.subr.bf16.mxu0 0
  %1300 = vmatpush1.bf16.msra.mxu0 0
  %1301 = vmatprep.subr.bf16.mxu0 0
  %1302 = vmatpush1.bf16.msra.mxu0 0
  %1303 = vmatprep.subr.bf16.mxu0 0
  %1304 = vmatpush1.bf16.msra.mxu0 0
  %1305 = vmatprep.subr.bf16.mxu0 0
  %1306 = vmatpush1.bf16.msra.mxu0 0
  %1307 = vmatprep.subr.bf16.mxu0 0
  %1308 = vmatpush1.bf16.msra.mxu0 0
  %1309 = vmatprep.subr.bf16.mxu0 0
  %1310 = vmatpush1.bf16.msra.mxu0 0
  %1311 = vmatprep.subr.bf16.mxu0 0
  %1312 = vmatpush1.bf16.msra.mxu0 0
  %1313 = vmatprep.subr.bf16.mxu0 0
  %1314 = vmatpush1.bf16.msra.mxu0 0
  %1315 = vmatprep.subr.bf16.mxu0 0
  %1316 = vmatpush1.bf16.msra.mxu0 0
  %1317 = vmatprep.subr.bf16.mxu0 0
  %1318 = vmatpush1.bf16.msra.mxu0 0
  %1319 = vmatprep.subr.bf16.mxu0 0
  %1320 = vmatpush1.bf16.msra.mxu0 0
  %1321 = vmatprep.subr.bf16.mxu0 0
  %1322 = vmatpush1.bf16.msra.mxu0 0
  %1323 = vmatprep.subr.bf16.mxu0 0
  %1324 = vmatpush1.bf16.msra.mxu0 0
  %1325 = vmatprep.subr.bf16.mxu0 0
  %1326 = vmatpush1.bf16.msra.mxu0 0
  %1327 = vmatprep.mubr.bf16.mxu0 0
  %1328 = vmatmul.mubr.bf16.gmra.mrb[0].mxu0 %v1290
  %v1329 = vpop.f32.mrb[0].mxu0
  %v1330 = vadd.f32 0.0, %v1329
  %v1331 = vpop.f32.mrb[0].mxu0
  %v1332 = vpop.f32.mrb[0].mxu0
  %v1333 = vadd.f32 0.0, %v1332
  %v1334 = vpop.f32.mrb[0].mxu0
  %1335 = vdwg.mxu0
  %v1336 = vmul.f32 %v1330, 0.35355338
  %v1337 = vmul.f32 %v1333, 0.35355338
  %v1338 = vadd.f32 %v1336, %v98
  %v1339 = vadd.f32 %v1337, %v99
  %v1340 = vsel %vm429, %v1338, -inf
  %1341 = vmax.xlane.f32.xlu0 %v1340
  %v1342 = vpop.xlane.xlu0 %1341
  %v1343 = vsel %vm429, %v1339, -inf
  %1344 = vmax.xlane.f32.xlu0 %v1343
  %v1345 = vpop.xlane.xlu0 %1344
  %v1346 = vsub.f32 %v1338, %v1342
  %v1347 = vsub.f32 %v1339, %v1345
  %v1348 = vmul.f32 %v1346, 1.442695
  %v1349 = vpow.pop %v1348
  %v1350 = vmul.f32 %v1347, 1.442695
  %v1351 = vpow.pop %v1350
  %v1352 = vsel %vm429, %v1349, 0.0
  %1353 = vadd.xlane.f32.xlu0 %v1352
  %v1354 = vpop.xlane.xlu0 %1353
  %v1355 = vsel %vm429, %v1351, 0.0
  %1356 = vadd.xlane.f32.xlu0 %v1355
  %v1357 = vpop.xlane.xlu0 %1356
  %v1358 = vrcp.pop %v1354
  %v1359 = vrcp.pop %v1357
  %v1360 = vmul.f32 %v1349, %v1358
  %v1361 = vmul.f32 %v1351, %v1359
  %v1362 = vpack.c.bf16 %v1361, %v1360
  %v1364 = vsel %vm429, %v1362, 0
  %1366 = vmatprep.subr.bf16.mxu0 0
  %1367 = vmatpush1.bf16.msra.mxu0 %v1287
  %1368 = vmatprep.subr.bf16.mxu0 0
  %1369 = vmatpush1.bf16.msra.mxu0 0
  %1370 = vmatprep.subr.bf16.mxu0 0
  %1371 = vmatpush1.bf16.msra.mxu0 0
  %1372 = vmatprep.subr.bf16.mxu0 0
  %1373 = vmatpush1.bf16.msra.mxu0 0
  %1374 = vmatprep.subr.bf16.mxu0 0
  %1375 = vmatpush1.bf16.msra.mxu0 0
  %1376 = vmatprep.subr.bf16.mxu0 0
  %1377 = vmatpush1.bf16.msra.mxu0 0
  %1378 = vmatprep.subr.bf16.mxu0 0
  %1379 = vmatpush1.bf16.msra.mxu0 0
  %1380 = vmatprep.subr.bf16.mxu0 0
  %1381 = vmatpush1.bf16.msra.mxu0 0
  %1382 = vmatprep.subr.bf16.mxu0 0
  %1383 = vmatpush1.bf16.msra.mxu0 0
  %1384 = vmatprep.subr.bf16.mxu0 0
  %1385 = vmatpush1.bf16.msra.mxu0 0
  %1386 = vmatprep.subr.bf16.mxu0 0
  %1387 = vmatpush1.bf16.msra.mxu0 0
  %1388 = vmatprep.subr.bf16.mxu0 0
  %1389 = vmatpush1.bf16.msra.mxu0 0
  %1390 = vmatprep.subr.bf16.mxu0 0
  %1391 = vmatpush1.bf16.msra.mxu0 0
  %1392 = vmatprep.subr.bf16.mxu0 0
  %1393 = vmatpush1.bf16.msra.mxu0 0
  %1394 = vmatprep.subr.bf16.mxu0 0
  %1395 = vmatpush1.bf16.msra.mxu0 0
  %1396 = vmatprep.subr.bf16.mxu0 0
  %1397 = vmatpush1.bf16.msra.mxu0 0
  %1398 = vmatprep.mubr.bf16.mxu0 0
  %1399 = vmatmul.mubr.bf16.gmra.mrb[0].mxu0 %v1364
  %v1400 = vpop.f32.mrb[0].mxu0
  %v1401 = vadd.f32 0.0, %v1400
  %v1402 = vpop.f32.mrb[0].mxu0
  %v1403 = vpop.f32.mrb[0].mxu0
  %v1404 = vadd.f32 0.0, %v1403
  %v1405 = vpop.f32.mrb[0].mxu0
  %1406 = vdwg.mxu0
  %v1407 = vpack.c.bf16 %v1404, %v1401
  %s1408 = scalar_lea.vmem %s11, 12
  %v1409 = vld [vmem:[%s1408] sm:$0xf]
  %v1411 = vsel %vm376, %v1407, 0
  %v1414 = vsel %vm380, %v1409, 0
  %1416 = vmatprep.subr.bf16.mxu0 0
  %1417 = vmatpush1.bf16.msra.mxu0 %v1414
  %1418 = vmatprep.subr.bf16.mxu0 0
  %1419 = vmatpush1.bf16.msra.mxu0 0
  %1420 = vmatprep.subr.bf16.mxu0 0
  %1421 = vmatpush1.bf16.msra.mxu0 0
  %1422 = vmatprep.subr.bf16.mxu0 0
  %1423 = vmatpush1.bf16.msra.mxu0 0
  %1424 = vmatprep.subr.bf16.mxu0 0
  %1425 = vmatpush1.bf16.msra.mxu0 0
  %1426 = vmatprep.subr.bf16.mxu0 0
  %1427 = vmatpush1.bf16.msra.mxu0 0
  %1428 = vmatprep.subr.bf16.mxu0 0
  %1429 = vmatpush1.bf16.msra.mxu0 0
  %1430 = vmatprep.subr.bf16.mxu0 0
  %1431 = vmatpush1.bf16.msra.mxu0 0
  %1432 = vmatprep.subr.bf16.mxu0 0
  %1433 = vmatpush1.bf16.msra.mxu0 0
  %1434 = vmatprep.subr.bf16.mxu0 0
  %1435 = vmatpush1.bf16.msra.mxu0 0
  %1436 = vmatprep.subr.bf16.mxu0 0
  %1437 = vmatpush1.bf16.msra.mxu0 0
  %1438 = vmatprep.subr.bf16.mxu0 0
  %1439 = vmatpush1.bf16.msra.mxu0 0
  %1440 = vmatprep.subr.bf16.mxu0 0
  %1441 = vmatpush1.bf16.msra.mxu0 0
  %1442 = vmatprep.subr.bf16.mxu0 0
  %1443 = vmatpush1.bf16.msra.mxu0 0
  %1444 = vmatprep.subr.bf16.mxu0 0
  %1445 = vmatpush1.bf16.msra.mxu0 0
  %1446 = vmatprep.subr.bf16.mxu0 0
  %1447 = vmatpush1.bf16.msra.mxu0 0
  %1448 = vmatprep.mubr.bf16.mxu0 0
  %1449 = vmatmul.mubr.bf16.gmra.mrb[0].mxu0 %v1411
  %v1450 = vpop.f32.mrb[0].mxu0
  %v1451 = vadd.f32 0.0, %v1450
  %v1452 = vpop.f32.mrb[0].mxu0
  %v1453 = vpop.f32.mrb[0].mxu0
  %v1454 = vadd.f32 0.0, %v1453
  %v1455 = vpop.f32.mrb[0].mxu0
  %1456 = vdwg.mxu0
  %v1457 = vadd.f32 %v1152, %v1451
  %v1458 = vadd.f32 %v1153, %v1454
  %v1459 = vld [vmem:[%s12] sm:$0x1]
  %v1461 = vlaneseq
  %v1462 = vshrl.u32 %v1461, 7
  %v1463 = vsub.s32 0, %v1462
  %v1464 = vrot.slane %v1459, %v1463
  %v1466 = vadd.f32 %v1457, %v1464
  %v1467 = vadd.f32 %v1458, %v1464
  %v1468 = vadd.f32 %v1466, %v146
  %v1469 = vadd.f32 %v1467, %v147
  %v1470 = vld [vmem:[%s13] sm:$0x1]
  %v1471 = vld [vmem:[%s14] sm:$0x1]
  %v1472 = vsel %vm104, %v1468, 0.0
  %1473 = vadd.xlane.f32.xlu0 %v1472
  %v1474 = vpop.xlane.xlu0 %1473
  %v1475 = vsel %vm104, %v1469, 0.0
  %1476 = vadd.xlane.f32.xlu0 %v1475
  %v1477 = vpop.xlane.xlu0 %1476
  %v1478 = vmul.f32 %v1474, %v111
  %v1479 = vmul.f32 %v1477, %v111
  %v1480 = vsub.f32 %v1468, %v1478
  %v1481 = vsub.f32 %v1469, %v1479
  %v1482 = vmul.f32 %v1480, %v1480
  %v1483 = vmul.f32 %v1481, %v1481
  %v1484 = vsel %vm104, %v1482, 0.0
  %1485 = vadd.xlane.f32.xlu0 %v1484
  %v1486 = vpop.xlane.xlu0 %1485
  %v1487 = vsel %vm104, %v1483, 0.0
  %1488 = vadd.xlane.f32.xlu0 %v1487
  %v1489 = vpop.xlane.xlu0 %1488
  %v1490 = vmul.f32 %v1486, %v111
  %v1491 = vmul.f32 %v1489, %v111
  %v1492 = vadd.f32 %v1490, 1e-05
  %v1493 = vadd.f32 %v1491, 1e-05
  %v1494 = vrsqrt.pop %v1492
  %v1495 = vrsqrt.pop %v1493
  %v1496 = vmul.f32 %v1480, %v1494
  %v1497 = vmul.f32 %v1481, %v1495
  %v1499 = vlaneseq
  %v1500 = vshrl.u32 %v1499, 7
  %v1501 = vsub.s32 0, %v1500
  %v1502 = vrot.slane %v1470, %v1501
  %v1504 = vmul.f32 %v1496, %v1502
  %v1505 = vmul.f32 %v1497, %v1502
  %v1507 = vlaneseq
  %v1508 = vshrl.u32 %v1507, 7
  %v1509 = vsub.s32 0, %v1508
  %v1510 = vrot.slane %v1471, %v1509
  %v1512 = vadd.f32 %v1504, %v1510
  %v1513 = vadd.f32 %v1505, %v1510
  %v1514 = vpack.c.bf16 %v1513, %v1512
  %v1515 = vld [vmem:[%s15] sm:$0xf]
  %v1516 = vld [vmem:[%s15 + $0x4] sm:$0xf]
  %v1517 = vld [vmem:[%s15 + $0x8] sm:$0xf]
  %v1518 = vld [vmem:[%s15 + $0xc] sm:$0xf]
  %v1519 = vld [vmem:[%s16] sm:$0x1]
  %v1521 = vlaneseq
  %v1522 = vshrl.u32 %v1521, 7
  %v1523 = vsub.s32 0, %v1522
  %v1524 = vrot.slane %v1519, %v1523
  %v1530 = vunpack.c.l.b16 %v1515
  %v1531 = vunpack.c.l.b16 %v1516
  %v1532 = vunpack.c.l.b16 %v1517
  %v1533 = vunpack.c.l.b16 %v1518
  %v1534 = vpack.c.b16 %v1531, %v1530
  %v1535 = vpack.c.b16 %v1533, %v1532
  %v1539 = vsel %vm104, %v1514, 0
  %1541 = vmatprep.subr.bf16.mxu0 0
  %1542 = vmatpush1.bf16.msra.mxu0 %v1534
  %1543 = vmatprep.subr.bf16.mxu0 0
  %1544 = vmatpush1.bf16.msra.mxu0 %v1535
  %1545 = vmatprep.subr.bf16.mxu0 0
  %1546 = vmatpush1.bf16.msra.mxu0 0
  %1547 = vmatprep.subr.bf16.mxu0 0
  %1548 = vmatpush1.bf16.msra.mxu0 0
  %1549 = vmatprep.subr.bf16.mxu0 0
  %1550 = vmatpush1.bf16.msra.mxu0 0
  %1551 = vmatprep.subr.bf16.mxu0 0
  %1552 = vmatpush1.bf16.msra.mxu0 0
  %1553 = vmatprep.subr.bf16.mxu0 0
  %1554 = vmatpush1.bf16.msra.mxu0 0
  %1555 = vmatprep.subr.bf16.mxu0 0
  %1556 = vmatpush1.bf16.msra.mxu0 0
  %1557 = vmatprep.subr.bf16.mxu0 0
  %1558 = vmatpush1.bf16.msra.mxu0 0
  %1559 = vmatprep.subr.bf16.mxu0 0
  %1560 = vmatpush1.bf16.msra.mxu0 0
  %1561 = vmatprep.subr.bf16.mxu0 0
  %1562 = vmatpush1.bf16.msra.mxu0 0
  %1563 = vmatprep.subr.bf16.mxu0 0
  %1564 = vmatpush1.bf16.msra.mxu0 0
  %1565 = vmatprep.subr.bf16.mxu0 0
  %1566 = vmatpush1.bf16.msra.mxu0 0
  %1567 = vmatprep.subr.bf16.mxu0 0
  %1568 = vmatpush1.bf16.msra.mxu0 0
  %1569 = vmatprep.subr.bf16.mxu0 0
  %1570 = vmatpush1.bf16.msra.mxu0 0
  %1571 = vmatprep.subr.bf16.mxu0 0
  %1572 = vmatpush1.bf16.msra.mxu0 0
  %1573 = vmatprep.mubr.bf16.mxu0 0
  %1574 = vmatmul.mubr.bf16.gmra.mrb[0].mxu0 %v1539
  %v1575 = vpop.f32.mrb[0].mxu0
  %v1576 = vadd.f32 %v1524, %v1575
  %v1577 = vpop.f32.mrb[0].mxu0
  %v1578 = vpop.f32.mrb[0].mxu0
  %v1579 = vadd.f32 %v1524, %v1578
  %v1580 = vpop.f32.mrb[0].mxu0
  %1581 = vdwg.mxu0
  %v1582 = vmul.f32 %v1576, 0.5
  %v1583 = vmul.f32 %v1579, 0.5
  %v1584 = vmul.f32 %v1576, 0.044715
  %v1585 = vmul.f32 %v1579, 0.044715
  %v1586 = vmul.f32 %v1584, %v1576
  %v1587 = vmul.f32 %v1585, %v1579
  %v1588 = vmul.f32 %v1586, %v1576
  %v1589 = vmul.f32 %v1587, %v1579
  %v1590 = vadd.f32 %v1576, %v1588
  %v1591 = vadd.f32 %v1579, %v1589
  %v1592 = vmul.f32 %v1590, 0.7978846
  %v1593 = vmul.f32 %v1591, 0.7978846
  %v1594 = vtanh.pop %v1592
  %v1595 = vtanh.pop %v1593
  %v1596 = vadd.f32 %v1594, 1.0
  %v1597 = vadd.f32 %v1595, 1.0
  %v1598 = vmul.f32 %v1582, %v1596
  %v1599 = vmul.f32 %v1583, %v1597
  %v1600 = vpack.c.bf16 %v1599, %v1598
  %v1601 = vld [vmem:[%s17] sm:$0xf]
  %v1602 = vld [vmem:[%s17 + $0x4] sm:$0xf]
  %v1603 = vld [vmem:[%s17 + $0x8] sm:$0xf]
  %v1604 = vld [vmem:[%s17 + $0xc] sm:$0xf]
  %v1605 = vld [vmem:[%s17 + $0x10] sm:$0xf]
  %v1606 = vld [vmem:[%s17 + $0x14] sm:$0xf]
  %v1607 = vld [vmem:[%s17 + $0x18] sm:$0xf]
  %v1608 = vld [vmem:[%s17 + $0x1c] sm:$0xf]
  %v1609 = vld [vmem:[%s18] sm:$0x1]
  %v1611 = vlaneseq
  %v1612 = vshrl.u32 %v1611, 7
  %v1613 = vsub.s32 0, %v1612
  %v1614 = vrot.slane %v1609, %v1613
  %v1624 = vunpack.c.l.b16 %v1601
  %v1625 = vunpack.c.l.b16 %v1602
  %v1626 = vunpack.c.l.b16 %v1603
  %v1627 = vunpack.c.l.b16 %v1604
  %v1628 = vunpack.c.l.b16 %v1605
  %v1629 = vunpack.c.l.b16 %v1606
  %v1630 = vunpack.c.l.b16 %v1607
  %v1631 = vunpack.c.l.b16 %v1608
  %v1632 = vpack.c.b16 %v1625, %v1624
  %v1633 = vpack.c.b16 %v1627, %v1626
  %v1634 = vpack.c.b16 %v1629, %v1628
  %v1635 = vpack.c.b16 %v1631, %v1630
  %vm1640 = vcmask 523264
  %v1642 = vsel %vm1640, %v1600, 0
  %1644 = vmatprep.subr.bf16.mxu0 0
  %1645 = vmatpush1.bf16.msra.mxu0 %v1632
  %1646 = vmatprep.subr.bf16.mxu0 0
  %1647 = vmatpush1.bf16.msra.mxu0 %v1633
  %1648 = vmatprep.subr.bf16.mxu0 0
  %1649 = vmatpush1.bf16.msra.mxu0 %v1634
  %1650 = vmatprep.subr.bf16.mxu0 0
  %1651 = vmatpush1.bf16.msra.mxu0 %v1635
  %1652 = vmatprep.subr.bf16.mxu0 0
  %1653 = vmatpush1.bf16.msra.mxu0 0
  %1654 = vmatprep.subr.bf16.mxu0 0
  %1655 = vmatpush1.bf16.msra.mxu0 0
  %1656 = vmatprep.subr.bf16.mxu0 0
  %1657 = vmatpush1.bf16.msra.mxu0 0
  %1658 = vmatprep.subr.bf16.mxu0 0
  %1659 = vmatpush1.bf16.msra.mxu0 0
  %1660 = vmatprep.subr.bf16.mxu0 0
  %1661 = vmatpush1.bf16.msra.mxu0 0
  %1662 = vmatprep.subr.bf16.mxu0 0
  %1663 = vmatpush1.bf16.msra.mxu0 0
  %1664 = vmatprep.subr.bf16.mxu0 0
  %1665 = vmatpush1.bf16.msra.mxu0 0
  %1666 = vmatprep.subr.bf16.mxu0 0
  %1667 = vmatpush1.bf16.msra.mxu0 0
  %1668 = vmatprep.subr.bf16.mxu0 0
  %1669 = vmatpush1.bf16.msra.mxu0 0
  %1670 = vmatprep.subr.bf16.mxu0 0
  %1671 = vmatpush1.bf16.msra.mxu0 0
  %1672 = vmatprep.subr.bf16.mxu0 0
  %1673 = vmatpush1.bf16.msra.mxu0 0
  %1674 = vmatprep.subr.bf16.mxu0 0
  %1675 = vmatpush1.bf16.msra.mxu0 0
  %1676 = vmatprep.mubr.bf16.mxu0 0
  %1677 = vmatmul.mubr.bf16.gmra.mrb[0].mxu0 %v1642
  %v1678 = vpop.f32.mrb[0].mxu0
  %v1679 = vadd.f32 %v1614, %v1678
  %v1680 = vpop.f32.mrb[0].mxu0
  %v1681 = vpop.f32.mrb[0].mxu0
  %v1682 = vadd.f32 %v1614, %v1681
  %v1683 = vpop.f32.mrb[0].mxu0
  %1684 = vdwg.mxu0
  %v1685 = vadd.f32 %v1679, %v1512
  %v1686 = vadd.f32 %v1682, %v1513
  %v1687 = vld [vmem:[%s19] sm:$0x1]
  %v1688 = vld [vmem:[%s20] sm:$0x1]
  %v1689 = vsel %vm104, %v1685, 0.0
  %1690 = vadd.xlane.f32.xlu0 %v1689
  %v1691 = vpop.xlane.xlu0 %1690
  %v1692 = vsel %vm104, %v1686, 0.0
  %1693 = vadd.xlane.f32.xlu0 %v1692
  %v1694 = vpop.xlane.xlu0 %1693
  %v1695 = vmul.f32 %v1691, %v111
  %v1696 = vmul.f32 %v1694, %v111
  %v1697 = vsub.f32 %v1685, %v1695
  %v1698 = vsub.f32 %v1686, %v1696
  %v1699 = vmul.f32 %v1697, %v1697
  %v1700 = vmul.f32 %v1698, %v1698
  %v1701 = vsel %vm104, %v1699, 0.0
  %1702 = vadd.xlane.f32.xlu0 %v1701
  %v1703 = vpop.xlane.xlu0 %1702
  %v1704 = vsel %vm104, %v1700, 0.0
  %1705 = vadd.xlane.f32.xlu0 %v1704
  %v1706 = vpop.xlane.xlu0 %1705
  %v1707 = vmul.f32 %v1703, %v111
  %v1708 = vmul.f32 %v1706, %v111
  %v1709 = vadd.f32 %v1707, 1e-05
  %v1710 = vadd.f32 %v1708, 1e-05
  %v1711 = vrsqrt.pop %v1709
  %v1712 = vrsqrt.pop %v1710
  %v1713 = vmul.f32 %v1697, %v1711
  %v1714 = vmul.f32 %v1698, %v1712
  %v1716 = vlaneseq
  %v1717 = vshrl.u32 %v1716, 7
  %v1718 = vsub.s32 0, %v1717
  %v1719 = vrot.slane %v1687, %v1718
  %v1721 = vmul.f32 %v1713, %v1719
  %v1722 = vmul.f32 %v1714, %v1719
  %v1724 = vlaneseq
  %v1725 = vshrl.u32 %v1724, 7
  %v1726 = vsub.s32 0, %v1725
  %v1727 = vrot.slane %v1688, %v1726
  %v1729 = vadd.f32 %v1721, %v1727
  %v1730 = vadd.f32 %v1722, %v1727
  %v1731 = vpack.c.bf16 %v1730, %v1729
  %s1732 = scalar_lea.vmem %s7, 16
  %v1733 = vld [vmem:[%s1732] sm:$0xf]
  %v1734 = vld [vmem:[%s1732 + $0x4] sm:$0xf]
  %v1735 = vld [vmem:[%s1732 + $0x8] sm:$0xf]
  %v1736 = vld [vmem:[%s1732 + $0xc] sm:$0xf]
  %s1737 = scalar_lea.vmem %s8, 32
  %v1738 = vld [vmem:[%s1737] sm:$0xff]
  %v1739 = vld [vmem:[%s1737 + $0x8] sm:$0xff]
  %v1740 = vld [vmem:[%s1737 + $0x10] sm:$0xff]
  %v1741 = vld [vmem:[%s1737 + $0x18] sm:$0xff]
  %1743 = vset.pattern.permute.xlu0 0
  %1744 = vperm.xlu0 %1743, %v1738
  %v1745 = vpop.permute.xlu0 %1744
  %1748 = vset.pattern.permute.xlu0 0
  %1749 = vperm.xlu0 %1748, %v1739
  %v1750 = vpop.permute.xlu0 %1749
  %1753 = vset.pattern.permute.xlu0 0
  %1754 = vperm.xlu0 %1753, %v1740
  %v1755 = vpop.permute.xlu0 %1754
  %1758 = vset.pattern.permute.xlu0 0
  %1759 = vperm.xlu0 %1758, %v1741
  %v1760 = vpop.permute.xlu0 %1759
  %v1766 = vunpack.c.l.b16 %v1733
  %v1767 = vunpack.c.l.b16 %v1734
  %v1768 = vunpack.c.l.b16 %v1735
  %v1769 = vunpack.c.l.b16 %v1736
  %v1770 = vpack.c.b16 %v1767, %v1766
  %v1771 = vpack.c.b16 %v1769, %v1768
  %v1773 = vsel %vm104, %v1770, 0
  %v1776 = vsel %vm104, %v1771, 0
  %v1779 = vsel %vm104, %v1731, 0
  %1781 = vmatprep.subr.bf16.mxu0 0
  %1782 = vmatpush1.bf16.xpose.msra.mxu0 %v1779
  %1783 = vmatprep.subr.bf16.mxu0 0
  %1784 = vmatpush1.bf16.xpose.msra.mxu0 0
  %1785 = vmatprep.subr.bf16.mxu0 0
  %1786 = vmatpush1.bf16.xpose.msra.mxu0 0
  %1787 = vmatprep.subr.bf16.mxu0 0
  %1788 = vmatpush1.bf16.xpose.msra.mxu0 0
  %1789 = vmatprep.subr.bf16.mxu0 0
  %1790 = vmatpush1.bf16.xpose.msra.mxu0 0
  %1791 = vmatprep.subr.bf16.mxu0 0
  %1792 = vmatpush1.bf16.xpose.msra.mxu0 0
  %1793 = vmatprep.subr.bf16.mxu0 0
  %1794 = vmatpush1.bf16.xpose.msra.mxu0 0
  %1795 = vmatprep.subr.bf16.mxu0 0
  %1796 = vmatpush1.bf16.xpose.msra.mxu0 0
  %1797 = vmatprep.subr.bf16.mxu0 0
  %1798 = vmatpush1.bf16.xpose.msra.mxu0 0
  %1799 = vmatprep.subr.bf16.mxu0 0
  %1800 = vmatpush1.bf16.xpose.msra.mxu0 0
  %1801 = vmatprep.subr.bf16.mxu0 0
  %1802 = vmatpush1.bf16.xpose.msra.mxu0 0
  %1803 = vmatprep.subr.bf16.mxu0 0
  %1804 = vmatpush1.bf16.xpose.msra.mxu0 0
  %1805 = vmatprep.subr.bf16.mxu0 0
  %1806 = vmatpush1.bf16.xpose.msra.mxu0 0
  %1807 = vmatprep.subr.bf16.mxu0 0
  %1808 = vmatpush1.bf16.xpose.msra.mxu0 0
  %1809 = vmatprep.subr.bf16.mxu0 0
  %1810 = vmatpush1.bf16.xpose.msra.mxu0 0
  %1811 = vmatprep.subr.bf16.mxu0 0
  %1812 = vmatpush1.bf16.xpose.msra.mxu0 0
  %1813 = vmatprep.mubr.bf16.mxu0 0
  %1814 = vmatmul.mubr.bf16.gmra.mrb[0].mxu0 %v1773
  %v1815 = vpop.f32.mrb[0].mxu0
  %v1816 = vadd.f32 %v1745, %v1815
  %v1817 = vpop.f32.mrb[0].mxu0
  %v1818 = vpop.f32.mrb[0].mxu0
  %v1819 = vadd.f32 %v1750, %v1818
  %v1820 = vpop.f32.mrb[0].mxu0
  %1821 = vmatprep.mubr.bf16.mxu0 0
  %1822 = vmatmul.mubr.bf16.gmra.mrb[0].mxu0 %v1776
  %v1823 = vpop.f32.mrb[0].mxu0
  %v1824 = vadd.f32 %v1755, %v1823
  %v1825 = vpop.f32.mrb[0].mxu0
  %v1826 = vpop.f32.mrb[0].mxu0
  %v1827 = vadd.f32 %v1760, %v1826
  %v1828 = vpop.f32.mrb[0].mxu0
  %1829 = vdwg.mxu0
  %s1830 = scalar_lea.vmem %s5, 64
  %v1831 = vld [vmem:[%s1830] sm:$0xf]
  %v1832 = vld [vmem:[%s1830 + $0x4] sm:$0xf]
  %v1833 = vld [vmem:[%s1830 + $0x8] sm:$0xf]
  %v1834 = vld [vmem:[%s1830 + $0xc] sm:$0xf]
  %s1835 = scalar_lea.vmem %s6, 4
  %v1836 = vld [vmem:[%s1835] sm:$0x1]
  %v1838 = vlaneseq
  %v1839 = vshrl.u32 %v1838, 7
  %v1840 = vsub.s32 0, %v1839
  %v1841 = vrot.slane %v1836, %v1840
  %v1847 = vunpack.c.l.b16 %v1831
  %v1848 = vunpack.c.l.b16 %v1832
  %v1849 = vunpack.c.l.b16 %v1833
  %v1850 = vunpack.c.l.b16 %v1834
  %v1851 = vpack.c.b16 %v1848, %v1847
  %v1852 = vpack.c.b16 %v1850, %v1849
  %1855 = vmatprep.subr.bf16.mxu0 0
  %1856 = vmatpush1.bf16.msra.mxu0 %v1851
  %1857 = vmatprep.subr.bf16.mxu0 0
  %1858 = vmatpush1.bf16.msra.mxu0 %v1852
  %1859 = vmatprep.subr.bf16.mxu0 0
  %1860 = vmatpush1.bf16.msra.mxu0 0
  %1861 = vmatprep.subr.bf16.mxu0 0
  %1862 = vmatpush1.bf16.msra.mxu0 0
  %1863 = vmatprep.subr.bf16.mxu0 0
  %1864 = vmatpush1.bf16.msra.mxu0 0
  %1865 = vmatprep.subr.bf16.mxu0 0
  %1866 = vmatpush1.bf16.msra.mxu0 0
  %1867 = vmatprep.subr.bf16.mxu0 0
  %1868 = vmatpush1.bf16.msra.mxu0 0
  %1869 = vmatprep.subr.bf16.mxu0 0
  %1870 = vmatpush1.bf16.msra.mxu0 0
  %1871 = vmatprep.subr.bf16.mxu0 0
  %1872 = vmatpush1.bf16.msra.mxu0 0
  %1873 = vmatprep.subr.bf16.mxu0 0
  %1874 = vmatpush1.bf16.msra.mxu0 0
  %1875 = vmatprep.subr.bf16.mxu0 0
  %1876 = vmatpush1.bf16.msra.mxu0 0
  %1877 = vmatprep.subr.bf16.mxu0 0
  %1878 = vmatpush1.bf16.msra.mxu0 0
  %1879 = vmatprep.subr.bf16.mxu0 0
  %1880 = vmatpush1.bf16.msra.mxu0 0
  %1881 = vmatprep.subr.bf16.mxu0 0
  %1882 = vmatpush1.bf16.msra.mxu0 0
  %1883 = vmatprep.subr.bf16.mxu0 0
  %1884 = vmatpush1.bf16.msra.mxu0 0
  %1885 = vmatprep.subr.bf16.mxu0 0
  %1886 = vmatpush1.bf16.msra.mxu0 0
  %1887 = vmatprep.mubr.bf16.mxu0 0
  %1888 = vmatmul.mubr.bf16.gmra.mrb[0].mxu0 %v1779
  %v1889 = vpop.f32.mrb[0].mxu0
  %v1890 = vadd.f32 %v1841, %v1889
  %v1891 = vpop.f32.mrb[0].mxu0
  %v1892 = vpop.f32.mrb[0].mxu0
  %v1893 = vadd.f32 %v1841, %v1892
  %v1894 = vpop.f32.mrb[0].mxu0
  %1895 = vdwg.mxu0
  %v1896 = vpack.c.bf16 %v1893, %v1890
  %s1897 = scalar_lea.vmem %s9, 64
  %v1898 = vld [vmem:[%s1897] sm:$0xf]
  %v1899 = vld [vmem:[%s1897 + $0x4] sm:$0xf]
  %v1900 = vld [vmem:[%s1897 + $0x8] sm:$0xf]
  %v1901 = vld [vmem:[%s1897 + $0xc] sm:$0xf]
  %s1902 = scalar_lea.vmem %s10, 4
  %v1903 = vld [vmem:[%s1902] sm:$0x1]
  %v1905 = vlaneseq
  %v1906 = vshrl.u32 %v1905, 7
  %v1907 = vsub.s32 0, %v1906
  %v1908 = vrot.slane %v1903, %v1907
  %v1914 = vunpack.c.l.b16 %v1898
  %v1915 = vunpack.c.l.b16 %v1899
  %v1916 = vunpack.c.l.b16 %v1900
  %v1917 = vunpack.c.l.b16 %v1901
  %v1918 = vpack.c.b16 %v1915, %v1914
  %v1919 = vpack.c.b16 %v1917, %v1916
  %1922 = vmatprep.subr.bf16.mxu0 0
  %1923 = vmatpush1.bf16.msra.mxu0 %v1918
  %1924 = vmatprep.subr.bf16.mxu0 0
  %1925 = vmatpush1.bf16.msra.mxu0 %v1919
  %1926 = vmatprep.subr.bf16.mxu0 0
  %1927 = vmatpush1.bf16.msra.mxu0 0
  %1928 = vmatprep.subr.bf16.mxu0 0
  %1929 = vmatpush1.bf16.msra.mxu0 0
  %1930 = vmatprep.subr.bf16.mxu0 0
  %1931 = vmatpush1.bf16.msra.mxu0 0
  %1932 = vmatprep.subr.bf16.mxu0 0
  %1933 = vmatpush1.bf16.msra.mxu0 0
  %1934 = vmatprep.subr.bf16.mxu0 0
  %1935 = vmatpush1.bf16.msra.mxu0 0
  %1936 = vmatprep.subr.bf16.mxu0 0
  %1937 = vmatpush1.bf16.msra.mxu0 0
  %1938 = vmatprep.subr.bf16.mxu0 0
  %1939 = vmatpush1.bf16.msra.mxu0 0
  %1940 = vmatprep.subr.bf16.mxu0 0
  %1941 = vmatpush1.bf16.msra.mxu0 0
  %1942 = vmatprep.subr.bf16.mxu0 0
  %1943 = vmatpush1.bf16.msra.mxu0 0
  %1944 = vmatprep.subr.bf16.mxu0 0
  %1945 = vmatpush1.bf16.msra.mxu0 0
  %1946 = vmatprep.subr.bf16.mxu0 0
  %1947 = vmatpush1.bf16.msra.mxu0 0
  %1948 = vmatprep.subr.bf16.mxu0 0
  %1949 = vmatpush1.bf16.msra.mxu0 0
  %1950 = vmatprep.subr.bf16.mxu0 0
  %1951 = vmatpush1.bf16.msra.mxu0 0
  %1952 = vmatprep.subr.bf16.mxu0 0
  %1953 = vmatpush1.bf16.msra.mxu0 0
  %1954 = vmatprep.mubr.bf16.mxu0 0
  %1955 = vmatmul.mubr.bf16.gmra.mrb[0].mxu0 %v1779
  %v1956 = vpop.f32.mrb[0].mxu0
  %v1957 = vadd.f32 %v1908, %v1956
  %v1958 = vpop.f32.mrb[0].mxu0
  %v1959 = vpop.f32.mrb[0].mxu0
  %v1960 = vadd.f32 %v1908, %v1959
  %v1961 = vpop.f32.mrb[0].mxu0
  %1962 = vdwg.mxu0
  %v1963 = vpack.c.bf16 %v1960, %v1957
  %v1964 = vpack.c.bf16 %v1816, %v1816
  %v1966 = vsel %vm376, %v1896, 0
  %v1969 = vsel %vm380, %v1964, 0
  %1971 = vmatprep.subr.bf16.mxu0 0
  %1972 = vmatpush1.bf16.msra.mxu0 %v1969
  %1973 = vmatprep.subr.bf16.mxu0 0
  %1974 = vmatpush1.bf16.msra.mxu0 0
  %1975 = vmatprep.subr.bf16.mxu0 0
  %1976 = vmatpush1.bf16.msra.mxu0 0
  %1977 = vmatprep.subr.bf16.mxu0 0
  %1978 = vmatpush1.bf16.msra.mxu0 0
  %1979 = vmatprep.subr.bf16.mxu0 0
  %1980 = vmatpush1.bf16.msra.mxu0 0
  %1981 = vmatprep.subr.bf16.mxu0 0
  %1982 = vmatpush1.bf16.msra.mxu0 0
  %1983 = vmatprep.subr.bf16.mxu0 0
  %1984 = vmatpush1.bf16.msra.mxu0 0
  %1985 = vmatprep.subr.bf16.mxu0 0
  %1986 = vmatpush1.bf16.msra.mxu0 0
  %1987 = vmatprep.subr.bf16.mxu0 0
  %1988 = vmatpush1.bf16.msra.mxu0 0
  %1989 = vmatprep.subr.bf16.mxu0 0
  %1990 = vmatpush1.bf16.msra.mxu0 0
  %1991 = vmatprep.subr.bf16.mxu0 0
  %1992 = vmatpush1.bf16.msra.mxu0 0
  %1993 = vmatprep.subr.bf16.mxu0 0
  %1994 = vmatpush1.bf16.msra.mxu0 0
  %1995 = vmatprep.subr.bf16.mxu0 0
  %1996 = vmatpush1.bf16.msra.mxu0 0
  %1997 = vmatprep.subr.bf16.mxu0 0
  %1998 = vmatpush1.bf16.msra.mxu0 0
  %1999 = vmatprep.subr.bf16.mxu0 0
  %2000 = vmatpush1.bf16.msra.mxu0 0
  %2001 = vmatprep.subr.bf16.mxu0 0
  %2002 = vmatpush1.bf16.msra.mxu0 0
  %2003 = vmatprep.mubr.bf16.mxu0 0
  %2004 = vmatmul.mubr.bf16.gmra.mrb[0].mxu0 %v1966
  %v2005 = vpop.f32.mrb[0].mxu0
  %v2006 = vadd.f32 0.0, %v2005
  %v2007 = vpop.f32.mrb[0].mxu0
  %v2008 = vpop.f32.mrb[0].mxu0
  %v2009 = vadd.f32 0.0, %v2008
  %v2010 = vpop.f32.mrb[0].mxu0
  %2011 = vdwg.mxu0
  %v2012 = vmul.f32 %v2006, 0.35355338
  %v2013 = vmul.f32 %v2009, 0.35355338
  %v2014 = vadd.f32 %v2012, %v98
  %v2015 = vadd.f32 %v2013, %v99
  %v2016 = vsel %vm429, %v2014, -inf
  %2017 = vmax.xlane.f32.xlu0 %v2016
  %v2018 = vpop.xlane.xlu0 %2017
  %v2019 = vsel %vm429, %v2015, -inf
  %2020 = vmax.xlane.f32.xlu0 %v2019
  %v2021 = vpop.xlane.xlu0 %2020
  %v2022 = vsub.f32 %v2014, %v2018
  %v2023 = vsub.f32 %v2015, %v2021
  %v2024 = vmul.f32 %v2022, 1.442695
  %v2025 = vpow.pop %v2024
  %v2026 = vmul.f32 %v2023, 1.442695
  %v2027 = vpow.pop %v2026
  %v2028 = vsel %vm429, %v2025, 0.0
  %2029 = vadd.xlane.f32.xlu0 %v2028
  %v2030 = vpop.xlane.xlu0 %2029
  %v2031 = vsel %vm429, %v2027, 0.0
  %2032 = vadd.xlane.f32.xlu0 %v2031
  %v2033 = vpop.xlane.xlu0 %2032
  %v2034 = vrcp.pop %v2030
  %v2035 = vrcp.pop %v2033
  %v2036 = vmul.f32 %v2025, %v2034
  %v2037 = vmul.f32 %v2027, %v2035
  %v2038 = vpack.c.bf16 %v2037, %v2036
  %v2040 = vsel %vm429, %v2038, 0
  %2042 = vmatprep.subr.bf16.mxu0 0
  %2043 = vmatpush1.bf16.msra.mxu0 %v1963
  %2044 = vmatprep.subr.bf16.mxu0 0
  %2045 = vmatpush1.bf16.msra.mxu0 0
  %2046 = vmatprep.subr.bf16.mxu0 0
  %2047 = vmatpush1.bf16.msra.mxu0 0
  %2048 = vmatprep.subr.bf16.mxu0 0
  %2049 = vmatpush1.bf16.msra.mxu0 0
  %2050 = vmatprep.subr.bf16.mxu0 0
  %2051 = vmatpush1.bf16.msra.mxu0 0
  %2052 = vmatprep.subr.bf16.mxu0 0
  %2053 = vmatpush1.bf16.msra.mxu0 0
  %2054 = vmatprep.subr.bf16.mxu0 0
  %2055 = vmatpush1.bf16.msra.mxu0 0
  %2056 = vmatprep.subr.bf16.mxu0 0
  %2057 = vmatpush1.bf16.msra.mxu0 0
  %2058 = vmatprep.subr.bf16.mxu0 0
  %2059 = vmatpush1.bf16.msra.mxu0 0
  %2060 = vmatprep.subr.bf16.mxu0 0
  %2061 = vmatpush1.bf16.msra.mxu0 0
  %2062 = vmatprep.subr.bf16.mxu0 0
  %2063 = vmatpush1.bf16.msra.mxu0 0
  %2064 = vmatprep.subr.bf16.mxu0 0
  %2065 = vmatpush1.bf16.msra.mxu0 0
  %2066 = vmatprep.subr.bf16.mxu0 0
  %2067 = vmatpush1.bf16.msra.mxu0 0
  %2068 = vmatprep.subr.bf16.mxu0 0
  %2069 = vmatpush1.bf16.msra.mxu0 0
  %2070 = vmatprep.subr.bf16.mxu0 0
  %2071 = vmatpush1.bf16.msra.mxu0 0
  %2072 = vmatprep.subr.bf16.mxu0 0
  %2073 = vmatpush1.bf16.msra.mxu0 0
  %2074 = vmatprep.mubr.bf16.mxu0 0
  %2075 = vmatmul.mubr.bf16.gmra.mrb[0].mxu0 %v2040
  %v2076 = vpop.f32.mrb[0].mxu0
  %v2077 = vadd.f32 0.0, %v2076
  %v2078 = vpop.f32.mrb[0].mxu0
  %v2079 = vpop.f32.mrb[0].mxu0
  %v2080 = vadd.f32 0.0, %v2079
  %v2081 = vpop.f32.mrb[0].mxu0
  %2082 = vdwg.mxu0
  %v2083 = vpack.c.bf16 %v2080, %v2077
  %s2084 = scalar_lea.vmem %s11, 16
  %v2085 = vld [vmem:[%s2084] sm:$0xf]
  %s2086 = scalar_lea.vmem %s5, 80
  %v2087 = vld [vmem:[%s2086] sm:$0xf]
  %v2088 = vld [vmem:[%s2086 + $0x4] sm:$0xf]
  %v2089 = vld [vmem:[%s2086 + $0x8] sm:$0xf]
  %v2090 = vld [vmem:[%s2086 + $0xc] sm:$0xf]
  %s2091 = scalar_lea.vmem %s6, 5
  %v2092 = vld [vmem:[%s2091] sm:$0x1]
  %v2094 = vlaneseq
  %v2095 = vshrl.u32 %v2094, 7
  %v2096 = vsub.s32 0, %v2095
  %v2097 = vrot.slane %v2092, %v2096
  %v2103 = vunpack.c.l.b16 %v2087
  %v2104 = vunpack.c.l.b16 %v2088
  %v2105 = vunpack.c.l.b16 %v2089
  %v2106 = vunpack.c.l.b16 %v2090
  %v2107 = vpack.c.b16 %v2104, %v2103
  %v2108 = vpack.c.b16 %v2106, %v2105
  %2111 = vmatprep.subr.bf16.mxu0 0
  %2112 = vmatpush1.bf16.msra.mxu0 %v2107
  %2113 = vmatprep.subr.bf16.mxu0 0
  %2114 = vmatpush1.bf16.msra.mxu0 %v2108
  %2115 = vmatprep.subr.bf16.mxu0 0
  %2116 = vmatpush1.bf16.msra.mxu0 0
  %2117 = vmatprep.subr.bf16.mxu0 0
  %2118 = vmatpush1.bf16.msra.mxu0 0
  %2119 = vmatprep.subr.bf16.mxu0 0
  %2120 = vmatpush1.bf16.msra.mxu0 0
  %2121 = vmatprep.subr.bf16.mxu0 0
  %2122 = vmatpush1.bf16.msra.mxu0 0
  %2123 = vmatprep.subr.bf16.mxu0 0
  %2124 = vmatpush1.bf16.msra.mxu0 0
  %2125 = vmatprep.subr.bf16.mxu0 0
  %2126 = vmatpush1.bf16.msra.mxu0 0
  %2127 = vmatprep.subr.bf16.mxu0 0
  %2128 = vmatpush1.bf16.msra.mxu0 0
  %2129 = vmatprep.subr.bf16.mxu0 0
  %2130 = vmatpush1.bf16.msra.mxu0 0
  %2131 = vmatprep.subr.bf16.mxu0 0
  %2132 = vmatpush1.bf16.msra.mxu0 0
  %2133 = vmatprep.subr.bf16.mxu0 0
  %2134 = vmatpush1.bf16.msra.mxu0 0
  %2135 = vmatprep.subr.bf16.mxu0 0
  %2136 = vmatpush1.bf16.msra.mxu0 0
  %2137 = vmatprep.subr.bf16.mxu0 0
  %2138 = vmatpush1.bf16.msra.mxu0 0
  %2139 = vmatprep.subr.bf16.mxu0 0
  %2140 = vmatpush1.bf16.msra.mxu0 0
  %2141 = vmatprep.subr.bf16.mxu0 0
  %2142 = vmatpush1.bf16.msra.mxu0 0
  %2143 = vmatprep.mubr.bf16.mxu0 0
  %2144 = vmatmul.mubr.bf16.gmra.mrb[0].mxu0 %v1779
  %v2145 = vpop.f32.mrb[0].mxu0
  %v2146 = vadd.f32 %v2097, %v2145
  %v2147 = vpop.f32.mrb[0].mxu0
  %v2148 = vpop.f32.mrb[0].mxu0
  %v2149 = vadd.f32 %v2097, %v2148
  %v2150 = vpop.f32.mrb[0].mxu0
  %2151 = vdwg.mxu0
  %v2152 = vpack.c.bf16 %v2149, %v2146
  %s2153 = scalar_lea.vmem %s9, 80
  %v2154 = vld [vmem:[%s2153] sm:$0xf]
  %v2155 = vld [vmem:[%s2153 + $0x4] sm:$0xf]
  %v2156 = vld [vmem:[%s2153 + $0x8] sm:$0xf]
  %v2157 = vld [vmem:[%s2153 + $0xc] sm:$0xf]
  %s2158 = scalar_lea.vmem %s10, 5
  %v2159 = vld [vmem:[%s2158] sm:$0x1]
  %v2161 = vlaneseq
  %v2162 = vshrl.u32 %v2161, 7
  %v2163 = vsub.s32 0, %v2162
  %v2164 = vrot.slane %v2159, %v2163
  %v2170 = vunpack.c.l.b16 %v2154
  %v2171 = vunpack.c.l.b16 %v2155
  %v2172 = vunpack.c.l.b16 %v2156
  %v2173 = vunpack.c.l.b16 %v2157
  %v2174 = vpack.c.b16 %v2171, %v2170
  %v2175 = vpack.c.b16 %v2173, %v2172
  %2178 = vmatprep.subr.bf16.mxu0 0
  %2179 = vmatpush1.bf16.msra.mxu0 %v2174
  %2180 = vmatprep.subr.bf16.mxu0 0
  %2181 = vmatpush1.bf16.msra.mxu0 %v2175
  %2182 = vmatprep.subr.bf16.mxu0 0
  %2183 = vmatpush1.bf16.msra.mxu0 0
  %2184 = vmatprep.subr.bf16.mxu0 0
  %2185 = vmatpush1.bf16.msra.mxu0 0
  %2186 = vmatprep.subr.bf16.mxu0 0
  %2187 = vmatpush1.bf16.msra.mxu0 0
  %2188 = vmatprep.subr.bf16.mxu0 0
  %2189 = vmatpush1.bf16.msra.mxu0 0
  %2190 = vmatprep.subr.bf16.mxu0 0
  %2191 = vmatpush1.bf16.msra.mxu0 0
  %2192 = vmatprep.subr.bf16.mxu0 0
  %2193 = vmatpush1.bf16.msra.mxu0 0
  %2194 = vmatprep.subr.bf16.mxu0 0
  %2195 = vmatpush1.bf16.msra.mxu0 0
  %2196 = vmatprep.subr.bf16.mxu0 0
  %2197 = vmatpush1.bf16.msra.mxu0 0
  %2198 = vmatprep.subr.bf16.mxu0 0
  %2199 = vmatpush1.bf16.msra.mxu0 0
  %2200 = vmatprep.subr.bf16.mxu0 0
  %2201 = vmatpush1.bf16.msra.mxu0 0
  %2202 = vmatprep.subr.bf16.mxu0 0
  %2203 = vmatpush1.bf16.msra.mxu0 0
  %2204 = vmatprep.subr.bf16.mxu0 0
  %2205 = vmatpush1.bf16.msra.mxu0 0
  %2206 = vmatprep.subr.bf16.mxu0 0
  %2207 = vmatpush1.bf16.msra.mxu0 0
  %2208 = vmatprep.subr.bf16.mxu0 0
  %2209 = vmatpush1.bf16.msra.mxu0 0
  %2210 = vmatprep.mubr.bf16.mxu0 0
  %2211 = vmatmul.mubr.bf16.gmra.mrb[0].mxu0 %v1779
  %v2212 = vpop.f32.mrb[0].mxu0
  %v2213 = vadd.f32 %v2164, %v2212
  %v2214 = vpop.f32.mrb[0].mxu0
  %v2215 = vpop.f32.mrb[0].mxu0
  %v2216 = vadd.f32 %v2164, %v2215
  %v2217 = vpop.f32.mrb[0].mxu0
  %2218 = vdwg.mxu0
  %v2219 = vpack.c.bf16 %v2216, %v2213
  %v2220 = vpack.c.bf16 %v1819, %v1819
  %v2222 = vsel %vm376, %v2152, 0
  %v2225 = vsel %vm380, %v2220, 0
  %2227 = vmatprep.subr.bf16.mxu0 0
  %2228 = vmatpush1.bf16.msra.mxu0 %v2225
  %2229 = vmatprep.subr.bf16.mxu0 0
  %2230 = vmatpush1.bf16.msra.mxu0 0
  %2231 = vmatprep.subr.bf16.mxu0 0
  %2232 = vmatpush1.bf16.msra.mxu0 0
  %2233 = vmatprep.subr.bf16.mxu0 0
  %2234 = vmatpush1.bf16.msra.mxu0 0
  %2235 = vmatprep.subr.bf16.mxu0 0
  %2236 = vmatpush1.bf16.msra.mxu0 0
  %2237 = vmatprep.subr.bf16.mxu0 0
  %2238 = vmatpush1.bf16.msra.mxu0 0
  %2239 = vmatprep.subr.bf16.mxu0 0
  %2240 = vmatpush1.bf16.msra.mxu0 0
  %2241 = vmatprep.subr.bf16.mxu0 0
  %2242 = vmatpush1.bf16.msra.mxu0 0
  %2243 = vmatprep.subr.bf16.mxu0 0
  %2244 = vmatpush1.bf16.msra.mxu0 0
  %2245 = vmatprep.subr.bf16.mxu0 0
  %2246 = vmatpush1.bf16.msra.mxu0 0
  %2247 = vmatprep.subr.bf16.mxu0 0
  %2248 = vmatpush1.bf16.msra.mxu0 0
  %2249 = vmatprep.subr.bf16.mxu0 0
  %2250 = vmatpush1.bf16.msra.mxu0 0
  %2251 = vmatprep.subr.bf16.mxu0 0
  %2252 = vmatpush1.bf16.msra.mxu0 0
  %2253 = vmatprep.subr.bf16.mxu0 0
  %2254 = vmatpush1.bf16.msra.mxu0 0
  %2255 = vmatprep.subr.bf16.mxu0 0
  %2256 = vmatpush1.bf16.msra.mxu0 0
  %2257 = vmatprep.subr.bf16.mxu0 0
  %2258 = vmatpush1.bf16.msra.mxu0 0
  %2259 = vmatprep.mubr.bf16.mxu0 0
  %2260 = vmatmul.mubr.bf16.gmra.mrb[0].mxu0 %v2222
  %v2261 = vpop.f32.mrb[0].mxu0
  %v2262 = vadd.f32 0.0, %v2261
  %v2263 = vpop.f32.mrb[0].mxu0
  %v2264 = vpop.f32.mrb[0].mxu0
  %v2265 = vadd.f32 0.0, %v2264
  %v2266 = vpop.f32.mrb[0].mxu0
  %2267 = vdwg.mxu0
  %v2268 = vmul.f32 %v2262, 0.35355338
  %v2269 = vmul.f32 %v2265, 0.35355338
  %v2270 = vadd.f32 %v2268, %v98
  %v2271 = vadd.f32 %v2269, %v99
  %v2272 = vsel %vm429, %v2270, -inf
  %2273 = vmax.xlane.f32.xlu0 %v2272
  %v2274 = vpop.xlane.xlu0 %2273
  %v2275 = vsel %vm429, %v2271, -inf
  %2276 = vmax.xlane.f32.xlu0 %v2275
  %v2277 = vpop.xlane.xlu0 %2276
  %v2278 = vsub.f32 %v2270, %v2274
  %v2279 = vsub.f32 %v2271, %v2277
  %v2280 = vmul.f32 %v2278, 1.442695
  %v2281 = vpow.pop %v2280
  %v2282 = vmul.f32 %v2279, 1.442695
  %v2283 = vpow.pop %v2282
  %v2284 = vsel %vm429, %v2281, 0.0
  %2285 = vadd.xlane.f32.xlu0 %v2284
  %v2286 = vpop.xlane.xlu0 %2285
  %v2287 = vsel %vm429, %v2283, 0.0
  %2288 = vadd.xlane.f32.xlu0 %v2287
  %v2289 = vpop.xlane.xlu0 %2288
  %v2290 = vrcp.pop %v2286
  %v2291 = vrcp.pop %v2289
  %v2292 = vmul.f32 %v2281, %v2290
  %v2293 = vmul.f32 %v2283, %v2291
  %v2294 = vpack.c.bf16 %v2293, %v2292
  %v2296 = vsel %vm429, %v2294, 0
  %2298 = vmatprep.subr.bf16.mxu0 0
  %2299 = vmatpush1.bf16.msra.mxu0 %v2219
  %2300 = vmatprep.subr.bf16.mxu0 0
  %2301 = vmatpush1.bf16.msra.mxu0 0
  %2302 = vmatprep.subr.bf16.mxu0 0
  %2303 = vmatpush1.bf16.msra.mxu0 0
  %2304 = vmatprep.subr.bf16.mxu0 0
  %2305 = vmatpush1.bf16.msra.mxu0 0
  %2306 = vmatprep.subr.bf16.mxu0 0
  %2307 = vmatpush1.bf16.msra.mxu0 0
  %2308 = vmatprep.subr.bf16.mxu0 0
  %2309 = vmatpush1.bf16.msra.mxu0 0
  %2310 = vmatprep.subr.bf16.mxu0 0
  %2311 = vmatpush1.bf16.msra.mxu0 0
  %2312 = vmatprep.subr.bf16.mxu0 0
  %2313 = vmatpush1.bf16.msra.mxu0 0
  %2314 = vmatprep.subr.bf16.mxu0 0
  %2315 = vmatpush1.bf16.msra.mxu0 0
  %2316 = vmatprep.subr.bf16.mxu0 0
  %2317 = vmatpush1.bf16.msra.mxu0 0
  %2318 = vmatprep.subr.bf16.mxu0 0
  %2319 = vmatpush1.bf16.msra.mxu0 0
  %2320 = vmatprep.subr.bf16.mxu0 0
  %2321 = vmatpush1.bf16.msra.mxu0 0
  %2322 = vmatprep.subr.bf16.mxu0 0
  %2323 = vmatpush1.bf16.msra.mxu0 0
  %2324 = vmatprep.subr.bf16.mxu0 0
  %2325 = vmatpush1.bf16.msra.mxu0 0
  %2326 = vmatprep.subr.bf16.mxu0 0
  %2327 = vmatpush1.bf16.msra.mxu0 0
  %2328 = vmatprep.subr.bf16.mxu0 0
  %2329 = vmatpush1.bf16.msra.mxu0 0
  %2330 = vmatprep.mubr.bf16.mxu0 0
  %2331 = vmatmul.mubr.bf16.gmra.mrb[0].mxu0 %v2296
  %v2332 = vpop.f32.mrb[0].mxu0
  %v2333 = vadd.f32 0.0, %v2332
  %v2334 = vpop.f32.mrb[0].mxu0
  %v2335 = vpop.f32.mrb[0].mxu0
  %v2336 = vadd.f32 0.0, %v2335
  %v2337 = vpop.f32.mrb[0].mxu0
  %2338 = vdwg.mxu0
  %v2339 = vpack.c.bf16 %v2336, %v2333
  %s2340 = scalar_lea.vmem %s11, 20
  %v2341 = vld [vmem:[%s2340] sm:$0xf]
  %v2343 = vsel %vm376, %v2339, 0
  %v2346 = vsel %vm380, %v2341, 0
  %2348 = vmatprep.subr.bf16.mxu0 0
  %2349 = vmatpush1.bf16.msra.mxu0 %v2346
  %2350 = vmatprep.subr.bf16.mxu0 0
  %2351 = vmatpush1.bf16.msra.mxu0 0
  %2352 = vmatprep.subr.bf16.mxu0 0
  %2353 = vmatpush1.bf16.msra.mxu0 0
  %2354 = vmatprep.subr.bf16.mxu0 0
  %2355 = vmatpush1.bf16.msra.mxu0 0
  %2356 = vmatprep.subr.bf16.mxu0 0
  %2357 = vmatpush1.bf16.msra.mxu0 0
  %2358 = vmatprep.subr.bf16.mxu0 0
  %2359 = vmatpush1.bf16.msra.mxu0 0
  %2360 = vmatprep.subr.bf16.mxu0 0
  %2361 = vmatpush1.bf16.msra.mxu0 0
  %2362 = vmatprep.subr.bf16.mxu0 0
  %2363 = vmatpush1.bf16.msra.mxu0 0
  %2364 = vmatprep.subr.bf16.mxu0 0
  %2365 = vmatpush1.bf16.msra.mxu0 0
  %2366 = vmatprep.subr.bf16.mxu0 0
  %2367 = vmatpush1.bf16.msra.mxu0 0
  %2368 = vmatprep.subr.bf16.mxu0 0
  %2369 = vmatpush1.bf16.msra.mxu0 0
  %2370 = vmatprep.subr.bf16.mxu0 0
  %2371 = vmatpush1.bf16.msra.mxu0 0
  %2372 = vmatprep.subr.bf16.mxu0 0
  %2373 = vmatpush1.bf16.msra.mxu0 0
  %2374 = vmatprep.subr.bf16.mxu0 0
  %2375 = vmatpush1.bf16.msra.mxu0 0
  %2376 = vmatprep.subr.bf16.mxu0 0
  %2377 = vmatpush1.bf16.msra.mxu0 0
  %2378 = vmatprep.subr.bf16.mxu0 0
  %2379 = vmatpush1.bf16.msra.mxu0 0
  %2380 = vmatprep.mubr.bf16.mxu0 0
  %2381 = vmatmul.mubr.bf16.gmra.mrb[0].mxu0 %v2343
  %v2382 = vpop.f32.mrb[0].mxu0
  %v2383 = vadd.f32 0.0, %v2382
  %v2384 = vpop.f32.mrb[0].mxu0
  %v2385 = vpop.f32.mrb[0].mxu0
  %v2386 = vadd.f32 0.0, %v2385
  %v2387 = vpop.f32.mrb[0].mxu0
  %2388 = vdwg.mxu0
  %v2390 = vsel %vm376, %v2083, 0
  %v2393 = vsel %vm380, %v2085, 0
  %2395 = vmatprep.subr.bf16.mxu0 0
  %2396 = vmatpush1.bf16.msra.mxu0 %v2393
  %2397 = vmatprep.subr.bf16.mxu0 0
  %2398 = vmatpush1.bf16.msra.mxu0 0
  %2399 = vmatprep.subr.bf16.mxu0 0
  %2400 = vmatpush1.bf16.msra.mxu0 0
  %2401 = vmatprep.subr.bf16.mxu0 0
  %2402 = vmatpush1.bf16.msra.mxu0 0
  %2403 = vmatprep.subr.bf16.mxu0 0
  %2404 = vmatpush1.bf16.msra.mxu0 0
  %2405 = vmatprep.subr.bf16.mxu0 0
  %2406 = vmatpush1.bf16.msra.mxu0 0
  %2407 = vmatprep.subr.bf16.mxu0 0
  %2408 = vmatpush1.bf16.msra.mxu0 0
  %2409 = vmatprep.subr.bf16.mxu0 0
  %2410 = vmatpush1.bf16.msra.mxu0 0
  %2411 = vmatprep.subr.bf16.mxu0 0
  %2412 = vmatpush1.bf16.msra.mxu0 0
  %2413 = vmatprep.subr.bf16.mxu0 0
  %2414 = vmatpush1.bf16.msra.mxu0 0
  %2415 = vmatprep.subr.bf16.mxu0 0
  %2416 = vmatpush1.bf16.msra.mxu0 0
  %2417 = vmatprep.subr.bf16.mxu0 0
  %2418 = vmatpush1.bf16.msra.mxu0 0
  %2419 = vmatprep.subr.bf16.mxu0 0
  %2420 = vmatpush1.bf16.msra.mxu0 0
  %2421 = vmatprep.subr.bf16.mxu0 0
  %2422 = vmatpush1.bf16.msra.mxu0 0
  %2423 = vmatprep.subr.bf16.mxu0 0
  %2424 = vmatpush1.bf16.msra.mxu0 0
  %2425 = vmatprep.subr.bf16.mxu0 0
  %2426 = vmatpush1.bf16.msra.mxu0 0
  %2427 = vmatprep.mubr.bf16.mxu0 0
  %2428 = vmatmul.mubr.bf16.gmra.mrb[0].mxu0 %v2390
  %v2429 = vpop.f32.mrb[0].mxu0
  %v2430 = vadd.f32 %v2383, %v2429
  %v2431 = vpop.f32.mrb[0].mxu0
  %v2432 = vpop.f32.mrb[0].mxu0
  %v2433 = vadd.f32 %v2386, %v2432
  %v2434 = vpop.f32.mrb[0].mxu0
  %2435 = vdwg.mxu0
  %s2436 = scalar_lea.vmem %s5, 96
  %v2437 = vld [vmem:[%s2436] sm:$0xf]
  %v2438 = vld [vmem:[%s2436 + $0x4] sm:$0xf]
  %v2439 = vld [vmem:[%s2436 + $0x8] sm:$0xf]
  %v2440 = vld [vmem:[%s2436 + $0xc] sm:$0xf]
  %s2441 = scalar_lea.vmem %s6, 6
  %v2442 = vld [vmem:[%s2441] sm:$0x1]
  %v2444 = vlaneseq
  %v2445 = vshrl.u32 %v2444, 7
  %v2446 = vsub.s32 0, %v2445
  %v2447 = vrot.slane %v2442, %v2446
  %v2453 = vunpack.c.l.b16 %v2437
  %v2454 = vunpack.c.l.b16 %v2438
  %v2455 = vunpack.c.l.b16 %v2439
  %v2456 = vunpack.c.l.b16 %v2440
  %v2457 = vpack.c.b16 %v2454, %v2453
  %v2458 = vpack.c.b16 %v2456, %v2455
  %2461 = vmatprep.subr.bf16.mxu0 0
  %2462 = vmatpush1.bf16.msra.mxu0 %v2457
  %2463 = vmatprep.subr.bf16.mxu0 0
  %2464 = vmatpush1.bf16.msra.mxu0 %v2458
  %2465 = vmatprep.subr.bf16.mxu0 0
  %2466 = vmatpush1.bf16.msra.mxu0 0
  %2467 = vmatprep.subr.bf16.mxu0 0
  %2468 = vmatpush1.bf16.msra.mxu0 0
  %2469 = vmatprep.subr.bf16.mxu0 0
  %2470 = vmatpush1.bf16.msra.mxu0 0
  %2471 = vmatprep.subr.bf16.mxu0 0
  %2472 = vmatpush1.bf16.msra.mxu0 0
  %2473 = vmatprep.subr.bf16.mxu0 0
  %2474 = vmatpush1.bf16.msra.mxu0 0
  %2475 = vmatprep.subr.bf16.mxu0 0
  %2476 = vmatpush1.bf16.msra.mxu0 0
  %2477 = vmatprep.subr.bf16.mxu0 0
  %2478 = vmatpush1.bf16.msra.mxu0 0
  %2479 = vmatprep.subr.bf16.mxu0 0
  %2480 = vmatpush1.bf16.msra.mxu0 0
  %2481 = vmatprep.subr.bf16.mxu0 0
  %2482 = vmatpush1.bf16.msra.mxu0 0
  %2483 = vmatprep.subr.bf16.mxu0 0
  %2484 = vmatpush1.bf16.msra.mxu0 0
  %2485 = vmatprep.subr.bf16.mxu0 0
  %2486 = vmatpush1.bf16.msra.mxu0 0
  %2487 = vmatprep.subr.bf16.mxu0 0
  %2488 = vmatpush1.bf16.msra.mxu0 0
  %2489 = vmatprep.subr.bf16.mxu0 0
  %2490 = vmatpush1.bf16.msra.mxu0 0
  %2491 = vmatprep.subr.bf16.mxu0 0
  %2492 = vmatpush1.bf16.msra.mxu0 0
  %2493 = vmatprep.mubr.bf16.mxu0 0
  %2494 = vmatmul.mubr.bf16.gmra.mrb[0].mxu0 %v1779
  %v2495 = vpop.f32.mrb[0].mxu0
  %v2496 = vadd.f32 %v2447, %v2495
  %v2497 = vpop.f32.mrb[0].mxu0
  %v2498 = vpop.f32.mrb[0].mxu0
  %v2499 = vadd.f32 %v2447, %v2498
  %v2500 = vpop.f32.mrb[0].mxu0
  %2501 = vdwg.mxu0
  %v2502 = vpack.c.bf16 %v2499, %v2496
  %s2503 = scalar_lea.vmem %s9, 96
  %v2504 = vld [vmem:[%s2503] sm:$0xf]
  %v2505 = vld [vmem:[%s2503 + $0x4] sm:$0xf]
  %v2506 = vld [vmem:[%s2503 + $0x8] sm:$0xf]
  %v2507 = vld [vmem:[%s2503 + $0xc] sm:$0xf]
  %s2508 = scalar_lea.vmem %s10, 6
  %v2509 = vld [vmem:[%s2508] sm:$0x1]
  %v2511 = vlaneseq
  %v2512 = vshrl.u32 %v2511, 7
  %v2513 = vsub.s32 0, %v2512
  %v2514 = vrot.slane %v2509, %v2513
  %v2520 = vunpack.c.l.b16 %v2504
  %v2521 = vunpack.c.l.b16 %v2505
  %v2522 = vunpack.c.l.b16 %v2506
  %v2523 = vunpack.c.l.b16 %v2507
  %v2524 = vpack.c.b16 %v2521, %v2520
  %v2525 = vpack.c.b16 %v2523, %v2522
  %2528 = vmatprep.subr.bf16.mxu0 0
  %2529 = vmatpush1.bf16.msra.mxu0 %v2524
  %2530 = vmatprep.subr.bf16.mxu0 0
  %2531 = vmatpush1.bf16.msra.mxu0 %v2525
  %2532 = vmatprep.subr.bf16.mxu0 0
  %2533 = vmatpush1.bf16.msra.mxu0 0
  %2534 = vmatprep.subr.bf16.mxu0 0
  %2535 = vmatpush1.bf16.msra.mxu0 0
  %2536 = vmatprep.subr.bf16.mxu0 0
  %2537 = vmatpush1.bf16.msra.mxu0 0
  %2538 = vmatprep.subr.bf16.mxu0 0
  %2539 = vmatpush1.bf16.msra.mxu0 0
  %2540 = vmatprep.subr.bf16.mxu0 0
  %2541 = vmatpush1.bf16.msra.mxu0 0
  %2542 = vmatprep.subr.bf16.mxu0 0
  %2543 = vmatpush1.bf16.msra.mxu0 0
  %2544 = vmatprep.subr.bf16.mxu0 0
  %2545 = vmatpush1.bf16.msra.mxu0 0
  %2546 = vmatprep.subr.bf16.mxu0 0
  %2547 = vmatpush1.bf16.msra.mxu0 0
  %2548 = vmatprep.subr.bf16.mxu0 0
  %2549 = vmatpush1.bf16.msra.mxu0 0
  %2550 = vmatprep.subr.bf16.mxu0 0
  %2551 = vmatpush1.bf16.msra.mxu0 0
  %2552 = vmatprep.subr.bf16.mxu0 0
  %2553 = vmatpush1.bf16.msra.mxu0 0
  %2554 = vmatprep.subr.bf16.mxu0 0
  %2555 = vmatpush1.bf16.msra.mxu0 0
  %2556 = vmatprep.subr.bf16.mxu0 0
  %2557 = vmatpush1.bf16.msra.mxu0 0
  %2558 = vmatprep.subr.bf16.mxu0 0
  %2559 = vmatpush1.bf16.msra.mxu0 0
  %2560 = vmatprep.mubr.bf16.mxu0 0
  %2561 = vmatmul.mubr.bf16.gmra.mrb[0].mxu0 %v1779
  %v2562 = vpop.f32.mrb[0].mxu0
  %v2563 = vadd.f32 %v2514, %v2562
  %v2564 = vpop.f32.mrb[0].mxu0
  %v2565 = vpop.f32.mrb[0].mxu0
  %v2566 = vadd.f32 %v2514, %v2565
  %v2567 = vpop.f32.mrb[0].mxu0
  %2568 = vdwg.mxu0
  %v2569 = vpack.c.bf16 %v2566, %v2563
  %v2570 = vpack.c.bf16 %v1824, %v1824
  %v2572 = vsel %vm376, %v2502, 0
  %v2575 = vsel %vm380, %v2570, 0
  %2577 = vmatprep.subr.bf16.mxu0 0
  %2578 = vmatpush1.bf16.msra.mxu0 %v2575
  %2579 = vmatprep.subr.bf16.mxu0 0
  %2580 = vmatpush1.bf16.msra.mxu0 0
  %2581 = vmatprep.subr.bf16.mxu0 0
  %2582 = vmatpush1.bf16.msra.mxu0 0
  %2583 = vmatprep.subr.bf16.mxu0 0
  %2584 = vmatpush1.bf16.msra.mxu0 0
  %2585 = vmatprep.subr.bf16.mxu0 0
  %2586 = vmatpush1.bf16.msra.mxu0 0
  %2587 = vmatprep.subr.bf16.mxu0 0
  %2588 = vmatpush1.bf16.msra.mxu0 0
  %2589 = vmatprep.subr.bf16.mxu0 0
  %2590 = vmatpush1.bf16.msra.mxu0 0
  %2591 = vmatprep.subr.bf16.mxu0 0
  %2592 = vmatpush1.bf16.msra.mxu0 0
  %2593 = vmatprep.subr.bf16.mxu0 0
  %2594 = vmatpush1.bf16.msra.mxu0 0
  %2595 = vmatprep.subr.bf16.mxu0 0
  %2596 = vmatpush1.bf16.msra.mxu0 0
  %2597 = vmatprep.subr.bf16.mxu0 0
  %2598 = vmatpush1.bf16.msra.mxu0 0
  %2599 = vmatprep.subr.bf16.mxu0 0
  %2600 = vmatpush1.bf16.msra.mxu0 0
  %2601 = vmatprep.subr.bf16.mxu0 0
  %2602 = vmatpush1.bf16.msra.mxu0 0
  %2603 = vmatprep.subr.bf16.mxu0 0
  %2604 = vmatpush1.bf16.msra.mxu0 0
  %2605 = vmatprep.subr.bf16.mxu0 0
  %2606 = vmatpush1.bf16.msra.mxu0 0
  %2607 = vmatprep.subr.bf16.mxu0 0
  %2608 = vmatpush1.bf16.msra.mxu0 0
  %2609 = vmatprep.mubr.bf16.mxu0 0
  %2610 = vmatmul.mubr.bf16.gmra.mrb[0].mxu0 %v2572
  %v2611 = vpop.f32.mrb[0].mxu0
  %v2612 = vadd.f32 0.0, %v2611
  %v2613 = vpop.f32.mrb[0].mxu0
  %v2614 = vpop.f32.mrb[0].mxu0
  %v2615 = vadd.f32 0.0, %v2614
  %v2616 = vpop.f32.mrb[0].mxu0
  %2617 = vdwg.mxu0
  %v2618 = vmul.f32 %v2612, 0.35355338
  %v2619 = vmul.f32 %v2615, 0.35355338
  %v2620 = vadd.f32 %v2618, %v98
  %v2621 = vadd.f32 %v2619, %v99
  %v2622 = vsel %vm429, %v2620, -inf
  %2623 = vmax.xlane.f32.xlu0 %v2622
  %v2624 = vpop.xlane.xlu0 %2623
  %v2625 = vsel %vm429, %v2621, -inf
  %2626 = vmax.xlane.f32.xlu0 %v2625
  %v2627 = vpop.xlane.xlu0 %2626
  %v2628 = vsub.f32 %v2620, %v2624
  %v2629 = vsub.f32 %v2621, %v2627
  %v2630 = vmul.f32 %v2628, 1.442695
  %v2631 = vpow.pop %v2630
  %v2632 = vmul.f32 %v2629, 1.442695
  %v2633 = vpow.pop %v2632
  %v2634 = vsel %vm429, %v2631, 0.0
  %2635 = vadd.xlane.f32.xlu0 %v2634
  %v2636 = vpop.xlane.xlu0 %2635
  %v2637 = vsel %vm429, %v2633, 0.0
  %2638 = vadd.xlane.f32.xlu0 %v2637
  %v2639 = vpop.xlane.xlu0 %2638
  %v2640 = vrcp.pop %v2636
  %v2641 = vrcp.pop %v2639
  %v2642 = vmul.f32 %v2631, %v2640
  %v2643 = vmul.f32 %v2633, %v2641
  %v2644 = vpack.c.bf16 %v2643, %v2642
  %v2646 = vsel %vm429, %v2644, 0
  %2648 = vmatprep.subr.bf16.mxu0 0
  %2649 = vmatpush1.bf16.msra.mxu0 %v2569
  %2650 = vmatprep.subr.bf16.mxu0 0
  %2651 = vmatpush1.bf16.msra.mxu0 0
  %2652 = vmatprep.subr.bf16.mxu0 0
  %2653 = vmatpush1.bf16.msra.mxu0 0
  %2654 = vmatprep.subr.bf16.mxu0 0
  %2655 = vmatpush1.bf16.msra.mxu0 0
  %2656 = vmatprep.subr.bf16.mxu0 0
  %2657 = vmatpush1.bf16.msra.mxu0 0
  %2658 = vmatprep.subr.bf16.mxu0 0
  %2659 = vmatpush1.bf16.msra.mxu0 0
  %2660 = vmatprep.subr.bf16.mxu0 0
  %2661 = vmatpush1.bf16.msra.mxu0 0
  %2662 = vmatprep.subr.bf16.mxu0 0
  %2663 = vmatpush1.bf16.msra.mxu0 0
  %2664 = vmatprep.subr.bf16.mxu0 0
  %2665 = vmatpush1.bf16.msra.mxu0 0
  %2666 = vmatprep.subr.bf16.mxu0 0
  %2667 = vmatpush1.bf16.msra.mxu0 0
  %2668 = vmatprep.subr.bf16.mxu0 0
  %2669 = vmatpush1.bf16.msra.mxu0 0
  %2670 = vmatprep.subr.bf16.mxu0 0
  %2671 = vmatpush1.bf16.msra.mxu0 0
  %2672 = vmatprep.subr.bf16.mxu0 0
  %2673 = vmatpush1.bf16.msra.mxu0 0
  %2674 = vmatprep.subr.bf16.mxu0 0
  %2675 = vmatpush1.bf16.msra.mxu0 0
  %2676 = vmatprep.subr.bf16.mxu0 0
  %2677 = vmatpush1.bf16.msra.mxu0 0
  %2678 = vmatprep.subr.bf16.mxu0 0
  %2679 = vmatpush1.bf16.msra.mxu0 0
  %2680 = vmatprep.mubr.bf16.mxu0 0
  %2681 = vmatmul.mubr.bf16.gmra.mrb[0].mxu0 %v2646
  %v2682 = vpop.f32.mrb[0].mxu0
  %v2683 = vadd.f32 0.0, %v2682
  %v2684 = vpop.f32.mrb[0].mxu0
  %v2685 = vpop.f32.mrb[0].mxu0
  %v2686 = vadd.f32 0.0, %v2685
  %v2687 = vpop.f32.mrb[0].mxu0
  %2688 = vdwg.mxu0
  %v2689 = vpack.c.bf16 %v2686, %v2683
  %s2690 = scalar_lea.vmem %s11, 24
  %v2691 = vld [vmem:[%s2690] sm:$0xf]
  %v2693 = vsel %vm376, %v2689, 0
  %v2696 = vsel %vm380, %v2691, 0
  %2698 = vmatprep.subr.bf16.mxu0 0
  %2699 = vmatpush1.bf16.msra.mxu0 %v2696
  %2700 = vmatprep.subr.bf16.mxu0 0
  %2701 = vmatpush1.bf16.msra.mxu0 0
  %2702 = vmatprep.subr.bf16.mxu0 0
  %2703 = vmatpush1.bf16.msra.mxu0 0
  %2704 = vmatprep.subr.bf16.mxu0 0
  %2705 = vmatpush1.bf16.msra.mxu0 0
  %2706 = vmatprep.subr.bf16.mxu0 0
  %2707 = vmatpush1.bf16.msra.mxu0 0
  %2708 = vmatprep.subr.bf16.mxu0 0
  %2709 = vmatpush1.bf16.msra.mxu0 0
  %2710 = vmatprep.subr.bf16.mxu0 0
  %2711 = vmatpush1.bf16.msra.mxu0 0
  %2712 = vmatprep.subr.bf16.mxu0 0
  %2713 = vmatpush1.bf16.msra.mxu0 0
  %2714 = vmatprep.subr.bf16.mxu0 0
  %2715 = vmatpush1.bf16.msra.mxu0 0
  %2716 = vmatprep.subr.bf16.mxu0 0
  %2717 = vmatpush1.bf16.msra.mxu0 0
  %2718 = vmatprep.subr.bf16.mxu0 0
  %2719 = vmatpush1.bf16.msra.mxu0 0
  %2720 = vmatprep.subr.bf16.mxu0 0
  %2721 = vmatpush1.bf16.msra.mxu0 0
  %2722 = vmatprep.subr.bf16.mxu0 0
  %2723 = vmatpush1.bf16.msra.mxu0 0
  %2724 = vmatprep.subr.bf16.mxu0 0
  %2725 = vmatpush1.bf16.msra.mxu0 0
  %2726 = vmatprep.subr.bf16.mxu0 0
  %2727 = vmatpush1.bf16.msra.mxu0 0
  %2728 = vmatprep.subr.bf16.mxu0 0
  %2729 = vmatpush1.bf16.msra.mxu0 0
  %2730 = vmatprep.mubr.bf16.mxu0 0
  %2731 = vmatmul.mubr.bf16.gmra.mrb[0].mxu0 %v2693
  %v2732 = vpop.f32.mrb[0].mxu0
  %v2733 = vadd.f32 0.0, %v2732
  %v2734 = vpop.f32.mrb[0].mxu0
  %v2735 = vpop.f32.mrb[0].mxu0
  %v2736 = vadd.f32 0.0, %v2735
  %v2737 = vpop.f32.mrb[0].mxu0
  %2738 = vdwg.mxu0
  %v2739 = vadd.f32 %v2430, %v2733
  %v2740 = vadd.f32 %v2433, %v2736
  %s2741 = scalar_lea.vmem %s5, 112
  %v2742 = vld [vmem:[%s2741] sm:$0xf]
  %v2743 = vld [vmem:[%s2741 + $0x4] sm:$0xf]
  %v2744 = vld [vmem:[%s2741 + $0x8] sm:$0xf]
  %v2745 = vld [vmem:[%s2741 + $0xc] sm:$0xf]
  %s2746 = scalar_lea.vmem %s6, 7
  %v2747 = vld [vmem:[%s2746] sm:$0x1]
  %v2749 = vlaneseq
  %v2750 = vshrl.u32 %v2749, 7
  %v2751 = vsub.s32 0, %v2750
  %v2752 = vrot.slane %v2747, %v2751
  %v2758 = vunpack.c.l.b16 %v2742
  %v2759 = vunpack.c.l.b16 %v2743
  %v2760 = vunpack.c.l.b16 %v2744
  %v2761 = vunpack.c.l.b16 %v2745
  %v2762 = vpack.c.b16 %v2759, %v2758
  %v2763 = vpack.c.b16 %v2761, %v2760
  %2766 = vmatprep.subr.bf16.mxu0 0
  %2767 = vmatpush1.bf16.msra.mxu0 %v2762
  %2768 = vmatprep.subr.bf16.mxu0 0
  %2769 = vmatpush1.bf16.msra.mxu0 %v2763
  %2770 = vmatprep.subr.bf16.mxu0 0
  %2771 = vmatpush1.bf16.msra.mxu0 0
  %2772 = vmatprep.subr.bf16.mxu0 0
  %2773 = vmatpush1.bf16.msra.mxu0 0
  %2774 = vmatprep.subr.bf16.mxu0 0
  %2775 = vmatpush1.bf16.msra.mxu0 0
  %2776 = vmatprep.subr.bf16.mxu0 0
  %2777 = vmatpush1.bf16.msra.mxu0 0
  %2778 = vmatprep.subr.bf16.mxu0 0
  %2779 = vmatpush1.bf16.msra.mxu0 0
  %2780 = vmatprep.subr.bf16.mxu0 0
  %2781 = vmatpush1.bf16.msra.mxu0 0
  %2782 = vmatprep.subr.bf16.mxu0 0
  %2783 = vmatpush1.bf16.msra.mxu0 0
  %2784 = vmatprep.subr.bf16.mxu0 0
  %2785 = vmatpush1.bf16.msra.mxu0 0
  %2786 = vmatprep.subr.bf16.mxu0 0
  %2787 = vmatpush1.bf16.msra.mxu0 0
  %2788 = vmatprep.subr.bf16.mxu0 0
  %2789 = vmatpush1.bf16.msra.mxu0 0
  %2790 = vmatprep.subr.bf16.mxu0 0
  %2791 = vmatpush1.bf16.msra.mxu0 0
  %2792 = vmatprep.subr.bf16.mxu0 0
  %2793 = vmatpush1.bf16.msra.mxu0 0
  %2794 = vmatprep.subr.bf16.mxu0 0
  %2795 = vmatpush1.bf16.msra.mxu0 0
  %2796 = vmatprep.subr.bf16.mxu0 0
  %2797 = vmatpush1.bf16.msra.mxu0 0
  %2798 = vmatprep.mubr.bf16.mxu0 0
  %2799 = vmatmul.mubr.bf16.gmra.mrb[0].mxu0 %v1779
  %v2800 = vpop.f32.mrb[0].mxu0
  %v2801 = vadd.f32 %v2752, %v2800
  %v2802 = vpop.f32.mrb[0].mxu0
  %v2803 = vpop.f32.mrb[0].mxu0
  %v2804 = vadd.f32 %v2752, %v2803
  %v2805 = vpop.f32.mrb[0].mxu0
  %2806 = vdwg.mxu0
  %v2807 = vpack.c.bf16 %v2804, %v2801
  %s2808 = scalar_lea.vmem %s9, 112
  %v2809 = vld [vmem:[%s2808] sm:$0xf]
  %v2810 = vld [vmem:[%s2808 + $0x4] sm:$0xf]
  %v2811 = vld [vmem:[%s2808 + $0x8] sm:$0xf]
  %v2812 = vld [vmem:[%s2808 + $0xc] sm:$0xf]
  %s2813 = scalar_lea.vmem %s10, 7
  %v2814 = vld [vmem:[%s2813] sm:$0x1]
  %v2816 = vlaneseq
  %v2817 = vshrl.u32 %v2816, 7
  %v2818 = vsub.s32 0, %v2817
  %v2819 = vrot.slane %v2814, %v2818
  %v2825 = vunpack.c.l.b16 %v2809
  %v2826 = vunpack.c.l.b16 %v2810
  %v2827 = vunpack.c.l.b16 %v2811
  %v2828 = vunpack.c.l.b16 %v2812
  %v2829 = vpack.c.b16 %v2826, %v2825
  %v2830 = vpack.c.b16 %v2828, %v2827
  %2833 = vmatprep.subr.bf16.mxu0 0
  %2834 = vmatpush1.bf16.msra.mxu0 %v2829
  %2835 = vmatprep.subr.bf16.mxu0 0
  %2836 = vmatpush1.bf16.msra.mxu0 %v2830
  %2837 = vmatprep.subr.bf16.mxu0 0
  %2838 = vmatpush1.bf16.msra.mxu0 0
  %2839 = vmatprep.subr.bf16.mxu0 0
  %2840 = vmatpush1.bf16.msra.mxu0 0
  %2841 = vmatprep.subr.bf16.mxu0 0
  %2842 = vmatpush1.bf16.msra.mxu0 0
  %2843 = vmatprep.subr.bf16.mxu0 0
  %2844 = vmatpush1.bf16.msra.mxu0 0
  %2845 = vmatprep.subr.bf16.mxu0 0
  %2846 = vmatpush1.bf16.msra.mxu0 0
  %2847 = vmatprep.subr.bf16.mxu0 0
  %2848 = vmatpush1.bf16.msra.mxu0 0
  %2849 = vmatprep.subr.bf16.mxu0 0
  %2850 = vmatpush1.bf16.msra.mxu0 0
  %2851 = vmatprep.subr.bf16.mxu0 0
  %2852 = vmatpush1.bf16.msra.mxu0 0
  %2853 = vmatprep.subr.bf16.mxu0 0
  %2854 = vmatpush1.bf16.msra.mxu0 0
  %2855 = vmatprep.subr.bf16.mxu0 0
  %2856 = vmatpush1.bf16.msra.mxu0 0
  %2857 = vmatprep.subr.bf16.mxu0 0
  %2858 = vmatpush1.bf16.msra.mxu0 0
  %2859 = vmatprep.subr.bf16.mxu0 0
  %2860 = vmatpush1.bf16.msra.mxu0 0
  %2861 = vmatprep.subr.bf16.mxu0 0
  %2862 = vmatpush1.bf16.msra.mxu0 0
  %2863 = vmatprep.subr.bf16.mxu0 0
  %2864 = vmatpush1.bf16.msra.mxu0 0
  %2865 = vmatprep.mubr.bf16.mxu0 0
  %2866 = vmatmul.mubr.bf16.gmra.mrb[0].mxu0 %v1779
  %v2867 = vpop.f32.mrb[0].mxu0
  %v2868 = vadd.f32 %v2819, %v2867
  %v2869 = vpop.f32.mrb[0].mxu0
  %v2870 = vpop.f32.mrb[0].mxu0
  %v2871 = vadd.f32 %v2819, %v2870
  %v2872 = vpop.f32.mrb[0].mxu0
  %2873 = vdwg.mxu0
  %v2874 = vpack.c.bf16 %v2871, %v2868
  %v2875 = vpack.c.bf16 %v1827, %v1827
  %v2877 = vsel %vm376, %v2807, 0
  %v2880 = vsel %vm380, %v2875, 0
  %2882 = vmatprep.subr.bf16.mxu0 0
  %2883 = vmatpush1.bf16.msra.mxu0 %v2880
  %2884 = vmatprep.subr.bf16.mxu0 0
  %2885 = vmatpush1.bf16.msra.mxu0 0
  %2886 = vmatprep.subr.bf16.mxu0 0
  %2887 = vmatpush1.bf16.msra.mxu0 0
  %2888 = vmatprep.subr.bf16.mxu0 0
  %2889 = vmatpush1.bf16.msra.mxu0 0
  %2890 = vmatprep.subr.bf16.mxu0 0
  %2891 = vmatpush1.bf16.msra.mxu0 0
  %2892 = vmatprep.subr.bf16.mxu0 0
  %2893 = vmatpush1.bf16.msra.mxu0 0
  %2894 = vmatprep.subr.bf16.mxu0 0
  %2895 = vmatpush1.bf16.msra.mxu0 0
  %2896 = vmatprep.subr.bf16.mxu0 0
  %2897 = vmatpush1.bf16.msra.mxu0 0
  %2898 = vmatprep.subr.bf16.mxu0 0
  %2899 = vmatpush1.bf16.msra.mxu0 0
  %2900 = vmatprep.subr.bf16.mxu0 0
  %2901 = vmatpush1.bf16.msra.mxu0 0
  %2902 = vmatprep.subr.bf16.mxu0 0
  %2903 = vmatpush1.bf16.msra.mxu0 0
  %2904 = vmatprep.subr.bf16.mxu0 0
  %2905 = vmatpush1.bf16.msra.mxu0 0
  %2906 = vmatprep.subr.bf16.mxu0 0
  %2907 = vmatpush1.bf16.msra.mxu0 0
  %2908 = vmatprep.subr.bf16.mxu0 0
  %2909 = vmatpush1.bf16.msra.mxu0 0
  %2910 = vmatprep.subr.bf16.mxu0 0
  %2911 = vmatpush1.bf16.msra.mxu0 0
  %2912 = vmatprep.subr.bf16.mxu0 0
  %2913 = vmatpush1.bf16.msra.mxu0 0
  %2914 = vmatprep.mubr.bf16.mxu0 0
  %2915 = vmatmul.mubr.bf16.gmra.mrb[0].mxu0 %v2877
  %v2916 = vpop.f32.mrb[0].mxu0
  %v2917 = vadd.f32 0.0, %v2916
  %v2918 = vpop.f32.mrb[0].mxu0
  %v2919 = vpop.f32.mrb[0].mxu0
  %v2920 = vadd.f32 0.0, %v2919
  %v2921 = vpop.f32.mrb[0].mxu0
  %2922 = vdwg.mxu0
  %v2923 = vmul.f32 %v2917, 0.35355338
  %v2924 = vmul.f32 %v2920, 0.35355338
  %v2925 = vadd.f32 %v2923, %v98
  %v2926 = vadd.f32 %v2924, %v99
  %v2927 = vsel %vm429, %v2925, -inf
  %2928 = vmax.xlane.f32.xlu0 %v2927
  %v2929 = vpop.xlane.xlu0 %2928
  %v2930 = vsel %vm429, %v2926, -inf
  %2931 = vmax.xlane.f32.xlu0 %v2930
  %v2932 = vpop.xlane.xlu0 %2931
  %v2933 = vsub.f32 %v2925, %v2929
  %v2934 = vsub.f32 %v2926, %v2932
  %v2935 = vmul.f32 %v2933, 1.442695
  %v2936 = vpow.pop %v2935
  %v2937 = vmul.f32 %v2934, 1.442695
  %v2938 = vpow.pop %v2937
  %v2939 = vsel %vm429, %v2936, 0.0
  %2940 = vadd.xlane.f32.xlu0 %v2939
  %v2941 = vpop.xlane.xlu0 %2940
  %v2942 = vsel %vm429, %v2938, 0.0
  %2943 = vadd.xlane.f32.xlu0 %v2942
  %v2944 = vpop.xlane.xlu0 %2943
  %v2945 = vrcp.pop %v2941
  %v2946 = vrcp.pop %v2944
  %v2947 = vmul.f32 %v2936, %v2945
  %v2948 = vmul.f32 %v2938, %v2946
  %v2949 = vpack.c.bf16 %v2948, %v2947
  %v2951 = vsel %vm429, %v2949, 0
  %2953 = vmatprep.subr.bf16.mxu0 0
  %2954 = vmatpush1.bf16.msra.mxu0 %v2874
  %2955 = vmatprep.subr.bf16.mxu0 0
  %2956 = vmatpush1.bf16.msra.mxu0 0
  %2957 = vmatprep.subr.bf16.mxu0 0
  %2958 = vmatpush1.bf16.msra.mxu0 0
  %2959 = vmatprep.subr.bf16.mxu0 0
  %2960 = vmatpush1.bf16.msra.mxu0 0
  %2961 = vmatprep.subr.bf16.mxu0 0
  %2962 = vmatpush1.bf16.msra.mxu0 0
  %2963 = vmatprep.subr.bf16.mxu0 0
  %2964 = vmatpush1.bf16.msra.mxu0 0
  %2965 = vmatprep.subr.bf16.mxu0 0
  %2966 = vmatpush1.bf16.msra.mxu0 0
  %2967 = vmatprep.subr.bf16.mxu0 0
  %2968 = vmatpush1.bf16.msra.mxu0 0
  %2969 = vmatprep.subr.bf16.mxu0 0
  %2970 = vmatpush1.bf16.msra.mxu0 0
  %2971 = vmatprep.subr.bf16.mxu0 0
  %2972 = vmatpush1.bf16.msra.mxu0 0
  %2973 = vmatprep.subr.bf16.mxu0 0
  %2974 = vmatpush1.bf16.msra.mxu0 0
  %2975 = vmatprep.subr.bf16.mxu0 0
  %2976 = vmatpush1.bf16.msra.mxu0 0
  %2977 = vmatprep.subr.bf16.mxu0 0
  %2978 = vmatpush1.bf16.msra.mxu0 0
  %2979 = vmatprep.subr.bf16.mxu0 0
  %2980 = vmatpush1.bf16.msra.mxu0 0
  %2981 = vmatprep.subr.bf16.mxu0 0
  %2982 = vmatpush1.bf16.msra.mxu0 0
  %2983 = vmatprep.subr.bf16.mxu0 0
  %2984 = vmatpush1.bf16.msra.mxu0 0
  %2985 = vmatprep.mubr.bf16.mxu0 0
  %2986 = vmatmul.mubr.bf16.gmra.mrb[0].mxu0 %v2951
  %v2987 = vpop.f32.mrb[0].mxu0
  %v2988 = vadd.f32 0.0, %v2987
  %v2989 = vpop.f32.mrb[0].mxu0
  %v2990 = vpop.f32.mrb[0].mxu0
  %v2991 = vadd.f32 0.0, %v2990
  %v2992 = vpop.f32.mrb[0].mxu0
  %2993 = vdwg.mxu0
  %v2994 = vpack.c.bf16 %v2991, %v2988
  %s2995 = scalar_lea.vmem %s11, 28
  %v2996 = vld [vmem:[%s2995] sm:$0xf]
  %v2998 = vsel %vm376, %v2994, 0
  %v3001 = vsel %vm380, %v2996, 0
  %3003 = vmatprep.subr.bf16.mxu0 0
  %3004 = vmatpush1.bf16.msra.mxu0 %v3001
  %3005 = vmatprep.subr.bf16.mxu0 0
  %3006 = vmatpush1.bf16.msra.mxu0 0
  %3007 = vmatprep.subr.bf16.mxu0 0
  %3008 = vmatpush1.bf16.msra.mxu0 0
  %3009 = vmatprep.subr.bf16.mxu0 0
  %3010 = vmatpush1.bf16.msra.mxu0 0
  %3011 = vmatprep.subr.bf16.mxu0 0
  %3012 = vmatpush1.bf16.msra.mxu0 0
  %3013 = vmatprep.subr.bf16.mxu0 0
  %3014 = vmatpush1.bf16.msra.mxu0 0
  %3015 = vmatprep.subr.bf16.mxu0 0
  %3016 = vmatpush1.bf16.msra.mxu0 0
  %3017 = vmatprep.subr.bf16.mxu0 0
  %3018 = vmatpush1.bf16.msra.mxu0 0
  %3019 = vmatprep.subr.bf16.mxu0 0
  %3020 = vmatpush1.bf16.msra.mxu0 0
  %3021 = vmatprep.subr.bf16.mxu0 0
  %3022 = vmatpush1.bf16.msra.mxu0 0
  %3023 = vmatprep.subr.bf16.mxu0 0
  %3024 = vmatpush1.bf16.msra.mxu0 0
  %3025 = vmatprep.subr.bf16.mxu0 0
  %3026 = vmatpush1.bf16.msra.mxu0 0
  %3027 = vmatprep.subr.bf16.mxu0 0
  %3028 = vmatpush1.bf16.msra.mxu0 0
  %3029 = vmatprep.subr.bf16.mxu0 0
  %3030 = vmatpush1.bf16.msra.mxu0 0
  %3031 = vmatprep.subr.bf16.mxu0 0
  %3032 = vmatpush1.bf16.msra.mxu0 0
  %3033 = vmatprep.subr.bf16.mxu0 0
  %3034 = vmatpush1.bf16.msra.mxu0 0
  %3035 = vmatprep.mubr.bf16.mxu0 0
  %3036 = vmatmul.mubr.bf16.gmra.mrb[0].mxu0 %v2998
  %v3037 = vpop.f32.mrb[0].mxu0
  %v3038 = vadd.f32 0.0, %v3037
  %v3039 = vpop.f32.mrb[0].mxu0
  %v3040 = vpop.f32.mrb[0].mxu0
  %v3041 = vadd.f32 0.0, %v3040
  %v3042 = vpop.f32.mrb[0].mxu0
  %3043 = vdwg.mxu0
  %v3044 = vadd.f32 %v2739, %v3038
  %v3045 = vadd.f32 %v2740, %v3041
  %s3046 = scalar_lea.vmem %s12, 1
  %v3047 = vld [vmem:[%s3046] sm:$0x1]
  %v3049 = vlaneseq
  %v3050 = vshrl.u32 %v3049, 7
  %v3051 = vsub.s32 0, %v3050
  %v3052 = vrot.slane %v3047, %v3051
  %v3054 = vadd.f32 %v3044, %v3052
  %v3055 = vadd.f32 %v3045, %v3052
  %v3056 = vadd.f32 %v3054, %v1729
  %v3057 = vadd.f32 %v3055, %v1730
  %s3058 = scalar_lea.vmem %s13, 1
  %v3059 = vld [vmem:[%s3058] sm:$0x1]
  %s3060 = scalar_lea.vmem %s14, 1
  %v3061 = vld [vmem:[%s3060] sm:$0x1]
  %v3062 = vsel %vm104, %v3056, 0.0
  %3063 = vadd.xlane.f32.xlu0 %v3062
  %v3064 = vpop.xlane.xlu0 %3063
  %v3065 = vsel %vm104, %v3057, 0.0
  %3066 = vadd.xlane.f32.xlu0 %v3065
  %v3067 = vpop.xlane.xlu0 %3066
  %v3068 = vmul.f32 %v3064, %v111
  %v3069 = vmul.f32 %v3067, %v111
  %v3070 = vsub.f32 %v3056, %v3068
  %v3071 = vsub.f32 %v3057, %v3069
  %v3072 = vmul.f32 %v3070, %v3070
  %v3073 = vmul.f32 %v3071, %v3071
  %v3074 = vsel %vm104, %v3072, 0.0
  %3075 = vadd.xlane.f32.xlu0 %v3074
  %v3076 = vpop.xlane.xlu0 %3075
  %v3077 = vsel %vm104, %v3073, 0.0
  %3078 = vadd.xlane.f32.xlu0 %v3077
  %v3079 = vpop.xlane.xlu0 %3078
  %v3080 = vmul.f32 %v3076, %v111
  %v3081 = vmul.f32 %v3079, %v111
  %v3082 = vadd.f32 %v3080, 1e-05
  %v3083 = vadd.f32 %v3081, 1e-05
  %v3084 = vrsqrt.pop %v3082
  %v3085 = vrsqrt.pop %v3083
  %v3086 = vmul.f32 %v3070, %v3084
  %v3087 = vmul.f32 %v3071, %v3085
  %v3089 = vlaneseq
  %v3090 = vshrl.u32 %v3089, 7
  %v3091 = vsub.s32 0, %v3090
  %v3092 = vrot.slane %v3059, %v3091
  %v3094 = vmul.f32 %v3086, %v3092
  %v3095 = vmul.f32 %v3087, %v3092
  %v3097 = vlaneseq
  %v3098 = vshrl.u32 %v3097, 7
  %v3099 = vsub.s32 0, %v3098
  %v3100 = vrot.slane %v3061, %v3099
  %v3102 = vadd.f32 %v3094, %v3100
  %v3103 = vadd.f32 %v3095, %v3100
  %v3104 = vpack.c.bf16 %v3103, %v3102
  %s3105 = scalar_lea.vmem %s15, 16
  %v3106 = vld [vmem:[%s3105] sm:$0xf]
  %v3107 = vld [vmem:[%s3105 + $0x4] sm:$0xf]
  %v3108 = vld [vmem:[%s3105 + $0x8] sm:$0xf]
  %v3109 = vld [vmem:[%s3105 + $0xc] sm:$0xf]
  %s3110 = scalar_lea.vmem %s16, 1
  %v3111 = vld [vmem:[%s3110] sm:$0x1]
  %v3113 = vlaneseq
  %v3114 = vshrl.u32 %v3113, 7
  %v3115 = vsub.s32 0, %v3114
  %v3116 = vrot.slane %v3111, %v3115
  %v3122 = vunpack.c.l.b16 %v3106
  %v3123 = vunpack.c.l.b16 %v3107
  %v3124 = vunpack.c.l.b16 %v3108
  %v3125 = vunpack.c.l.b16 %v3109
  %v3126 = vpack.c.b16 %v3123, %v3122
  %v3127 = vpack.c.b16 %v3125, %v3124
  %v3131 = vsel %vm104, %v3104, 0
  %3133 = vmatprep.subr.bf16.mxu0 0
  %3134 = vmatpush1.bf16.msra.mxu0 %v3126
  %3135 = vmatprep.subr.bf16.mxu0 0
  %3136 = vmatpush1.bf16.msra.mxu0 %v3127
  %3137 = vmatprep.subr.bf16.mxu0 0
  %3138 = vmatpush1.bf16.msra.mxu0 0
  %3139 = vmatprep.subr.bf16.mxu0 0
  %3140 = vmatpush1.bf16.msra.mxu0 0
  %3141 = vmatprep.subr.bf16.mxu0 0
  %3142 = vmatpush1.bf16.msra.mxu0 0
  %3143 = vmatprep.subr.bf16.mxu0 0
  %3144 = vmatpush1.bf16.msra.mxu0 0
  %3145 = vmatprep.subr.bf16.mxu0 0
  %3146 = vmatpush1.bf16.msra.mxu0 0
  %3147 = vmatprep.subr.bf16.mxu0 0
  %3148 = vmatpush1.bf16.msra.mxu0 0
  %3149 = vmatprep.subr.bf16.mxu0 0
  %3150 = vmatpush1.bf16.msra.mxu0 0
  %3151 = vmatprep.subr.bf16.mxu0 0
  %3152 = vmatpush1.bf16.msra.mxu0 0
  %3153 = vmatprep.subr.bf16.mxu0 0
  %3154 = vmatpush1.bf16.msra.mxu0 0
  %3155 = vmatprep.subr.bf16.mxu0 0
  %3156 = vmatpush1.bf16.msra.mxu0 0
  %3157 = vmatprep.subr.bf16.mxu0 0
  %3158 = vmatpush1.bf16.msra.mxu0 0
  %3159 = vmatprep.subr.bf16.mxu0 0
  %3160 = vmatpush1.bf16.msra.mxu0 0
  %3161 = vmatprep.subr.bf16.mxu0 0
  %3162 = vmatpush1.bf16.msra.mxu0 0
  %3163 = vmatprep.subr.bf16.mxu0 0
  %3164 = vmatpush1.bf16.msra.mxu0 0
  %3165 = vmatprep.mubr.bf16.mxu0 0
  %3166 = vmatmul.mubr.bf16.gmra.mrb[0].mxu0 %v3131
  %v3167 = vpop.f32.mrb[0].mxu0
  %v3168 = vadd.f32 %v3116, %v3167
  %v3169 = vpop.f32.mrb[0].mxu0
  %v3170 = vpop.f32.mrb[0].mxu0
  %v3171 = vadd.f32 %v3116, %v3170
  %v3172 = vpop.f32.mrb[0].mxu0
  %3173 = vdwg.mxu0
  %v3174 = vmul.f32 %v3168, 0.5
  %v3175 = vmul.f32 %v3171, 0.5
  %v3176 = vmul.f32 %v3168, 0.044715
  %v3177 = vmul.f32 %v3171, 0.044715
  %v3178 = vmul.f32 %v3176, %v3168
  %v3179 = vmul.f32 %v3177, %v3171
  %v3180 = vmul.f32 %v3178, %v3168
  %v3181 = vmul.f32 %v3179, %v3171
  %v3182 = vadd.f32 %v3168, %v3180
  %v3183 = vadd.f32 %v3171, %v3181
  %v3184 = vmul.f32 %v3182, 0.7978846
  %v3185 = vmul.f32 %v3183, 0.7978846
  %v3186 = vtanh.pop %v3184
  %v3187 = vtanh.pop %v3185
  %v3188 = vadd.f32 %v3186, 1.0
  %v3189 = vadd.f32 %v3187, 1.0
  %v3190 = vmul.f32 %v3174, %v3188
  %v3191 = vmul.f32 %v3175, %v3189
  %v3192 = vpack.c.bf16 %v3191, %v3190
  %s3193 = scalar_lea.vmem %s17, 32
  %v3194 = vld [vmem:[%s3193] sm:$0xf]
  %v3195 = vld [vmem:[%s3193 + $0x4] sm:$0xf]
  %v3196 = vld [vmem:[%s3193 + $0x8] sm:$0xf]
  %v3197 = vld [vmem:[%s3193 + $0xc] sm:$0xf]
  %v3198 = vld [vmem:[%s3193 + $0x10] sm:$0xf]
  %v3199 = vld [vmem:[%s3193 + $0x14] sm:$0xf]
  %v3200 = vld [vmem:[%s3193 + $0x18] sm:$0xf]
  %v3201 = vld [vmem:[%s3193 + $0x1c] sm:$0xf]
  %s3202 = scalar_lea.vmem %s18, 1
  %v3203 = vld [vmem:[%s3202] sm:$0x1]
  %v3205 = vlaneseq
  %v3206 = vshrl.u32 %v3205, 7
  %v3207 = vsub.s32 0, %v3206
  %v3208 = vrot.slane %v3203, %v3207
  %v3218 = vunpack.c.l.b16 %v3194
  %v3219 = vunpack.c.l.b16 %v3195
  %v3220 = vunpack.c.l.b16 %v3196
  %v3221 = vunpack.c.l.b16 %v3197
  %v3222 = vunpack.c.l.b16 %v3198
  %v3223 = vunpack.c.l.b16 %v3199
  %v3224 = vunpack.c.l.b16 %v3200
  %v3225 = vunpack.c.l.b16 %v3201
  %v3226 = vpack.c.b16 %v3219, %v3218
  %v3227 = vpack.c.b16 %v3221, %v3220
  %v3228 = vpack.c.b16 %v3223, %v3222
  %v3229 = vpack.c.b16 %v3225, %v3224
  %v3235 = vsel %vm1640, %v3192, 0
  %3237 = vmatprep.subr.bf16.mxu0 0
  %3238 = vmatpush1.bf16.msra.mxu0 %v3226
  %3239 = vmatprep.subr.bf16.mxu0 0
  %3240 = vmatpush1.bf16.msra.mxu0 %v3227
  %3241 = vmatprep.subr.bf16.mxu0 0
  %3242 = vmatpush1.bf16.msra.mxu0 %v3228
  %3243 = vmatprep.subr.bf16.mxu0 0
  %3244 = vmatpush1.bf16.msra.mxu0 %v3229
  %3245 = vmatprep.subr.bf16.mxu0 0
  %3246 = vmatpush1.bf16.msra.mxu0 0
  %3247 = vmatprep.subr.bf16.mxu0 0
  %3248 = vmatpush1.bf16.msra.mxu0 0
  %3249 = vmatprep.subr.bf16.mxu0 0
  %3250 = vmatpush1.bf16.msra.mxu0 0
  %3251 = vmatprep.subr.bf16.mxu0 0
  %3252 = vmatpush1.bf16.msra.mxu0 0
  %3253 = vmatprep.subr.bf16.mxu0 0
  %3254 = vmatpush1.bf16.msra.mxu0 0
  %3255 = vmatprep.subr.bf16.mxu0 0
  %3256 = vmatpush1.bf16.msra.mxu0 0
  %3257 = vmatprep.subr.bf16.mxu0 0
  %3258 = vmatpush1.bf16.msra.mxu0 0
  %3259 = vmatprep.subr.bf16.mxu0 0
  %3260 = vmatpush1.bf16.msra.mxu0 0
  %3261 = vmatprep.subr.bf16.mxu0 0
  %3262 = vmatpush1.bf16.msra.mxu0 0
  %3263 = vmatprep.subr.bf16.mxu0 0
  %3264 = vmatpush1.bf16.msra.mxu0 0
  %3265 = vmatprep.subr.bf16.mxu0 0
  %3266 = vmatpush1.bf16.msra.mxu0 0
  %3267 = vmatprep.subr.bf16.mxu0 0
  %3268 = vmatpush1.bf16.msra.mxu0 0
  %3269 = vmatprep.mubr.bf16.mxu0 0
  %3270 = vmatmul.mubr.bf16.gmra.mrb[0].mxu0 %v3235
  %v3271 = vpop.f32.mrb[0].mxu0
  %v3272 = vadd.f32 %v3208, %v3271
  %v3273 = vpop.f32.mrb[0].mxu0
  %v3274 = vpop.f32.mrb[0].mxu0
  %v3275 = vadd.f32 %v3208, %v3274
  %v3276 = vpop.f32.mrb[0].mxu0
  %3277 = vdwg.mxu0
  %v3278 = vadd.f32 %v3272, %v3102
  %v3279 = vadd.f32 %v3275, %v3103
  %s3280 = scalar_lea.vmem %s19, 1
  %v3281 = vld [vmem:[%s3280] sm:$0x1]
  %s3282 = scalar_lea.vmem %s20, 1
  %v3283 = vld [vmem:[%s3282] sm:$0x1]
  %v3284 = vsel %vm104, %v3278, 0.0
  %3285 = vadd.xlane.f32.xlu0 %v3284
  %v3286 = vpop.xlane.xlu0 %3285
  %v3287 = vsel %vm104, %v3279, 0.0
  %3288 = vadd.xlane.f32.xlu0 %v3287
  %v3289 = vpop.xlane.xlu0 %3288
  %v3290 = vmul.f32 %v3286, %v111
  %v3291 = vmul.f32 %v3289, %v111
  %v3292 = vsub.f32 %v3278, %v3290
  %v3293 = vsub.f32 %v3279, %v3291
  %v3294 = vmul.f32 %v3292, %v3292
  %v3295 = vmul.f32 %v3293, %v3293
  %v3296 = vsel %vm104, %v3294, 0.0
  %3297 = vadd.xlane.f32.xlu0 %v3296
  %v3298 = vpop.xlane.xlu0 %3297
  %v3299 = vsel %vm104, %v3295, 0.0
  %3300 = vadd.xlane.f32.xlu0 %v3299
  %v3301 = vpop.xlane.xlu0 %3300
  %v3302 = vmul.f32 %v3298, %v111
  %v3303 = vmul.f32 %v3301, %v111
  %v3304 = vadd.f32 %v3302, 1e-05
  %v3305 = vadd.f32 %v3303, 1e-05
  %v3306 = vrsqrt.pop %v3304
  %v3307 = vrsqrt.pop %v3305
  %v3308 = vmul.f32 %v3292, %v3306
  %v3309 = vmul.f32 %v3293, %v3307
  %v3311 = vlaneseq
  %v3312 = vshrl.u32 %v3311, 7
  %v3313 = vsub.s32 0, %v3312
  %v3314 = vrot.slane %v3281, %v3313
  %v3316 = vmul.f32 %v3308, %v3314
  %v3317 = vmul.f32 %v3309, %v3314
  %v3319 = vlaneseq
  %v3320 = vshrl.u32 %v3319, 7
  %v3321 = vsub.s32 0, %v3320
  %v3322 = vrot.slane %v3283, %v3321
  %v3324 = vadd.f32 %v3316, %v3322
  %v3325 = vadd.f32 %v3317, %v3322
  %v3326 = vpack.c.bf16 %v3325, %v3324
  %v3327 = vld [vmem:[%s21] sm:$0xf]
  %v3328 = vld [vmem:[%s21 + $0x4] sm:$0xf]
  %v3329 = vld [vmem:[%s21 + $0x8] sm:$0xf]
  %v3330 = vld [vmem:[%s21 + $0xc] sm:$0xf]
  %v3331 = vld [vmem:[%s22] sm:$0x1]
  %v3333 = vlaneseq
  %v3334 = vshrl.u32 %v3333, 7
  %v3335 = vsub.s32 0, %v3334
  %v3336 = vrot.slane %v3331, %v3335
  %v3342 = vunpack.c.l.b16 %v3327
  %v3343 = vunpack.c.l.b16 %v3328
  %v3344 = vunpack.c.l.b16 %v3329
  %v3345 = vunpack.c.l.b16 %v3330
  %v3346 = vpack.c.b16 %v3343, %v3342
  %v3347 = vpack.c.b16 %v3345, %v3344
  %v3351 = vsel %vm104, %v3326, 0
  %3353 = vmatprep.subr.bf16.mxu0 0
  %3354 = vmatpush1.bf16.msra.mxu0 %v3346
  %3355 = vmatprep.subr.bf16.mxu0 0
  %3356 = vmatpush1.bf16.msra.mxu0 %v3347
  %3357 = vmatprep.subr.bf16.mxu0 0
  %3358 = vmatpush1.bf16.msra.mxu0 0
  %3359 = vmatprep.subr.bf16.mxu0 0
  %3360 = vmatpush1.bf16.msra.mxu0 0
  %3361 = vmatprep.subr.bf16.mxu0 0
  %3362 = vmatpush1.bf16.msra.mxu0 0
  %3363 = vmatprep.subr.bf16.mxu0 0
  %3364 = vmatpush1.bf16.msra.mxu0 0
  %3365 = vmatprep.subr.bf16.mxu0 0
  %3366 = vmatpush1.bf16.msra.mxu0 0
  %3367 = vmatprep.subr.bf16.mxu0 0
  %3368 = vmatpush1.bf16.msra.mxu0 0
  %3369 = vmatprep.subr.bf16.mxu0 0
  %3370 = vmatpush1.bf16.msra.mxu0 0
  %3371 = vmatprep.subr.bf16.mxu0 0
  %3372 = vmatpush1.bf16.msra.mxu0 0
  %3373 = vmatprep.subr.bf16.mxu0 0
  %3374 = vmatpush1.bf16.msra.mxu0 0
  %3375 = vmatprep.subr.bf16.mxu0 0
  %3376 = vmatpush1.bf16.msra.mxu0 0
  %3377 = vmatprep.subr.bf16.mxu0 0
  %3378 = vmatpush1.bf16.msra.mxu0 0
  %3379 = vmatprep.subr.bf16.mxu0 0
  %3380 = vmatpush1.bf16.msra.mxu0 0
  %3381 = vmatprep.subr.bf16.mxu0 0
  %3382 = vmatpush1.bf16.msra.mxu0 0
  %3383 = vmatprep.subr.bf16.mxu0 0
  %3384 = vmatpush1.bf16.msra.mxu0 0
  %3385 = vmatprep.mubr.bf16.mxu0 0
  %3386 = vmatmul.mubr.bf16.gmra.mrb[0].mxu0 %v3351
  %v3387 = vpop.f32.mrb[0].mxu0
  %v3388 = vadd.f32 %v3336, %v3387
  %v3389 = vpop.f32.mrb[0].mxu0
  %v3390 = vpop.f32.mrb[0].mxu0
  %v3391 = vadd.f32 %v3336, %v3390
  %v3392 = vpop.f32.mrb[0].mxu0
  %3393 = vdwg.mxu0
  %v3394 = vtanh.pop %v3388
  %v3395 = vtanh.pop %v3391
  %v3396 = vld [vmem:[%s23] sm:$0xff]
  %v3397 = vld [vmem:[%s23 + $0x8] sm:$0xff]
  %v3398 = vmul.f32 %v3394, %v3396
  %v3399 = vmul.f32 %v3395, %v3397
  %v3400 = vsel %vm104, %v3398, 0.0
  %3401 = vadd.xlane.f32.xlu0 %v3400
  %v3402 = vpop.xlane.xlu0 %3401
  %v3403 = vsel %vm104, %v3399, 0.0
  %3404 = vadd.xlane.f32.xlu0 %v3403
  %v3405 = vpop.xlane.xlu0 %3404
  %v3406 = vld [vmem:[#allocation2] sm:$0x1]
  %v3408 = vlaneseq
  %v3409 = vshrl.u32 %v3408, 7
  %v3410 = vsub.s32 0, %v3409
  %v3411 = vrot.slane %v3406, %v3410
  %v3413 = vadd.f32 %v3402, %v3411
  %v3414 = vadd.f32 %v3405, %v3411
  %vm3415 = vcmask 7168
  %3416 = vst.msk [vmem:[%s25] sm:$0xff] %vm3415, %v3413
  %3417 = vst.msk [vmem:[%s25 + $0x8] sm:$0xff] %vm3415, %v3414
  // Predicated region
  $region102: #{roberta_forward.1} parent=0 // pred_check
    _
  $region103: #{roberta_forward.1} parent=0 // pred_check_branch
    %3419 = sbr.rel (0) target = $region105
  $region104: #{roberta_forward.1} parent=0 // pred_region
    _
  $region105: #{roberta_forward.1} parent=0 // pred_fallthru
    _
  // Predicated region
  $region106: #{roberta_forward.1} parent=0 // pred_check
    _
  $region107: #{roberta_forward.1} parent=0 // pred_check_branch
    %3421 = sbr.rel (0) target = $region109
  $region108: #{roberta_forward.1} parent=0 // pred_region
    _
  $region109: #{roberta_forward.1} parent=0 // pred_fallthru
    _

</llo_original>
